<compile_context>
chip_gen: v7x
topology: tpu7x:2x2x1
jax: 0.10.0
libtpu: 0.0.40
codegen_flags: <defaults>
</compile_context>

<pallas_src>
import functools

import jax
import jax.numpy as jnp
from jax.experimental import pallas as pl
from jax.experimental.pallas import tpu as pltpu


# ------------------------------ Pallas kernel -------------------------------
def _im2col_into(src_ref, dst_ref, *, batch, h_in, w_in, c, h_out, w_out,
                 k=3, stride=2):
    """Scatter k*k stride-`stride` (pad=0) conv patches of src into dst.

    src_ref: (batch*h_in*w_in, c)        rows ordered (b, h, w)
    dst_ref: (batch*h_out*w_out, k*k*c)  rows ordered (b, oh, ow),
             lanes ordered (kh, kw, cin) -- matches weight.reshape(k*k*c, cout).
    All offsets are static Python ints; each step is one strided VMEM read and
    one contiguous store, so nothing round-trips through HBM.
    """
    for kh in range(k):
        for kw in range(k):
            t = kh * k + kw
            for b in range(batch):
                for oh in range(h_out):
                    src_row = (b * h_in + stride * oh + kh) * w_in + kw
                    dst_row = (b * h_out + oh) * w_out
                    if stride == 1:
                        rows = src_ref[pl.ds(src_row, w_out), :]
                    else:
                        rows = src_ref[pl.ds(src_row, w_out, stride=stride), :]
                    dst_ref[dst_row:dst_row + w_out, t * c:(t + 1) * c] = rows


def _fused_head_kernel(x_ref, w1_ref, b1_ref, w2_ref, b2_ref, wl_ref, bl_ref,
                       feat_ref, logits_ref, pred_ref,
                       p1_ref, y1_ref, p2_ref,
                       *, batch, height, width, c, ho1, wo1, ho2, wo2,
                       neg_slope):
    # ---- conv1 (3x3, stride 2) + folded BN + LeakyReLU ----------------------
    _im2col_into(x_ref, p1_ref, batch=batch, h_in=height, w_in=width, c=c,
                 h_out=ho1, w_out=wo1)
    a1 = jnp.dot(p1_ref[...], w1_ref[...],
                 preferred_element_type=jnp.float32) + b1_ref[...]
    y1_ref[...] = jnp.where(a1 > 0, a1, neg_slope * a1)          # (M1, C)

    # ---- conv2 (3x3, stride 2) + folded BN + LeakyReLU ----------------------
    _im2col_into(y1_ref, p2_ref, batch=batch, h_in=ho1, w_in=wo1, c=c,
                 h_out=ho2, w_out=wo2)
    a2 = jnp.dot(p2_ref[...], w2_ref[...],
                 preferred_element_type=jnp.float32) + b2_ref[...]
    y2 = jnp.where(a2 > 0, a2, neg_slope * a2)                   # (M2, C)

    # ---- AdaptiveAvgPool2d(1): per-batch mean over the ho2*wo2 rows ---------
    sp = ho2 * wo2
    for b in range(batch):
        feat_ref[b:b + 1, :] = jnp.mean(y2[b * sp:(b + 1) * sp, :],
                                        axis=0, keepdims=True)
    feats = feat_ref[...]                                        # (B, C)

    # ---- Linear -------------------------------------------------------------
    logits = jnp.dot(feats, wl_ref[...],
                     preferred_element_type=jnp.float32) + bl_ref[...]
    logits_ref[...] = logits                                     # (B, nc)

    # torch.max(Softmax(x), 1)[1] == argmax(logits) (softmax is monotonic);
    # first-maximal-index tie-breaking preserved.
    nc = logits.shape[1]
    mx = jnp.max(logits, axis=1, keepdims=True)
    idx = jax.lax.broadcasted_iota(jnp.int32, logits.shape, 1)
    pred_ref[...] = jnp.min(jnp.where(logits >= mx, idx, jnp.int32(nc)),
                            axis=1, keepdims=True)


def fused_head(x2d, w1f, b1f, w2f, b2f, w_lin, b_lin, *,
               batch, height, width, neg_slope=0.1):
    c = x2d.shape[1]
    ho1, wo1 = (height - 3) // 2 + 1, (width - 3) // 2 + 1
    ho2, wo2 = (ho1 - 3) // 2 + 1, (wo1 - 3) // 2 + 1
    m1, m2 = batch * ho1 * wo1, batch * ho2 * wo2
    nc = w_lin.shape[1]

    kernel = functools.partial(
        _fused_head_kernel, batch=batch, height=height, width=width, c=c,
        ho1=ho1, wo1=wo1, ho2=ho2, wo2=wo2, neg_slope=neg_slope)

    # TODO(synk): at real (filter_num=1024, larger spatial) sizes, add a
    # "parallel" grid axis over output-row blocks so v7x's 2nd TensorCore is
    # used and cast matmul operands to bf16; at these toy sizes the kernel is
    # launch/DMA-latency bound so a single grid point is optimal.
    return pl.pallas_call(
        kernel,
        out_shape=(
            jax.ShapeDtypeStruct((batch, c), jnp.float32),    # extract_feature
            jax.ShapeDtypeStruct((batch, nc), jnp.float32),   # logits
            jax.ShapeDtypeStruct((batch, 1), jnp.int32),      # predicted class
        ),
        grid=(1,),
        in_specs=[
            pl.BlockSpec((batch * height * width, c), lambda i: (0, 0)),
            pl.BlockSpec((9 * c, c), lambda i: (0, 0)),
            pl.BlockSpec((1, c), lambda i: (0, 0)),
            pl.BlockSpec((9 * c, c), lambda i: (0, 0)),
            pl.BlockSpec((1, c), lambda i: (0, 0)),
            pl.BlockSpec((c, nc), lambda i: (0, 0)),
            pl.BlockSpec((1, nc), lambda i: (0, 0)),
        ],
        out_specs=(
            pl.BlockSpec((batch, c), lambda i: (0, 0)),
            pl.BlockSpec((batch, nc), lambda i: (0, 0)),
            pl.BlockSpec((batch, 1), lambda i: (0, 0)),
        ),
        scratch_shapes=[
            pltpu.VMEM((m1, 9 * c), jnp.float32),   # conv1 im2col patches
            pltpu.VMEM((m1, c), jnp.float32),       # y1 (conv1 output)
            pltpu.VMEM((m2, 9 * c), jnp.float32),   # conv2 im2col patches
        ],
        compiler_params=pltpu.CompilerParams(
            dimension_semantics=("arbitrary",)),
    )(x2d, w1f, b1f, w2f, b2f, w_lin, b_lin)


# ------------------------------- glue (JAX) ----------------------------------
def _fold_bn_into_conv(w_mat, conv_bias, gamma, beta, mean, var, eps=1e-5):
    # y = (patches @ W + cb - mean) * scale + beta
    #   = patches @ (W * scale) + (cb - mean) * scale + beta
    scale = gamma / jnp.sqrt(var + eps)               # per output channel
    w_f = w_mat * scale[None, :]
    b_f = (conv_bias - mean) * scale + beta
    return w_f, b_f.reshape(1, -1)


def init_params(key, filter_num, num_class):
    ks = jax.random.split(key, 14)
    C = filter_num
    # NOTE: weights laid out (kh, kw, Cin, Cout).reshape(9*C, C) to match the
    # in-kernel im2col lane order (kh, kw, cin); trained PyTorch weights
    # (Cout, Cin, kh, kw) would need a transpose to (kh, kw, Cin, Cout) first.
    w1 = (0.05 * jax.random.normal(ks[0], (3, 3, C, C))).reshape(9 * C, C)
    b1 = 0.05 * jax.random.normal(ks[1], (C,))
    g1 = 1.0 + 0.1 * jax.random.normal(ks[2], (C,))
    be1 = 0.1 * jax.random.normal(ks[3], (C,))
    mu1 = 0.1 * jax.random.normal(ks[4], (C,))
    v1 = 1.0 + 0.1 * jnp.abs(jax.random.normal(ks[5], (C,)))
    w2 = (0.05 * jax.random.normal(ks[6], (3, 3, C, C))).reshape(9 * C, C)
    b2 = 0.05 * jax.random.normal(ks[7], (C,))
    g2 = 1.0 + 0.1 * jax.random.normal(ks[8], (C,))
    be2 = 0.1 * jax.random.normal(ks[9], (C,))
    mu2 = 0.1 * jax.random.normal(ks[10], (C,))
    v2 = 1.0 + 0.1 * jnp.abs(jax.random.normal(ks[11], (C,)))

    w1f, b1f = _fold_bn_into_conv(w1, b1, g1, be1, mu1, v1)
    w2f, b2f = _fold_bn_into_conv(w2, b2, g2, be2, mu2, v2)

    p = {
        "w1f": w1f, "b1f": b1f,
        "w2f": w2f, "b2f": b2f,
        "w_lin": 0.1 * jax.random.normal(ks[12], (C, num_class)),
        "b_lin": (0.1 * jax.random.normal(ks[13], (num_class,))).reshape(1, num_class),
    }
    return jax.tree.map(lambda a: a.astype(jnp.float32), p)


@functools.partial(jax.jit, static_argnames=("filter_num",))
def my_model_forward(x_nchw, params, filter_num):
    # TODO(synk): Darknet backbone needs an external .cfg; x is treated as the
    # darknet output feature map and dark_loss is 0.
    dark_loss = jnp.float32(0.0)

    x = jnp.transpose(x_nchw, (0, 2, 3, 1)).astype(jnp.float32)  # NCHW -> NHWC
    B, H, W, C = x.shape
    x2d = x.reshape(B * H * W, C)                                # rows = (b,h,w)

    feats, logits, pred = fused_head(
        x2d, params["w1f"], params["b1f"], params["w2f"], params["b2f"],
        params["w_lin"], params["b_lin"], batch=B, height=H, width=W)
    return pred[:, 0], dark_loss, feats, logits


if __name__ == "__main__":
    B, FILTER_NUM, H, W, NUM_CLASS = 2, 32, 11, 11, 3
    key = jax.random.PRNGKey(0)
    kx, kp = jax.random.split(key)
    x = jax.random.normal(kx, (B, FILTER_NUM, H, W), dtype=jnp.float32)
    params = init_params(kp, FILTER_NUM, NUM_CLASS)

    pred, dark_loss, feats, logits = my_model_forward(x, params, FILTER_NUM)
    jax.block_until_ready((pred, dark_loss, feats, logits))

    assert pred.shape == (B,)
    assert feats.shape == (B, FILTER_NUM)
    assert logits.shape == (B, NUM_CLASS)
    assert bool(jnp.all(pred == jnp.argmax(logits, axis=1)))
    print("KERNEL_OK")
</pallas_src>

<mosaic_0001>
module attributes {stable_mosaic.version = 11 : i64} {
  func.func @_fused_head_kernel(%arg0: i32, %arg1: memref<242x32xf32, #tpu.memory_space<vmem>>, %arg2: memref<288x32xf32, #tpu.memory_space<vmem>>, %arg3: memref<1x32xf32, #tpu.memory_space<vmem>>, %arg4: memref<288x32xf32, #tpu.memory_space<vmem>>, %arg5: memref<1x32xf32, #tpu.memory_space<vmem>>, %arg6: memref<32x3xf32, #tpu.memory_space<vmem>>, %arg7: memref<1x3xf32, #tpu.memory_space<vmem>>, %arg8: memref<2x32xf32, #tpu.memory_space<vmem>>, %arg9: memref<2x3xf32, #tpu.memory_space<vmem>>, %arg10: memref<2x1xi32, #tpu.memory_space<vmem>>, %arg11: memref<50x288xf32, #tpu.memory_space<vmem>>, %arg12: memref<50x32xf32, #tpu.memory_space<vmem>>, %arg13: memref<8x288xf32, #tpu.memory_space<vmem>>) attributes {dimension_semantics = [#tpu.dimension_semantics<arbitrary>], iteration_bounds = array<i64: 1>, scalar_prefetch = 0 : i64, scratch_operands = 3 : i64, tpu.core_type = #tpu.core_type<tc>, window_params = [{pipeline_mode = #tpu.pipeline_mode<synchronous>, transform_indices = @transform_0, window_bounds = array<i64: 242, 32>}, {pipeline_mode = #tpu.pipeline_mode<synchronous>, transform_indices = @transform_1, window_bounds = array<i64: 288, 32>}, {pipeline_mode = #tpu.pipeline_mode<synchronous>, transform_indices = @transform_2, window_bounds = array<i64: 1, 32>}, {pipeline_mode = #tpu.pipeline_mode<synchronous>, transform_indices = @transform_3, window_bounds = array<i64: 288, 32>}, {pipeline_mode = #tpu.pipeline_mode<synchronous>, transform_indices = @transform_4, window_bounds = array<i64: 1, 32>}, {pipeline_mode = #tpu.pipeline_mode<synchronous>, transform_indices = @transform_5, window_bounds = array<i64: 32, 3>}, {pipeline_mode = #tpu.pipeline_mode<synchronous>, transform_indices = @transform_6, window_bounds = array<i64: 1, 3>}, {pipeline_mode = #tpu.pipeline_mode<synchronous>, transform_indices = @transform_7, window_bounds = array<i64: 2, 32>}, {pipeline_mode = #tpu.pipeline_mode<synchronous>, transform_indices = @transform_8, window_bounds = array<i64: 2, 3>}, {pipeline_mode = #tpu.pipeline_mode<synchronous>, transform_indices = @transform_9, window_bounds = array<i64: 2, 1>}]} {
    %c0 = arith.constant 0 : index
    %c0_0 = arith.constant 0 : index
    %0 = tpu.strided_load %arg1[%c0, %c0_0] {strides = array<i32: 2, 1>} : memref<242x32xf32, #tpu.memory_space<vmem>>, vector<5x32xf32>
    %c0_1 = arith.constant 0 : index
    %c0_2 = arith.constant 0 : index
    %1 = vector.load %arg11[%c0_1, %c0_2] : memref<50x288xf32, #tpu.memory_space<vmem>>, vector<5x32xf32>
    tpu.vector_store %arg11[%c0_1, %c0_2], %0 {strides = array<i32>} : memref<50x288xf32, #tpu.memory_space<vmem>>, vector<5x32xf32>,
    %c22 = arith.constant 22 : index
    %c0_3 = arith.constant 0 : index
    %2 = tpu.strided_load %arg1[%c22, %c0_3] {strides = array<i32: 2, 1>} : memref<242x32xf32, #tpu.memory_space<vmem>>, vector<5x32xf32>
    %c5 = arith.constant 5 : index
    %c0_4 = arith.constant 0 : index
    %3 = vector.load %arg11[%c5, %c0_4] : memref<50x288xf32, #tpu.memory_space<vmem>>, vector<5x32xf32>
    tpu.vector_store %arg11[%c5, %c0_4], %2 {strides = array<i32>} : memref<50x288xf32, #tpu.memory_space<vmem>>, vector<5x32xf32>,
    %c44 = arith.constant 44 : index
    %c0_5 = arith.constant 0 : index
    %4 = tpu.strided_load %arg1[%c44, %c0_5] {strides = array<i32: 2, 1>} : memref<242x32xf32, #tpu.memory_space<vmem>>, vector<5x32xf32>
    %c10 = arith.constant 10 : index
    %c0_6 = arith.constant 0 : index
    %5 = vector.load %arg11[%c10, %c0_6] : memref<50x288xf32, #tpu.memory_space<vmem>>, vector<5x32xf32>
    tpu.vector_store %arg11[%c10, %c0_6], %4 {strides = array<i32>} : memref<50x288xf32, #tpu.memory_space<vmem>>, vector<5x32xf32>,
    %c66 = arith.constant 66 : index
    %c0_7 = arith.constant 0 : index
    %6 = tpu.strided_load %arg1[%c66, %c0_7] {strides = array<i32: 2, 1>} : memref<242x32xf32, #tpu.memory_space<vmem>>, vector<5x32xf32>
    %c15 = arith.constant 15 : index
    %c0_8 = arith.constant 0 : index
    %7 = vector.load %arg11[%c15, %c0_8] : memref<50x288xf32, #tpu.memory_space<vmem>>, vector<5x32xf32>
    tpu.vector_store %arg11[%c15, %c0_8], %6 {strides = array<i32>} : memref<50x288xf32, #tpu.memory_space<vmem>>, vector<5x32xf32>,
    %c88 = arith.constant 88 : index
    %c0_9 = arith.constant 0 : index
    %8 = tpu.strided_load %arg1[%c88, %c0_9] {strides = array<i32: 2, 1>} : memref<242x32xf32, #tpu.memory_space<vmem>>, vector<5x32xf32>
    %c20 = arith.constant 20 : index
    %c0_10 = arith.constant 0 : index
    %9 = vector.load %arg11[%c20, %c0_10] : memref<50x288xf32, #tpu.memory_space<vmem>>, vector<5x32xf32>
    tpu.vector_store %arg11[%c20, %c0_10], %8 {strides = array<i32>} : memref<50x288xf32, #tpu.memory_space<vmem>>, vector<5x32xf32>,
    %c121 = arith.constant 121 : index
    %c0_11 = arith.constant 0 : index
    %10 = tpu.strided_load %arg1[%c121, %c0_11] {strides = array<i32: 2, 1>} : memref<242x32xf32, #tpu.memory_space<vmem>>, vector<5x32xf32>
    %c25 = arith.constant 25 : index
    %c0_12 = arith.constant 0 : index
    %11 = vector.load %arg11[%c25, %c0_12] : memref<50x288xf32, #tpu.memory_space<vmem>>, vector<5x32xf32>
    tpu.vector_store %arg11[%c25, %c0_12], %10 {strides = array<i32>} : memref<50x288xf32, #tpu.memory_space<vmem>>, vector<5x32xf32>,
    %c143 = arith.constant 143 : index
    %c0_13 = arith.constant 0 : index
    %12 = tpu.strided_load %arg1[%c143, %c0_13] {strides = array<i32: 2, 1>} : memref<242x32xf32, #tpu.memory_space<vmem>>, vector<5x32xf32>
    %c30 = arith.constant 30 : index
    %c0_14 = arith.constant 0 : index
    %13 = vector.load %arg11[%c30, %c0_14] : memref<50x288xf32, #tpu.memory_space<vmem>>, vector<5x32xf32>
    tpu.vector_store %arg11[%c30, %c0_14], %12 {strides = array<i32>} : memref<50x288xf32, #tpu.memory_space<vmem>>, vector<5x32xf32>,
    %c165 = arith.constant 165 : index
    %c0_15 = arith.constant 0 : index
    %14 = tpu.strided_load %arg1[%c165, %c0_15] {strides = array<i32: 2, 1>} : memref<242x32xf32, #tpu.memory_space<vmem>>, vector<5x32xf32>
    %c35 = arith.constant 35 : index
    %c0_16 = arith.constant 0 : index
    %15 = vector.load %arg11[%c35, %c0_16] : memref<50x288xf32, #tpu.memory_space<vmem>>, vector<5x32xf32>
    tpu.vector_store %arg11[%c35, %c0_16], %14 {strides = array<i32>} : memref<50x288xf32, #tpu.memory_space<vmem>>, vector<5x32xf32>,
    %c187 = arith.constant 187 : index
    %c0_17 = arith.constant 0 : index
    %16 = tpu.strided_load %arg1[%c187, %c0_17] {strides = array<i32: 2, 1>} : memref<242x32xf32, #tpu.memory_space<vmem>>, vector<5x32xf32>
    %c40 = arith.constant 40 : index
    %c0_18 = arith.constant 0 : index
    %17 = vector.load %arg11[%c40, %c0_18] : memref<50x288xf32, #tpu.memory_space<vmem>>, vector<5x32xf32>
    tpu.vector_store %arg11[%c40, %c0_18], %16 {strides = array<i32>} : memref<50x288xf32, #tpu.memory_space<vmem>>, vector<5x32xf32>,
    %c209 = arith.constant 209 : index
    %c0_19 = arith.constant 0 : index
    %18 = tpu.strided_load %arg1[%c209, %c0_19] {strides = array<i32: 2, 1>} : memref<242x32xf32, #tpu.memory_space<vmem>>, vector<5x32xf32>
    %c45 = arith.constant 45 : index
    %c0_20 = arith.constant 0 : index
    %19 = vector.load %arg11[%c45, %c0_20] : memref<50x288xf32, #tpu.memory_space<vmem>>, vector<5x32xf32>
    tpu.vector_store %arg11[%c45, %c0_20], %18 {strides = array<i32>} : memref<50x288xf32, #tpu.memory_space<vmem>>, vector<5x32xf32>,
    %c1 = arith.constant 1 : index
    %c0_21 = arith.constant 0 : index
    %20 = tpu.strided_load %arg1[%c1, %c0_21] {strides = array<i32: 2, 1>} : memref<242x32xf32, #tpu.memory_space<vmem>>, vector<5x32xf32>
    %c0_22 = arith.constant 0 : index
    %c32 = arith.constant 32 : index
    %21 = vector.load %arg11[%c0_22, %c32] : memref<50x288xf32, #tpu.memory_space<vmem>>, vector<5x32xf32>
    tpu.vector_store %arg11[%c0_22, %c32], %20 {strides = array<i32>} : memref<50x288xf32, #tpu.memory_space<vmem>>, vector<5x32xf32>,
    %c23 = arith.constant 23 : index
    %c0_23 = arith.constant 0 : index
    %22 = tpu.strided_load %arg1[%c23, %c0_23] {strides = array<i32: 2, 1>} : memref<242x32xf32, #tpu.memory_space<vmem>>, vector<5x32xf32>
    %c5_24 = arith.constant 5 : index
    %c32_25 = arith.constant 32 : index
    %23 = vector.load %arg11[%c5_24, %c32_25] : memref<50x288xf32, #tpu.memory_space<vmem>>, vector<5x32xf32>
    tpu.vector_store %arg11[%c5_24, %c32_25], %22 {strides = array<i32>} : memref<50x288xf32, #tpu.memory_space<vmem>>, vector<5x32xf32>,
    %c45_26 = arith.constant 45 : index
    %c0_27 = arith.constant 0 : index
    %24 = tpu.strided_load %arg1[%c45_26, %c0_27] {strides = array<i32: 2, 1>} : memref<242x32xf32, #tpu.memory_space<vmem>>, vector<5x32xf32>
    %c10_28 = arith.constant 10 : index
    %c32_29 = arith.constant 32 : index
    %25 = vector.load %arg11[%c10_28, %c32_29] : memref<50x288xf32, #tpu.memory_space<vmem>>, vector<5x32xf32>
    tpu.vector_store %arg11[%c10_28, %c32_29], %24 {strides = array<i32>} : memref<50x288xf32, #tpu.memory_space<vmem>>, vector<5x32xf32>,
    %c67 = arith.constant 67 : index
    %c0_30 = arith.constant 0 : index
    %26 = tpu.strided_load %arg1[%c67, %c0_30] {strides = array<i32: 2, 1>} : memref<242x32xf32, #tpu.memory_space<vmem>>, vector<5x32xf32>
    %c15_31 = arith.constant 15 : index
    %c32_32 = arith.constant 32 : index
    %27 = vector.load %arg11[%c15_31, %c32_32] : memref<50x288xf32, #tpu.memory_space<vmem>>, vector<5x32xf32>
    tpu.vector_store %arg11[%c15_31, %c32_32], %26 {strides = array<i32>} : memref<50x288xf32, #tpu.memory_space<vmem>>, vector<5x32xf32>,
    %c89 = arith.constant 89 : index
    %c0_33 = arith.constant 0 : index
    %28 = tpu.strided_load %arg1[%c89, %c0_33] {strides = array<i32: 2, 1>} : memref<242x32xf32, #tpu.memory_space<vmem>>, vector<5x32xf32>
    %c20_34 = arith.constant 20 : index
    %c32_35 = arith.constant 32 : index
    %29 = vector.load %arg11[%c20_34, %c32_35] : memref<50x288xf32, #tpu.memory_space<vmem>>, vector<5x32xf32>
    tpu.vector_store %arg11[%c20_34, %c32_35], %28 {strides = array<i32>} : memref<50x288xf32, #tpu.memory_space<vmem>>, vector<5x32xf32>,
    %c122 = arith.constant 122 : index
    %c0_36 = arith.constant 0 : index
    %30 = tpu.strided_load %arg1[%c122, %c0_36] {strides = array<i32: 2, 1>} : memref<242x32xf32, #tpu.memory_space<vmem>>, vector<5x32xf32>
    %c25_37 = arith.constant 25 : index
    %c32_38 = arith.constant 32 : index
    %31 = vector.load %arg11[%c25_37, %c32_38] : memref<50x288xf32, #tpu.memory_space<vmem>>, vector<5x32xf32>
    tpu.vector_store %arg11[%c25_37, %c32_38], %30 {strides = array<i32>} : memref<50x288xf32, #tpu.memory_space<vmem>>, vector<5x32xf32>,
    %c144 = arith.constant 144 : index
    %c0_39 = arith.constant 0 : index
    %32 = tpu.strided_load %arg1[%c144, %c0_39] {strides = array<i32: 2, 1>} : memref<242x32xf32, #tpu.memory_space<vmem>>, vector<5x32xf32>
    %c30_40 = arith.constant 30 : index
    %c32_41 = arith.constant 32 : index
    %33 = vector.load %arg11[%c30_40, %c32_41] : memref<50x288xf32, #tpu.memory_space<vmem>>, vector<5x32xf32>
    tpu.vector_store %arg11[%c30_40, %c32_41], %32 {strides = array<i32>} : memref<50x288xf32, #tpu.memory_space<vmem>>, vector<5x32xf32>,
    %c166 = arith.constant 166 : index
    %c0_42 = arith.constant 0 : index
    %34 = tpu.strided_load %arg1[%c166, %c0_42] {strides = array<i32: 2, 1>} : memref<242x32xf32, #tpu.memory_space<vmem>>, vector<5x32xf32>
    %c35_43 = arith.constant 35 : index
    %c32_44 = arith.constant 32 : index
    %35 = vector.load %arg11[%c35_43, %c32_44] : memref<50x288xf32, #tpu.memory_space<vmem>>, vector<5x32xf32>
    tpu.vector_store %arg11[%c35_43, %c32_44], %34 {strides = array<i32>} : memref<50x288xf32, #tpu.memory_space<vmem>>, vector<5x32xf32>,
    %c188 = arith.constant 188 : index
    %c0_45 = arith.constant 0 : index
    %36 = tpu.strided_load %arg1[%c188, %c0_45] {strides = array<i32: 2, 1>} : memref<242x32xf32, #tpu.memory_space<vmem>>, vector<5x32xf32>
    %c40_46 = arith.constant 40 : index
    %c32_47 = arith.constant 32 : index
    %37 = vector.load %arg11[%c40_46, %c32_47] : memref<50x288xf32, #tpu.memory_space<vmem>>, vector<5x32xf32>
    tpu.vector_store %arg11[%c40_46, %c32_47], %36 {strides = array<i32>} : memref<50x288xf32, #tpu.memory_space<vmem>>, vector<5x32xf32>,
    %c210 = arith.constant 210 : index
    %c0_48 = arith.constant 0 : index
    %38 = tpu.strided_load %arg1[%c210, %c0_48] {strides = array<i32: 2, 1>} : memref<242x32xf32, #tpu.memory_space<vmem>>, vector<5x32xf32>
    %c45_49 = arith.constant 45 : index
    %c32_50 = arith.constant 32 : index
    %39 = vector.load %arg11[%c45_49, %c32_50] : memref<50x288xf32, #tpu.memory_space<vmem>>, vector<5x32xf32>
    tpu.vector_store %arg11[%c45_49, %c32_50], %38 {strides = array<i32>} : memref<50x288xf32, #tpu.memory_space<vmem>>, vector<5x32xf32>,
    %c2 = arith.constant 2 : index
    %c0_51 = arith.constant 0 : index
    %40 = tpu.strided_load %arg1[%c2, %c0_51] {strides = array<i32: 2, 1>} : memref<242x32xf32, #tpu.memory_space<vmem>>, vector<5x32xf32>
    %c0_52 = arith.constant 0 : index
    %c64 = arith.constant 64 : index
    %41 = vector.load %arg11[%c0_52, %c64] : memref<50x288xf32, #tpu.memory_space<vmem>>, vector<5x32xf32>
    tpu.vector_store %arg11[%c0_52, %c64], %40 {strides = array<i32>} : memref<50x288xf32, #tpu.memory_space<vmem>>, vector<5x32xf32>,
    %c24 = arith.constant 24 : index
    %c0_53 = arith.constant 0 : index
    %42 = tpu.strided_load %arg1[%c24, %c0_53] {strides = array<i32: 2, 1>} : memref<242x32xf32, #tpu.memory_space<vmem>>, vector<5x32xf32>
    %c5_54 = arith.constant 5 : index
    %c64_55 = arith.constant 64 : index
    %43 = vector.load %arg11[%c5_54, %c64_55] : memref<50x288xf32, #tpu.memory_space<vmem>>, vector<5x32xf32>
    tpu.vector_store %arg11[%c5_54, %c64_55], %42 {strides = array<i32>} : memref<50x288xf32, #tpu.memory_space<vmem>>, vector<5x32xf32>,
    %c46 = arith.constant 46 : index
    %c0_56 = arith.constant 0 : index
    %44 = tpu.strided_load %arg1[%c46, %c0_56] {strides = array<i32: 2, 1>} : memref<242x32xf32, #tpu.memory_space<vmem>>, vector<5x32xf32>
    %c10_57 = arith.constant 10 : index
    %c64_58 = arith.constant 64 : index
    %45 = vector.load %arg11[%c10_57, %c64_58] : memref<50x288xf32, #tpu.memory_space<vmem>>, vector<5x32xf32>
    tpu.vector_store %arg11[%c10_57, %c64_58], %44 {strides = array<i32>} : memref<50x288xf32, #tpu.memory_space<vmem>>, vector<5x32xf32>,
    %c68 = arith.constant 68 : index
    %c0_59 = arith.constant 0 : index
    %46 = tpu.strided_load %arg1[%c68, %c0_59] {strides = array<i32: 2, 1>} : memref<242x32xf32, #tpu.memory_space<vmem>>, vector<5x32xf32>
    %c15_60 = arith.constant 15 : index
    %c64_61 = arith.constant 64 : index
    %47 = vector.load %arg11[%c15_60, %c64_61] : memref<50x288xf32, #tpu.memory_space<vmem>>, vector<5x32xf32>
    tpu.vector_store %arg11[%c15_60, %c64_61], %46 {strides = array<i32>} : memref<50x288xf32, #tpu.memory_space<vmem>>, vector<5x32xf32>,
    %c90 = arith.constant 90 : index
    %c0_62 = arith.constant 0 : index
    %48 = tpu.strided_load %arg1[%c90, %c0_62] {strides = array<i32: 2, 1>} : memref<242x32xf32, #tpu.memory_space<vmem>>, vector<5x32xf32>
    %c20_63 = arith.constant 20 : index
    %c64_64 = arith.constant 64 : index
    %49 = vector.load %arg11[%c20_63, %c64_64] : memref<50x288xf32, #tpu.memory_space<vmem>>, vector<5x32xf32>
    tpu.vector_store %arg11[%c20_63, %c64_64], %48 {strides = array<i32>} : memref<50x288xf32, #tpu.memory_space<vmem>>, vector<5x32xf32>,
    %c123 = arith.constant 123 : index
    %c0_65 = arith.constant 0 : index
    %50 = tpu.strided_load %arg1[%c123, %c0_65] {strides = array<i32: 2, 1>} : memref<242x32xf32, #tpu.memory_space<vmem>>, vector<5x32xf32>
    %c25_66 = arith.constant 25 : index
    %c64_67 = arith.constant 64 : index
    %51 = vector.load %arg11[%c25_66, %c64_67] : memref<50x288xf32, #tpu.memory_space<vmem>>, vector<5x32xf32>
    tpu.vector_store %arg11[%c25_66, %c64_67], %50 {strides = array<i32>} : memref<50x288xf32, #tpu.memory_space<vmem>>, vector<5x32xf32>,
    %c145 = arith.constant 145 : index
    %c0_68 = arith.constant 0 : index
    %52 = tpu.strided_load %arg1[%c145, %c0_68] {strides = array<i32: 2, 1>} : memref<242x32xf32, #tpu.memory_space<vmem>>, vector<5x32xf32>
    %c30_69 = arith.constant 30 : index
    %c64_70 = arith.constant 64 : index
    %53 = vector.load %arg11[%c30_69, %c64_70] : memref<50x288xf32, #tpu.memory_space<vmem>>, vector<5x32xf32>
    tpu.vector_store %arg11[%c30_69, %c64_70], %52 {strides = array<i32>} : memref<50x288xf32, #tpu.memory_space<vmem>>, vector<5x32xf32>,
    %c167 = arith.constant 167 : index
    %c0_71 = arith.constant 0 : index
    %54 = tpu.strided_load %arg1[%c167, %c0_71] {strides = array<i32: 2, 1>} : memref<242x32xf32, #tpu.memory_space<vmem>>, vector<5x32xf32>
    %c35_72 = arith.constant 35 : index
    %c64_73 = arith.constant 64 : index
    %55 = vector.load %arg11[%c35_72, %c64_73] : memref<50x288xf32, #tpu.memory_space<vmem>>, vector<5x32xf32>
    tpu.vector_store %arg11[%c35_72, %c64_73], %54 {strides = array<i32>} : memref<50x288xf32, #tpu.memory_space<vmem>>, vector<5x32xf32>,
    %c189 = arith.constant 189 : index
    %c0_74 = arith.constant 0 : index
    %56 = tpu.strided_load %arg1[%c189, %c0_74] {strides = array<i32: 2, 1>} : memref<242x32xf32, #tpu.memory_space<vmem>>, vector<5x32xf32>
    %c40_75 = arith.constant 40 : index
    %c64_76 = arith.constant 64 : index
    %57 = vector.load %arg11[%c40_75, %c64_76] : memref<50x288xf32, #tpu.memory_space<vmem>>, vector<5x32xf32>
    tpu.vector_store %arg11[%c40_75, %c64_76], %56 {strides = array<i32>} : memref<50x288xf32, #tpu.memory_space<vmem>>, vector<5x32xf32>,
    %c211 = arith.constant 211 : index
    %c0_77 = arith.constant 0 : index
    %58 = tpu.strided_load %arg1[%c211, %c0_77] {strides = array<i32: 2, 1>} : memref<242x32xf32, #tpu.memory_space<vmem>>, vector<5x32xf32>
    %c45_78 = arith.constant 45 : index
    %c64_79 = arith.constant 64 : index
    %59 = vector.load %arg11[%c45_78, %c64_79] : memref<50x288xf32, #tpu.memory_space<vmem>>, vector<5x32xf32>
    tpu.vector_store %arg11[%c45_78, %c64_79], %58 {strides = array<i32>} : memref<50x288xf32, #tpu.memory_space<vmem>>, vector<5x32xf32>,
    %c11 = arith.constant 11 : index
    %c0_80 = arith.constant 0 : index
    %60 = tpu.strided_load %arg1[%c11, %c0_80] {strides = array<i32: 2, 1>} : memref<242x32xf32, #tpu.memory_space<vmem>>, vector<5x32xf32>
    %c0_81 = arith.constant 0 : index
    %c96 = arith.constant 96 : index
    %61 = vector.load %arg11[%c0_81, %c96] : memref<50x288xf32, #tpu.memory_space<vmem>>, vector<5x32xf32>
    tpu.vector_store %arg11[%c0_81, %c96], %60 {strides = array<i32>} : memref<50x288xf32, #tpu.memory_space<vmem>>, vector<5x32xf32>,
    %c33 = arith.constant 33 : index
    %c0_82 = arith.constant 0 : index
    %62 = tpu.strided_load %arg1[%c33, %c0_82] {strides = array<i32: 2, 1>} : memref<242x32xf32, #tpu.memory_space<vmem>>, vector<5x32xf32>
    %c5_83 = arith.constant 5 : index
    %c96_84 = arith.constant 96 : index
    %63 = vector.load %arg11[%c5_83, %c96_84] : memref<50x288xf32, #tpu.memory_space<vmem>>, vector<5x32xf32>
    tpu.vector_store %arg11[%c5_83, %c96_84], %62 {strides = array<i32>} : memref<50x288xf32, #tpu.memory_space<vmem>>, vector<5x32xf32>,
    %c55 = arith.constant 55 : index
    %c0_85 = arith.constant 0 : index
    %64 = tpu.strided_load %arg1[%c55, %c0_85] {strides = array<i32: 2, 1>} : memref<242x32xf32, #tpu.memory_space<vmem>>, vector<5x32xf32>
    %c10_86 = arith.constant 10 : index
    %c96_87 = arith.constant 96 : index
    %65 = vector.load %arg11[%c10_86, %c96_87] : memref<50x288xf32, #tpu.memory_space<vmem>>, vector<5x32xf32>
    tpu.vector_store %arg11[%c10_86, %c96_87], %64 {strides = array<i32>} : memref<50x288xf32, #tpu.memory_space<vmem>>, vector<5x32xf32>,
    %c77 = arith.constant 77 : index
    %c0_88 = arith.constant 0 : index
    %66 = tpu.strided_load %arg1[%c77, %c0_88] {strides = array<i32: 2, 1>} : memref<242x32xf32, #tpu.memory_space<vmem>>, vector<5x32xf32>
    %c15_89 = arith.constant 15 : index
    %c96_90 = arith.constant 96 : index
    %67 = vector.load %arg11[%c15_89, %c96_90] : memref<50x288xf32, #tpu.memory_space<vmem>>, vector<5x32xf32>
    tpu.vector_store %arg11[%c15_89, %c96_90], %66 {strides = array<i32>} : memref<50x288xf32, #tpu.memory_space<vmem>>, vector<5x32xf32>,
    %c99 = arith.constant 99 : index
    %c0_91 = arith.constant 0 : index
    %68 = tpu.strided_load %arg1[%c99, %c0_91] {strides = array<i32: 2, 1>} : memref<242x32xf32, #tpu.memory_space<vmem>>, vector<5x32xf32>
    %c20_92 = arith.constant 20 : index
    %c96_93 = arith.constant 96 : index
    %69 = vector.load %arg11[%c20_92, %c96_93] : memref<50x288xf32, #tpu.memory_space<vmem>>, vector<5x32xf32>
    tpu.vector_store %arg11[%c20_92, %c96_93], %68 {strides = array<i32>} : memref<50x288xf32, #tpu.memory_space<vmem>>, vector<5x32xf32>,
    %c132 = arith.constant 132 : index
    %c0_94 = arith.constant 0 : index
    %70 = tpu.strided_load %arg1[%c132, %c0_94] {strides = array<i32: 2, 1>} : memref<242x32xf32, #tpu.memory_space<vmem>>, vector<5x32xf32>
    %c25_95 = arith.constant 25 : index
    %c96_96 = arith.constant 96 : index
    %71 = vector.load %arg11[%c25_95, %c96_96] : memref<50x288xf32, #tpu.memory_space<vmem>>, vector<5x32xf32>
    tpu.vector_store %arg11[%c25_95, %c96_96], %70 {strides = array<i32>} : memref<50x288xf32, #tpu.memory_space<vmem>>, vector<5x32xf32>,
    %c154 = arith.constant 154 : index
    %c0_97 = arith.constant 0 : index
    %72 = tpu.strided_load %arg1[%c154, %c0_97] {strides = array<i32: 2, 1>} : memref<242x32xf32, #tpu.memory_space<vmem>>, vector<5x32xf32>
    %c30_98 = arith.constant 30 : index
    %c96_99 = arith.constant 96 : index
    %73 = vector.load %arg11[%c30_98, %c96_99] : memref<50x288xf32, #tpu.memory_space<vmem>>, vector<5x32xf32>
    tpu.vector_store %arg11[%c30_98, %c96_99], %72 {strides = array<i32>} : memref<50x288xf32, #tpu.memory_space<vmem>>, vector<5x32xf32>,
    %c176 = arith.constant 176 : index
    %c0_100 = arith.constant 0 : index
    %74 = tpu.strided_load %arg1[%c176, %c0_100] {strides = array<i32: 2, 1>} : memref<242x32xf32, #tpu.memory_space<vmem>>, vector<5x32xf32>
    %c35_101 = arith.constant 35 : index
    %c96_102 = arith.constant 96 : index
    %75 = vector.load %arg11[%c35_101, %c96_102] : memref<50x288xf32, #tpu.memory_space<vmem>>, vector<5x32xf32>
    tpu.vector_store %arg11[%c35_101, %c96_102], %74 {strides = array<i32>} : memref<50x288xf32, #tpu.memory_space<vmem>>, vector<5x32xf32>,
    %c198 = arith.constant 198 : index
    %c0_103 = arith.constant 0 : index
    %76 = tpu.strided_load %arg1[%c198, %c0_103] {strides = array<i32: 2, 1>} : memref<242x32xf32, #tpu.memory_space<vmem>>, vector<5x32xf32>
    %c40_104 = arith.constant 40 : index
    %c96_105 = arith.constant 96 : index
    %77 = vector.load %arg11[%c40_104, %c96_105] : memref<50x288xf32, #tpu.memory_space<vmem>>, vector<5x32xf32>
    tpu.vector_store %arg11[%c40_104, %c96_105], %76 {strides = array<i32>} : memref<50x288xf32, #tpu.memory_space<vmem>>, vector<5x32xf32>,
    %c220 = arith.constant 220 : index
    %c0_106 = arith.constant 0 : index
    %78 = tpu.strided_load %arg1[%c220, %c0_106] {strides = array<i32: 2, 1>} : memref<242x32xf32, #tpu.memory_space<vmem>>, vector<5x32xf32>
    %c45_107 = arith.constant 45 : index
    %c96_108 = arith.constant 96 : index
    %79 = vector.load %arg11[%c45_107, %c96_108] : memref<50x288xf32, #tpu.memory_space<vmem>>, vector<5x32xf32>
    tpu.vector_store %arg11[%c45_107, %c96_108], %78 {strides = array<i32>} : memref<50x288xf32, #tpu.memory_space<vmem>>, vector<5x32xf32>,
    %c12 = arith.constant 12 : index
    %c0_109 = arith.constant 0 : index
    %80 = tpu.strided_load %arg1[%c12, %c0_109] {strides = array<i32: 2, 1>} : memref<242x32xf32, #tpu.memory_space<vmem>>, vector<5x32xf32>
    %c0_110 = arith.constant 0 : index
    %c128 = arith.constant 128 : index
    %81 = vector.load %arg11[%c0_110, %c128] : memref<50x288xf32, #tpu.memory_space<vmem>>, vector<5x32xf32>
    tpu.vector_store %arg11[%c0_110, %c128], %80 {strides = array<i32>} : memref<50x288xf32, #tpu.memory_space<vmem>>, vector<5x32xf32>,
    %c34 = arith.constant 34 : index
    %c0_111 = arith.constant 0 : index
    %82 = tpu.strided_load %arg1[%c34, %c0_111] {strides = array<i32: 2, 1>} : memref<242x32xf32, #tpu.memory_space<vmem>>, vector<5x32xf32>
    %c5_112 = arith.constant 5 : index
    %c128_113 = arith.constant 128 : index
    %83 = vector.load %arg11[%c5_112, %c128_113] : memref<50x288xf32, #tpu.memory_space<vmem>>, vector<5x32xf32>
    tpu.vector_store %arg11[%c5_112, %c128_113], %82 {strides = array<i32>} : memref<50x288xf32, #tpu.memory_space<vmem>>, vector<5x32xf32>,
    %c56 = arith.constant 56 : index
    %c0_114 = arith.constant 0 : index
    %84 = tpu.strided_load %arg1[%c56, %c0_114] {strides = array<i32: 2, 1>} : memref<242x32xf32, #tpu.memory_space<vmem>>, vector<5x32xf32>
    %c10_115 = arith.constant 10 : index
    %c128_116 = arith.constant 128 : index
    %85 = vector.load %arg11[%c10_115, %c128_116] : memref<50x288xf32, #tpu.memory_space<vmem>>, vector<5x32xf32>
    tpu.vector_store %arg11[%c10_115, %c128_116], %84 {strides = array<i32>} : memref<50x288xf32, #tpu.memory_space<vmem>>, vector<5x32xf32>,
    %c78 = arith.constant 78 : index
    %c0_117 = arith.constant 0 : index
    %86 = tpu.strided_load %arg1[%c78, %c0_117] {strides = array<i32: 2, 1>} : memref<242x32xf32, #tpu.memory_space<vmem>>, vector<5x32xf32>
    %c15_118 = arith.constant 15 : index
    %c128_119 = arith.constant 128 : index
    %87 = vector.load %arg11[%c15_118, %c128_119] : memref<50x288xf32, #tpu.memory_space<vmem>>, vector<5x32xf32>
    tpu.vector_store %arg11[%c15_118, %c128_119], %86 {strides = array<i32>} : memref<50x288xf32, #tpu.memory_space<vmem>>, vector<5x32xf32>,
    %c100 = arith.constant 100 : index
    %c0_120 = arith.constant 0 : index
    %88 = tpu.strided_load %arg1[%c100, %c0_120] {strides = array<i32: 2, 1>} : memref<242x32xf32, #tpu.memory_space<vmem>>, vector<5x32xf32>
    %c20_121 = arith.constant 20 : index
    %c128_122 = arith.constant 128 : index
    %89 = vector.load %arg11[%c20_121, %c128_122] : memref<50x288xf32, #tpu.memory_space<vmem>>, vector<5x32xf32>
    tpu.vector_store %arg11[%c20_121, %c128_122], %88 {strides = array<i32>} : memref<50x288xf32, #tpu.memory_space<vmem>>, vector<5x32xf32>,
    %c133 = arith.constant 133 : index
    %c0_123 = arith.constant 0 : index
    %90 = tpu.strided_load %arg1[%c133, %c0_123] {strides = array<i32: 2, 1>} : memref<242x32xf32, #tpu.memory_space<vmem>>, vector<5x32xf32>
    %c25_124 = arith.constant 25 : index
    %c128_125 = arith.constant 128 : index
    %91 = vector.load %arg11[%c25_124, %c128_125] : memref<50x288xf32, #tpu.memory_space<vmem>>, vector<5x32xf32>
    tpu.vector_store %arg11[%c25_124, %c128_125], %90 {strides = array<i32>} : memref<50x288xf32, #tpu.memory_space<vmem>>, vector<5x32xf32>,
    %c155 = arith.constant 155 : index
    %c0_126 = arith.constant 0 : index
    %92 = tpu.strided_load %arg1[%c155, %c0_126] {strides = array<i32: 2, 1>} : memref<242x32xf32, #tpu.memory_space<vmem>>, vector<5x32xf32>
    %c30_127 = arith.constant 30 : index
    %c128_128 = arith.constant 128 : index
    %93 = vector.load %arg11[%c30_127, %c128_128] : memref<50x288xf32, #tpu.memory_space<vmem>>, vector<5x32xf32>
    tpu.vector_store %arg11[%c30_127, %c128_128], %92 {strides = array<i32>} : memref<50x288xf32, #tpu.memory_space<vmem>>, vector<5x32xf32>,
    %c177 = arith.constant 177 : index
    %c0_129 = arith.constant 0 : index
    %94 = tpu.strided_load %arg1[%c177, %c0_129] {strides = array<i32: 2, 1>} : memref<242x32xf32, #tpu.memory_space<vmem>>, vector<5x32xf32>
    %c35_130 = arith.constant 35 : index
    %c128_131 = arith.constant 128 : index
    %95 = vector.load %arg11[%c35_130, %c128_131] : memref<50x288xf32, #tpu.memory_space<vmem>>, vector<5x32xf32>
    tpu.vector_store %arg11[%c35_130, %c128_131], %94 {strides = array<i32>} : memref<50x288xf32, #tpu.memory_space<vmem>>, vector<5x32xf32>,
    %c199 = arith.constant 199 : index
    %c0_132 = arith.constant 0 : index
    %96 = tpu.strided_load %arg1[%c199, %c0_132] {strides = array<i32: 2, 1>} : memref<242x32xf32, #tpu.memory_space<vmem>>, vector<5x32xf32>
    %c40_133 = arith.constant 40 : index
    %c128_134 = arith.constant 128 : index
    %97 = vector.load %arg11[%c40_133, %c128_134] : memref<50x288xf32, #tpu.memory_space<vmem>>, vector<5x32xf32>
    tpu.vector_store %arg11[%c40_133, %c128_134], %96 {strides = array<i32>} : memref<50x288xf32, #tpu.memory_space<vmem>>, vector<5x32xf32>,
    %c221 = arith.constant 221 : index
    %c0_135 = arith.constant 0 : index
    %98 = tpu.strided_load %arg1[%c221, %c0_135] {strides = array<i32: 2, 1>} : memref<242x32xf32, #tpu.memory_space<vmem>>, vector<5x32xf32>
    %c45_136 = arith.constant 45 : index
    %c128_137 = arith.constant 128 : index
    %99 = vector.load %arg11[%c45_136, %c128_137] : memref<50x288xf32, #tpu.memory_space<vmem>>, vector<5x32xf32>
    tpu.vector_store %arg11[%c45_136, %c128_137], %98 {strides = array<i32>} : memref<50x288xf32, #tpu.memory_space<vmem>>, vector<5x32xf32>,
    %c13 = arith.constant 13 : index
    %c0_138 = arith.constant 0 : index
    %100 = tpu.strided_load %arg1[%c13, %c0_138] {strides = array<i32: 2, 1>} : memref<242x32xf32, #tpu.memory_space<vmem>>, vector<5x32xf32>
    %c0_139 = arith.constant 0 : index
    %c160 = arith.constant 160 : index
    %101 = vector.load %arg11[%c0_139, %c160] : memref<50x288xf32, #tpu.memory_space<vmem>>, vector<5x32xf32>
    tpu.vector_store %arg11[%c0_139, %c160], %100 {strides = array<i32>} : memref<50x288xf32, #tpu.memory_space<vmem>>, vector<5x32xf32>,
    %c35_140 = arith.constant 35 : index
    %c0_141 = arith.constant 0 : index
    %102 = tpu.strided_load %arg1[%c35_140, %c0_141] {strides = array<i32: 2, 1>} : memref<242x32xf32, #tpu.memory_space<vmem>>, vector<5x32xf32>
    %c5_142 = arith.constant 5 : index
    %c160_143 = arith.constant 160 : index
    %103 = vector.load %arg11[%c5_142, %c160_143] : memref<50x288xf32, #tpu.memory_space<vmem>>, vector<5x32xf32>
    tpu.vector_store %arg11[%c5_142, %c160_143], %102 {strides = array<i32>} : memref<50x288xf32, #tpu.memory_space<vmem>>, vector<5x32xf32>,
    %c57 = arith.constant 57 : index
    %c0_144 = arith.constant 0 : index
    %104 = tpu.strided_load %arg1[%c57, %c0_144] {strides = array<i32: 2, 1>} : memref<242x32xf32, #tpu.memory_space<vmem>>, vector<5x32xf32>
    %c10_145 = arith.constant 10 : index
    %c160_146 = arith.constant 160 : index
    %105 = vector.load %arg11[%c10_145, %c160_146] : memref<50x288xf32, #tpu.memory_space<vmem>>, vector<5x32xf32>
    tpu.vector_store %arg11[%c10_145, %c160_146], %104 {strides = array<i32>} : memref<50x288xf32, #tpu.memory_space<vmem>>, vector<5x32xf32>,
    %c79 = arith.constant 79 : index
    %c0_147 = arith.constant 0 : index
    %106 = tpu.strided_load %arg1[%c79, %c0_147] {strides = array<i32: 2, 1>} : memref<242x32xf32, #tpu.memory_space<vmem>>, vector<5x32xf32>
    %c15_148 = arith.constant 15 : index
    %c160_149 = arith.constant 160 : index
    %107 = vector.load %arg11[%c15_148, %c160_149] : memref<50x288xf32, #tpu.memory_space<vmem>>, vector<5x32xf32>
    tpu.vector_store %arg11[%c15_148, %c160_149], %106 {strides = array<i32>} : memref<50x288xf32, #tpu.memory_space<vmem>>, vector<5x32xf32>,
    %c101 = arith.constant 101 : index
    %c0_150 = arith.constant 0 : index
    %108 = tpu.strided_load %arg1[%c101, %c0_150] {strides = array<i32: 2, 1>} : memref<242x32xf32, #tpu.memory_space<vmem>>, vector<5x32xf32>
    %c20_151 = arith.constant 20 : index
    %c160_152 = arith.constant 160 : index
    %109 = vector.load %arg11[%c20_151, %c160_152] : memref<50x288xf32, #tpu.memory_space<vmem>>, vector<5x32xf32>
    tpu.vector_store %arg11[%c20_151, %c160_152], %108 {strides = array<i32>} : memref<50x288xf32, #tpu.memory_space<vmem>>, vector<5x32xf32>,
    %c134 = arith.constant 134 : index
    %c0_153 = arith.constant 0 : index
    %110 = tpu.strided_load %arg1[%c134, %c0_153] {strides = array<i32: 2, 1>} : memref<242x32xf32, #tpu.memory_space<vmem>>, vector<5x32xf32>
    %c25_154 = arith.constant 25 : index
    %c160_155 = arith.constant 160 : index
    %111 = vector.load %arg11[%c25_154, %c160_155] : memref<50x288xf32, #tpu.memory_space<vmem>>, vector<5x32xf32>
    tpu.vector_store %arg11[%c25_154, %c160_155], %110 {strides = array<i32>} : memref<50x288xf32, #tpu.memory_space<vmem>>, vector<5x32xf32>,
    %c156 = arith.constant 156 : index
    %c0_156 = arith.constant 0 : index
    %112 = tpu.strided_load %arg1[%c156, %c0_156] {strides = array<i32: 2, 1>} : memref<242x32xf32, #tpu.memory_space<vmem>>, vector<5x32xf32>
    %c30_157 = arith.constant 30 : index
    %c160_158 = arith.constant 160 : index
    %113 = vector.load %arg11[%c30_157, %c160_158] : memref<50x288xf32, #tpu.memory_space<vmem>>, vector<5x32xf32>
    tpu.vector_store %arg11[%c30_157, %c160_158], %112 {strides = array<i32>} : memref<50x288xf32, #tpu.memory_space<vmem>>, vector<5x32xf32>,
    %c178 = arith.constant 178 : index
    %c0_159 = arith.constant 0 : index
    %114 = tpu.strided_load %arg1[%c178, %c0_159] {strides = array<i32: 2, 1>} : memref<242x32xf32, #tpu.memory_space<vmem>>, vector<5x32xf32>
    %c35_160 = arith.constant 35 : index
    %c160_161 = arith.constant 160 : index
    %115 = vector.load %arg11[%c35_160, %c160_161] : memref<50x288xf32, #tpu.memory_space<vmem>>, vector<5x32xf32>
    tpu.vector_store %arg11[%c35_160, %c160_161], %114 {strides = array<i32>} : memref<50x288xf32, #tpu.memory_space<vmem>>, vector<5x32xf32>,
    %c200 = arith.constant 200 : index
    %c0_162 = arith.constant 0 : index
    %116 = tpu.strided_load %arg1[%c200, %c0_162] {strides = array<i32: 2, 1>} : memref<242x32xf32, #tpu.memory_space<vmem>>, vector<5x32xf32>
    %c40_163 = arith.constant 40 : index
    %c160_164 = arith.constant 160 : index
    %117 = vector.load %arg11[%c40_163, %c160_164] : memref<50x288xf32, #tpu.memory_space<vmem>>, vector<5x32xf32>
    tpu.vector_store %arg11[%c40_163, %c160_164], %116 {strides = array<i32>} : memref<50x288xf32, #tpu.memory_space<vmem>>, vector<5x32xf32>,
    %c222 = arith.constant 222 : index
    %c0_165 = arith.constant 0 : index
    %118 = tpu.strided_load %arg1[%c222, %c0_165] {strides = array<i32: 2, 1>} : memref<242x32xf32, #tpu.memory_space<vmem>>, vector<5x32xf32>
    %c45_166 = arith.constant 45 : index
    %c160_167 = arith.constant 160 : index
    %119 = vector.load %arg11[%c45_166, %c160_167] : memref<50x288xf32, #tpu.memory_space<vmem>>, vector<5x32xf32>
    tpu.vector_store %arg11[%c45_166, %c160_167], %118 {strides = array<i32>} : memref<50x288xf32, #tpu.memory_space<vmem>>, vector<5x32xf32>,
    %c22_168 = arith.constant 22 : index
    %c0_169 = arith.constant 0 : index
    %120 = tpu.strided_load %arg1[%c22_168, %c0_169] {strides = array<i32: 2, 1>} : memref<242x32xf32, #tpu.memory_space<vmem>>, vector<5x32xf32>
    %c0_170 = arith.constant 0 : index
    %c192 = arith.constant 192 : index
    %121 = vector.load %arg11[%c0_170, %c192] : memref<50x288xf32, #tpu.memory_space<vmem>>, vector<5x32xf32>
    tpu.vector_store %arg11[%c0_170, %c192], %120 {strides = array<i32>} : memref<50x288xf32, #tpu.memory_space<vmem>>, vector<5x32xf32>,
    %c44_171 = arith.constant 44 : index
    %c0_172 = arith.constant 0 : index
    %122 = tpu.strided_load %arg1[%c44_171, %c0_172] {strides = array<i32: 2, 1>} : memref<242x32xf32, #tpu.memory_space<vmem>>, vector<5x32xf32>
    %c5_173 = arith.constant 5 : index
    %c192_174 = arith.constant 192 : index
    %123 = vector.load %arg11[%c5_173, %c192_174] : memref<50x288xf32, #tpu.memory_space<vmem>>, vector<5x32xf32>
    tpu.vector_store %arg11[%c5_173, %c192_174], %122 {strides = array<i32>} : memref<50x288xf32, #tpu.memory_space<vmem>>, vector<5x32xf32>,
    %c66_175 = arith.constant 66 : index
    %c0_176 = arith.constant 0 : index
    %124 = tpu.strided_load %arg1[%c66_175, %c0_176] {strides = array<i32: 2, 1>} : memref<242x32xf32, #tpu.memory_space<vmem>>, vector<5x32xf32>
    %c10_177 = arith.constant 10 : index
    %c192_178 = arith.constant 192 : index
    %125 = vector.load %arg11[%c10_177, %c192_178] : memref<50x288xf32, #tpu.memory_space<vmem>>, vector<5x32xf32>
    tpu.vector_store %arg11[%c10_177, %c192_178], %124 {strides = array<i32>} : memref<50x288xf32, #tpu.memory_space<vmem>>, vector<5x32xf32>,
    %c88_179 = arith.constant 88 : index
    %c0_180 = arith.constant 0 : index
    %126 = tpu.strided_load %arg1[%c88_179, %c0_180] {strides = array<i32: 2, 1>} : memref<242x32xf32, #tpu.memory_space<vmem>>, vector<5x32xf32>
    %c15_181 = arith.constant 15 : index
    %c192_182 = arith.constant 192 : index
    %127 = vector.load %arg11[%c15_181, %c192_182] : memref<50x288xf32, #tpu.memory_space<vmem>>, vector<5x32xf32>
    tpu.vector_store %arg11[%c15_181, %c192_182], %126 {strides = array<i32>} : memref<50x288xf32, #tpu.memory_space<vmem>>, vector<5x32xf32>,
    %c110 = arith.constant 110 : index
    %c0_183 = arith.constant 0 : index
    %128 = tpu.strided_load %arg1[%c110, %c0_183] {strides = array<i32: 2, 1>} : memref<242x32xf32, #tpu.memory_space<vmem>>, vector<5x32xf32>
    %c20_184 = arith.constant 20 : index
    %c192_185 = arith.constant 192 : index
    %129 = vector.load %arg11[%c20_184, %c192_185] : memref<50x288xf32, #tpu.memory_space<vmem>>, vector<5x32xf32>
    tpu.vector_store %arg11[%c20_184, %c192_185], %128 {strides = array<i32>} : memref<50x288xf32, #tpu.memory_space<vmem>>, vector<5x32xf32>,
    %c143_186 = arith.constant 143 : index
    %c0_187 = arith.constant 0 : index
    %130 = tpu.strided_load %arg1[%c143_186, %c0_187] {strides = array<i32: 2, 1>} : memref<242x32xf32, #tpu.memory_space<vmem>>, vector<5x32xf32>
    %c25_188 = arith.constant 25 : index
    %c192_189 = arith.constant 192 : index
    %131 = vector.load %arg11[%c25_188, %c192_189] : memref<50x288xf32, #tpu.memory_space<vmem>>, vector<5x32xf32>
    tpu.vector_store %arg11[%c25_188, %c192_189], %130 {strides = array<i32>} : memref<50x288xf32, #tpu.memory_space<vmem>>, vector<5x32xf32>,
    %c165_190 = arith.constant 165 : index
    %c0_191 = arith.constant 0 : index
    %132 = tpu.strided_load %arg1[%c165_190, %c0_191] {strides = array<i32: 2, 1>} : memref<242x32xf32, #tpu.memory_space<vmem>>, vector<5x32xf32>
    %c30_192 = arith.constant 30 : index
    %c192_193 = arith.constant 192 : index
    %133 = vector.load %arg11[%c30_192, %c192_193] : memref<50x288xf32, #tpu.memory_space<vmem>>, vector<5x32xf32>
    tpu.vector_store %arg11[%c30_192, %c192_193], %132 {strides = array<i32>} : memref<50x288xf32, #tpu.memory_space<vmem>>, vector<5x32xf32>,
    %c187_194 = arith.constant 187 : index
    %c0_195 = arith.constant 0 : index
    %134 = tpu.strided_load %arg1[%c187_194, %c0_195] {strides = array<i32: 2, 1>} : memref<242x32xf32, #tpu.memory_space<vmem>>, vector<5x32xf32>
    %c35_196 = arith.constant 35 : index
    %c192_197 = arith.constant 192 : index
    %135 = vector.load %arg11[%c35_196, %c192_197] : memref<50x288xf32, #tpu.memory_space<vmem>>, vector<5x32xf32>
    tpu.vector_store %arg11[%c35_196, %c192_197], %134 {strides = array<i32>} : memref<50x288xf32, #tpu.memory_space<vmem>>, vector<5x32xf32>,
    %c209_198 = arith.constant 209 : index
    %c0_199 = arith.constant 0 : index
    %136 = tpu.strided_load %arg1[%c209_198, %c0_199] {strides = array<i32: 2, 1>} : memref<242x32xf32, #tpu.memory_space<vmem>>, vector<5x32xf32>
    %c40_200 = arith.constant 40 : index
    %c192_201 = arith.constant 192 : index
    %137 = vector.load %arg11[%c40_200, %c192_201] : memref<50x288xf32, #tpu.memory_space<vmem>>, vector<5x32xf32>
    tpu.vector_store %arg11[%c40_200, %c192_201], %136 {strides = array<i32>} : memref<50x288xf32, #tpu.memory_space<vmem>>, vector<5x32xf32>,
    %c231 = arith.constant 231 : index
    %c0_202 = arith.constant 0 : index
    %138 = tpu.strided_load %arg1[%c231, %c0_202] {strides = array<i32: 2, 1>} : memref<242x32xf32, #tpu.memory_space<vmem>>, vector<5x32xf32>
    %c45_203 = arith.constant 45 : index
    %c192_204 = arith.constant 192 : index
    %139 = vector.load %arg11[%c45_203, %c192_204] : memref<50x288xf32, #tpu.memory_space<vmem>>, vector<5x32xf32>
    tpu.vector_store %arg11[%c45_203, %c192_204], %138 {strides = array<i32>} : memref<50x288xf32, #tpu.memory_space<vmem>>, vector<5x32xf32>,
    %c23_205 = arith.constant 23 : index
    %c0_206 = arith.constant 0 : index
    %140 = tpu.strided_load %arg1[%c23_205, %c0_206] {strides = array<i32: 2, 1>} : memref<242x32xf32, #tpu.memory_space<vmem>>, vector<5x32xf32>
    %c0_207 = arith.constant 0 : index
    %c224 = arith.constant 224 : index
    %141 = vector.load %arg11[%c0_207, %c224] : memref<50x288xf32, #tpu.memory_space<vmem>>, vector<5x32xf32>
    tpu.vector_store %arg11[%c0_207, %c224], %140 {strides = array<i32>} : memref<50x288xf32, #tpu.memory_space<vmem>>, vector<5x32xf32>,
    %c45_208 = arith.constant 45 : index
    %c0_209 = arith.constant 0 : index
    %142 = tpu.strided_load %arg1[%c45_208, %c0_209] {strides = array<i32: 2, 1>} : memref<242x32xf32, #tpu.memory_space<vmem>>, vector<5x32xf32>
    %c5_210 = arith.constant 5 : index
    %c224_211 = arith.constant 224 : index
    %143 = vector.load %arg11[%c5_210, %c224_211] : memref<50x288xf32, #tpu.memory_space<vmem>>, vector<5x32xf32>
    tpu.vector_store %arg11[%c5_210, %c224_211], %142 {strides = array<i32>} : memref<50x288xf32, #tpu.memory_space<vmem>>, vector<5x32xf32>,
    %c67_212 = arith.constant 67 : index
    %c0_213 = arith.constant 0 : index
    %144 = tpu.strided_load %arg1[%c67_212, %c0_213] {strides = array<i32: 2, 1>} : memref<242x32xf32, #tpu.memory_space<vmem>>, vector<5x32xf32>
    %c10_214 = arith.constant 10 : index
    %c224_215 = arith.constant 224 : index
    %145 = vector.load %arg11[%c10_214, %c224_215] : memref<50x288xf32, #tpu.memory_space<vmem>>, vector<5x32xf32>
    tpu.vector_store %arg11[%c10_214, %c224_215], %144 {strides = array<i32>} : memref<50x288xf32, #tpu.memory_space<vmem>>, vector<5x32xf32>,
    %c89_216 = arith.constant 89 : index
    %c0_217 = arith.constant 0 : index
    %146 = tpu.strided_load %arg1[%c89_216, %c0_217] {strides = array<i32: 2, 1>} : memref<242x32xf32, #tpu.memory_space<vmem>>, vector<5x32xf32>
    %c15_218 = arith.constant 15 : index
    %c224_219 = arith.constant 224 : index
    %147 = vector.load %arg11[%c15_218, %c224_219] : memref<50x288xf32, #tpu.memory_space<vmem>>, vector<5x32xf32>
    tpu.vector_store %arg11[%c15_218, %c224_219], %146 {strides = array<i32>} : memref<50x288xf32, #tpu.memory_space<vmem>>, vector<5x32xf32>,
    %c111 = arith.constant 111 : index
    %c0_220 = arith.constant 0 : index
    %148 = tpu.strided_load %arg1[%c111, %c0_220] {strides = array<i32: 2, 1>} : memref<242x32xf32, #tpu.memory_space<vmem>>, vector<5x32xf32>
    %c20_221 = arith.constant 20 : index
    %c224_222 = arith.constant 224 : index
    %149 = vector.load %arg11[%c20_221, %c224_222] : memref<50x288xf32, #tpu.memory_space<vmem>>, vector<5x32xf32>
    tpu.vector_store %arg11[%c20_221, %c224_222], %148 {strides = array<i32>} : memref<50x288xf32, #tpu.memory_space<vmem>>, vector<5x32xf32>,
    %c144_223 = arith.constant 144 : index
    %c0_224 = arith.constant 0 : index
    %150 = tpu.strided_load %arg1[%c144_223, %c0_224] {strides = array<i32: 2, 1>} : memref<242x32xf32, #tpu.memory_space<vmem>>, vector<5x32xf32>
    %c25_225 = arith.constant 25 : index
    %c224_226 = arith.constant 224 : index
    %151 = vector.load %arg11[%c25_225, %c224_226] : memref<50x288xf32, #tpu.memory_space<vmem>>, vector<5x32xf32>
    tpu.vector_store %arg11[%c25_225, %c224_226], %150 {strides = array<i32>} : memref<50x288xf32, #tpu.memory_space<vmem>>, vector<5x32xf32>,
    %c166_227 = arith.constant 166 : index
    %c0_228 = arith.constant 0 : index
    %152 = tpu.strided_load %arg1[%c166_227, %c0_228] {strides = array<i32: 2, 1>} : memref<242x32xf32, #tpu.memory_space<vmem>>, vector<5x32xf32>
    %c30_229 = arith.constant 30 : index
    %c224_230 = arith.constant 224 : index
    %153 = vector.load %arg11[%c30_229, %c224_230] : memref<50x288xf32, #tpu.memory_space<vmem>>, vector<5x32xf32>
    tpu.vector_store %arg11[%c30_229, %c224_230], %152 {strides = array<i32>} : memref<50x288xf32, #tpu.memory_space<vmem>>, vector<5x32xf32>,
    %c188_231 = arith.constant 188 : index
    %c0_232 = arith.constant 0 : index
    %154 = tpu.strided_load %arg1[%c188_231, %c0_232] {strides = array<i32: 2, 1>} : memref<242x32xf32, #tpu.memory_space<vmem>>, vector<5x32xf32>
    %c35_233 = arith.constant 35 : index
    %c224_234 = arith.constant 224 : index
    %155 = vector.load %arg11[%c35_233, %c224_234] : memref<50x288xf32, #tpu.memory_space<vmem>>, vector<5x32xf32>
    tpu.vector_store %arg11[%c35_233, %c224_234], %154 {strides = array<i32>} : memref<50x288xf32, #tpu.memory_space<vmem>>, vector<5x32xf32>,
    %c210_235 = arith.constant 210 : index
    %c0_236 = arith.constant 0 : index
    %156 = tpu.strided_load %arg1[%c210_235, %c0_236] {strides = array<i32: 2, 1>} : memref<242x32xf32, #tpu.memory_space<vmem>>, vector<5x32xf32>
    %c40_237 = arith.constant 40 : index
    %c224_238 = arith.constant 224 : index
    %157 = vector.load %arg11[%c40_237, %c224_238] : memref<50x288xf32, #tpu.memory_space<vmem>>, vector<5x32xf32>
    tpu.vector_store %arg11[%c40_237, %c224_238], %156 {strides = array<i32>} : memref<50x288xf32, #tpu.memory_space<vmem>>, vector<5x32xf32>,
    %c232 = arith.constant 232 : index
    %c0_239 = arith.constant 0 : index
    %158 = tpu.strided_load %arg1[%c232, %c0_239] {strides = array<i32: 2, 1>} : memref<242x32xf32, #tpu.memory_space<vmem>>, vector<5x32xf32>
    %c45_240 = arith.constant 45 : index
    %c224_241 = arith.constant 224 : index
    %159 = vector.load %arg11[%c45_240, %c224_241] : memref<50x288xf32, #tpu.memory_space<vmem>>, vector<5x32xf32>
    tpu.vector_store %arg11[%c45_240, %c224_241], %158 {strides = array<i32>} : memref<50x288xf32, #tpu.memory_space<vmem>>, vector<5x32xf32>,
    %c24_242 = arith.constant 24 : index
    %c0_243 = arith.constant 0 : index
    %160 = tpu.strided_load %arg1[%c24_242, %c0_243] {strides = array<i32: 2, 1>} : memref<242x32xf32, #tpu.memory_space<vmem>>, vector<5x32xf32>
    %c0_244 = arith.constant 0 : index
    %c256 = arith.constant 256 : index
    %161 = vector.load %arg11[%c0_244, %c256] : memref<50x288xf32, #tpu.memory_space<vmem>>, vector<5x32xf32>
    tpu.vector_store %arg11[%c0_244, %c256], %160 {strides = array<i32>} : memref<50x288xf32, #tpu.memory_space<vmem>>, vector<5x32xf32>,
    %c46_245 = arith.constant 46 : index
    %c0_246 = arith.constant 0 : index
    %162 = tpu.strided_load %arg1[%c46_245, %c0_246] {strides = array<i32: 2, 1>} : memref<242x32xf32, #tpu.memory_space<vmem>>, vector<5x32xf32>
    %c5_247 = arith.constant 5 : index
    %c256_248 = arith.constant 256 : index
    %163 = vector.load %arg11[%c5_247, %c256_248] : memref<50x288xf32, #tpu.memory_space<vmem>>, vector<5x32xf32>
    tpu.vector_store %arg11[%c5_247, %c256_248], %162 {strides = array<i32>} : memref<50x288xf32, #tpu.memory_space<vmem>>, vector<5x32xf32>,
    %c68_249 = arith.constant 68 : index
    %c0_250 = arith.constant 0 : index
    %164 = tpu.strided_load %arg1[%c68_249, %c0_250] {strides = array<i32: 2, 1>} : memref<242x32xf32, #tpu.memory_space<vmem>>, vector<5x32xf32>
    %c10_251 = arith.constant 10 : index
    %c256_252 = arith.constant 256 : index
    %165 = vector.load %arg11[%c10_251, %c256_252] : memref<50x288xf32, #tpu.memory_space<vmem>>, vector<5x32xf32>
    tpu.vector_store %arg11[%c10_251, %c256_252], %164 {strides = array<i32>} : memref<50x288xf32, #tpu.memory_space<vmem>>, vector<5x32xf32>,
    %c90_253 = arith.constant 90 : index
    %c0_254 = arith.constant 0 : index
    %166 = tpu.strided_load %arg1[%c90_253, %c0_254] {strides = array<i32: 2, 1>} : memref<242x32xf32, #tpu.memory_space<vmem>>, vector<5x32xf32>
    %c15_255 = arith.constant 15 : index
    %c256_256 = arith.constant 256 : index
    %167 = vector.load %arg11[%c15_255, %c256_256] : memref<50x288xf32, #tpu.memory_space<vmem>>, vector<5x32xf32>
    tpu.vector_store %arg11[%c15_255, %c256_256], %166 {strides = array<i32>} : memref<50x288xf32, #tpu.memory_space<vmem>>, vector<5x32xf32>,
    %c112 = arith.constant 112 : index
    %c0_257 = arith.constant 0 : index
    %168 = tpu.strided_load %arg1[%c112, %c0_257] {strides = array<i32: 2, 1>} : memref<242x32xf32, #tpu.memory_space<vmem>>, vector<5x32xf32>
    %c20_258 = arith.constant 20 : index
    %c256_259 = arith.constant 256 : index
    %169 = vector.load %arg11[%c20_258, %c256_259] : memref<50x288xf32, #tpu.memory_space<vmem>>, vector<5x32xf32>
    tpu.vector_store %arg11[%c20_258, %c256_259], %168 {strides = array<i32>} : memref<50x288xf32, #tpu.memory_space<vmem>>, vector<5x32xf32>,
    %c145_260 = arith.constant 145 : index
    %c0_261 = arith.constant 0 : index
    %170 = tpu.strided_load %arg1[%c145_260, %c0_261] {strides = array<i32: 2, 1>} : memref<242x32xf32, #tpu.memory_space<vmem>>, vector<5x32xf32>
    %c25_262 = arith.constant 25 : index
    %c256_263 = arith.constant 256 : index
    %171 = vector.load %arg11[%c25_262, %c256_263] : memref<50x288xf32, #tpu.memory_space<vmem>>, vector<5x32xf32>
    tpu.vector_store %arg11[%c25_262, %c256_263], %170 {strides = array<i32>} : memref<50x288xf32, #tpu.memory_space<vmem>>, vector<5x32xf32>,
    %c167_264 = arith.constant 167 : index
    %c0_265 = arith.constant 0 : index
    %172 = tpu.strided_load %arg1[%c167_264, %c0_265] {strides = array<i32: 2, 1>} : memref<242x32xf32, #tpu.memory_space<vmem>>, vector<5x32xf32>
    %c30_266 = arith.constant 30 : index
    %c256_267 = arith.constant 256 : index
    %173 = vector.load %arg11[%c30_266, %c256_267] : memref<50x288xf32, #tpu.memory_space<vmem>>, vector<5x32xf32>
    tpu.vector_store %arg11[%c30_266, %c256_267], %172 {strides = array<i32>} : memref<50x288xf32, #tpu.memory_space<vmem>>, vector<5x32xf32>,
    %c189_268 = arith.constant 189 : index
    %c0_269 = arith.constant 0 : index
    %174 = tpu.strided_load %arg1[%c189_268, %c0_269] {strides = array<i32: 2, 1>} : memref<242x32xf32, #tpu.memory_space<vmem>>, vector<5x32xf32>
    %c35_270 = arith.constant 35 : index
    %c256_271 = arith.constant 256 : index
    %175 = vector.load %arg11[%c35_270, %c256_271] : memref<50x288xf32, #tpu.memory_space<vmem>>, vector<5x32xf32>
    tpu.vector_store %arg11[%c35_270, %c256_271], %174 {strides = array<i32>} : memref<50x288xf32, #tpu.memory_space<vmem>>, vector<5x32xf32>,
    %c211_272 = arith.constant 211 : index
    %c0_273 = arith.constant 0 : index
    %176 = tpu.strided_load %arg1[%c211_272, %c0_273] {strides = array<i32: 2, 1>} : memref<242x32xf32, #tpu.memory_space<vmem>>, vector<5x32xf32>
    %c40_274 = arith.constant 40 : index
    %c256_275 = arith.constant 256 : index
    %177 = vector.load %arg11[%c40_274, %c256_275] : memref<50x288xf32, #tpu.memory_space<vmem>>, vector<5x32xf32>
    tpu.vector_store %arg11[%c40_274, %c256_275], %176 {strides = array<i32>} : memref<50x288xf32, #tpu.memory_space<vmem>>, vector<5x32xf32>,
    %c233 = arith.constant 233 : index
    %c0_276 = arith.constant 0 : index
    %178 = tpu.strided_load %arg1[%c233, %c0_276] {strides = array<i32: 2, 1>} : memref<242x32xf32, #tpu.memory_space<vmem>>, vector<5x32xf32>
    %c45_277 = arith.constant 45 : index
    %c256_278 = arith.constant 256 : index
    %179 = vector.load %arg11[%c45_277, %c256_278] : memref<50x288xf32, #tpu.memory_space<vmem>>, vector<5x32xf32>
    tpu.vector_store %arg11[%c45_277, %c256_278], %178 {strides = array<i32>} : memref<50x288xf32, #tpu.memory_space<vmem>>, vector<5x32xf32>,
    %c0_279 = arith.constant 0 : index
    %c0_280 = arith.constant 0 : index
    %180 = vector.load %arg11[%c0_279, %c0_280] : memref<50x288xf32, #tpu.memory_space<vmem>>, vector<50x288xf32>
    %c0_281 = arith.constant 0 : index
    %c0_282 = arith.constant 0 : index
    %181 = vector.load %arg2[%c0_281, %c0_282] : memref<288x32xf32, #tpu.memory_space<vmem>>, vector<288x32xf32>
    %cst = arith.constant dense<0.000000e+00> : vector<50x32xf32>
    %182 = tpu.matmul %180, %181, %cst {dimension_numbers = #tpu.dot_dimension_numbers<[1], [0], [0], [1], [0, 0, 1, 1], [], []>} : vector<50x288xf32>, vector<288x32xf32>, vector<50x32xf32> -> vector<50x32xf32>
    %c0_283 = arith.constant 0 : index
    %c0_284 = arith.constant 0 : index
    %183 = vector.load %arg3[%c0_283, %c0_284] : memref<1x32xf32, #tpu.memory_space<vmem>>, vector<1x32xf32>
    %184 = vector.broadcast %183 : vector<1x32xf32> to vector<50x32xf32>
    %185 = arith.addf %182, %184 : vector<50x32xf32>
    %cst_285 = arith.constant 0.000000e+00 : f32
    %186 = vector.broadcast %cst_285 : f32 to vector<50x32xf32>
    %187 = arith.cmpf ogt, %185, %186 : vector<50x32xf32>
    %cst_286 = arith.constant 1.000000e-01 : f32
    %188 = vector.broadcast %cst_286 : f32 to vector<50x32xf32>
    %189 = arith.mulf %188, %185 : vector<50x32xf32>
    %190 = arith.select %187, %185, %189 : vector<50x32xi1>, vector<50x32xf32>
    %c0_287 = arith.constant 0 : index
    %c0_288 = arith.constant 0 : index
    %191 = vector.load %arg12[%c0_287, %c0_288] : memref<50x32xf32, #tpu.memory_space<vmem>>, vector<50x32xf32>
    tpu.vector_store %arg12[%c0_287, %c0_288], %190 {strides = array<i32>} : memref<50x32xf32, #tpu.memory_space<vmem>>, vector<50x32xf32>,
    %c0_289 = arith.constant 0 : index
    %c0_290 = arith.constant 0 : index
    %192 = tpu.strided_load %arg12[%c0_289, %c0_290] {strides = array<i32: 2, 1>} : memref<50x32xf32, #tpu.memory_space<vmem>>, vector<2x32xf32>
    %c0_291 = arith.constant 0 : index
    %c0_292 = arith.constant 0 : index
    %193 = vector.load %arg13[%c0_291, %c0_292] : memref<8x288xf32, #tpu.memory_space<vmem>>, vector<2x32xf32>
    tpu.vector_store %arg13[%c0_291, %c0_292], %192 {strides = array<i32>} : memref<8x288xf32, #tpu.memory_space<vmem>>, vector<2x32xf32>,
    %c10_293 = arith.constant 10 : index
    %c0_294 = arith.constant 0 : index
    %194 = tpu.strided_load %arg12[%c10_293, %c0_294] {strides = array<i32: 2, 1>} : memref<50x32xf32, #tpu.memory_space<vmem>>, vector<2x32xf32>
    %c2_295 = arith.constant 2 : index
    %c0_296 = arith.constant 0 : index
    %195 = vector.load %arg13[%c2_295, %c0_296] : memref<8x288xf32, #tpu.memory_space<vmem>>, vector<2x32xf32>
    tpu.vector_store %arg13[%c2_295, %c0_296], %194 {strides = array<i32>} : memref<8x288xf32, #tpu.memory_space<vmem>>, vector<2x32xf32>,
    %c25_297 = arith.constant 25 : index
    %c0_298 = arith.constant 0 : index
    %196 = tpu.strided_load %arg12[%c25_297, %c0_298] {strides = array<i32: 2, 1>} : memref<50x32xf32, #tpu.memory_space<vmem>>, vector<2x32xf32>
    %c4 = arith.constant 4 : index
    %c0_299 = arith.constant 0 : index
    %197 = vector.load %arg13[%c4, %c0_299] : memref<8x288xf32, #tpu.memory_space<vmem>>, vector<2x32xf32>
    tpu.vector_store %arg13[%c4, %c0_299], %196 {strides = array<i32>} : memref<8x288xf32, #tpu.memory_space<vmem>>, vector<2x32xf32>,
    %c35_300 = arith.constant 35 : index
    %c0_301 = arith.constant 0 : index
    %198 = tpu.strided_load %arg12[%c35_300, %c0_301] {strides = array<i32: 2, 1>} : memref<50x32xf32, #tpu.memory_space<vmem>>, vector<2x32xf32>
    %c6 = arith.constant 6 : index
    %c0_302 = arith.constant 0 : index
    %199 = vector.load %arg13[%c6, %c0_302] : memref<8x288xf32, #tpu.memory_space<vmem>>, vector<2x32xf32>
    tpu.vector_store %arg13[%c6, %c0_302], %198 {strides = array<i32>} : memref<8x288xf32, #tpu.memory_space<vmem>>, vector<2x32xf32>,
    %c1_303 = arith.constant 1 : index
    %c0_304 = arith.constant 0 : index
    %200 = tpu.strided_load %arg12[%c1_303, %c0_304] {strides = array<i32: 2, 1>} : memref<50x32xf32, #tpu.memory_space<vmem>>, vector<2x32xf32>
    %c0_305 = arith.constant 0 : index
    %c32_306 = arith.constant 32 : index
    %201 = vector.load %arg13[%c0_305, %c32_306] : memref<8x288xf32, #tpu.memory_space<vmem>>, vector<2x32xf32>
    tpu.vector_store %arg13[%c0_305, %c32_306], %200 {strides = array<i32>} : memref<8x288xf32, #tpu.memory_space<vmem>>, vector<2x32xf32>,
    %c11_307 = arith.constant 11 : index
    %c0_308 = arith.constant 0 : index
    %202 = tpu.strided_load %arg12[%c11_307, %c0_308] {strides = array<i32: 2, 1>} : memref<50x32xf32, #tpu.memory_space<vmem>>, vector<2x32xf32>
    %c2_309 = arith.constant 2 : index
    %c32_310 = arith.constant 32 : index
    %203 = vector.load %arg13[%c2_309, %c32_310] : memref<8x288xf32, #tpu.memory_space<vmem>>, vector<2x32xf32>
    tpu.vector_store %arg13[%c2_309, %c32_310], %202 {strides = array<i32>} : memref<8x288xf32, #tpu.memory_space<vmem>>, vector<2x32xf32>,
    %c26 = arith.constant 26 : index
    %c0_311 = arith.constant 0 : index
    %204 = tpu.strided_load %arg12[%c26, %c0_311] {strides = array<i32: 2, 1>} : memref<50x32xf32, #tpu.memory_space<vmem>>, vector<2x32xf32>
    %c4_312 = arith.constant 4 : index
    %c32_313 = arith.constant 32 : index
    %205 = vector.load %arg13[%c4_312, %c32_313] : memref<8x288xf32, #tpu.memory_space<vmem>>, vector<2x32xf32>
    tpu.vector_store %arg13[%c4_312, %c32_313], %204 {strides = array<i32>} : memref<8x288xf32, #tpu.memory_space<vmem>>, vector<2x32xf32>,
    %c36 = arith.constant 36 : index
    %c0_314 = arith.constant 0 : index
    %206 = tpu.strided_load %arg12[%c36, %c0_314] {strides = array<i32: 2, 1>} : memref<50x32xf32, #tpu.memory_space<vmem>>, vector<2x32xf32>
    %c6_315 = arith.constant 6 : index
    %c32_316 = arith.constant 32 : index
    %207 = vector.load %arg13[%c6_315, %c32_316] : memref<8x288xf32, #tpu.memory_space<vmem>>, vector<2x32xf32>
    tpu.vector_store %arg13[%c6_315, %c32_316], %206 {strides = array<i32>} : memref<8x288xf32, #tpu.memory_space<vmem>>, vector<2x32xf32>,
    %c2_317 = arith.constant 2 : index
    %c0_318 = arith.constant 0 : index
    %208 = tpu.strided_load %arg12[%c2_317, %c0_318] {strides = array<i32: 2, 1>} : memref<50x32xf32, #tpu.memory_space<vmem>>, vector<2x32xf32>
    %c0_319 = arith.constant 0 : index
    %c64_320 = arith.constant 64 : index
    %209 = vector.load %arg13[%c0_319, %c64_320] : memref<8x288xf32, #tpu.memory_space<vmem>>, vector<2x32xf32>
    tpu.vector_store %arg13[%c0_319, %c64_320], %208 {strides = array<i32>} : memref<8x288xf32, #tpu.memory_space<vmem>>, vector<2x32xf32>,
    %c12_321 = arith.constant 12 : index
    %c0_322 = arith.constant 0 : index
    %210 = tpu.strided_load %arg12[%c12_321, %c0_322] {strides = array<i32: 2, 1>} : memref<50x32xf32, #tpu.memory_space<vmem>>, vector<2x32xf32>
    %c2_323 = arith.constant 2 : index
    %c64_324 = arith.constant 64 : index
    %211 = vector.load %arg13[%c2_323, %c64_324] : memref<8x288xf32, #tpu.memory_space<vmem>>, vector<2x32xf32>
    tpu.vector_store %arg13[%c2_323, %c64_324], %210 {strides = array<i32>} : memref<8x288xf32, #tpu.memory_space<vmem>>, vector<2x32xf32>,
    %c27 = arith.constant 27 : index
    %c0_325 = arith.constant 0 : index
    %212 = tpu.strided_load %arg12[%c27, %c0_325] {strides = array<i32: 2, 1>} : memref<50x32xf32, #tpu.memory_space<vmem>>, vector<2x32xf32>
    %c4_326 = arith.constant 4 : index
    %c64_327 = arith.constant 64 : index
    %213 = vector.load %arg13[%c4_326, %c64_327] : memref<8x288xf32, #tpu.memory_space<vmem>>, vector<2x32xf32>
    tpu.vector_store %arg13[%c4_326, %c64_327], %212 {strides = array<i32>} : memref<8x288xf32, #tpu.memory_space<vmem>>, vector<2x32xf32>,
    %c37 = arith.constant 37 : index
    %c0_328 = arith.constant 0 : index
    %214 = tpu.strided_load %arg12[%c37, %c0_328] {strides = array<i32: 2, 1>} : memref<50x32xf32, #tpu.memory_space<vmem>>, vector<2x32xf32>
    %c6_329 = arith.constant 6 : index
    %c64_330 = arith.constant 64 : index
    %215 = vector.load %arg13[%c6_329, %c64_330] : memref<8x288xf32, #tpu.memory_space<vmem>>, vector<2x32xf32>
    tpu.vector_store %arg13[%c6_329, %c64_330], %214 {strides = array<i32>} : memref<8x288xf32, #tpu.memory_space<vmem>>, vector<2x32xf32>,
    %c5_331 = arith.constant 5 : index
    %c0_332 = arith.constant 0 : index
    %216 = tpu.strided_load %arg12[%c5_331, %c0_332] {strides = array<i32: 2, 1>} : memref<50x32xf32, #tpu.memory_space<vmem>>, vector<2x32xf32>
    %c0_333 = arith.constant 0 : index
    %c96_334 = arith.constant 96 : index
    %217 = vector.load %arg13[%c0_333, %c96_334] : memref<8x288xf32, #tpu.memory_space<vmem>>, vector<2x32xf32>
    tpu.vector_store %arg13[%c0_333, %c96_334], %216 {strides = array<i32>} : memref<8x288xf32, #tpu.memory_space<vmem>>, vector<2x32xf32>,
    %c15_335 = arith.constant 15 : index
    %c0_336 = arith.constant 0 : index
    %218 = tpu.strided_load %arg12[%c15_335, %c0_336] {strides = array<i32: 2, 1>} : memref<50x32xf32, #tpu.memory_space<vmem>>, vector<2x32xf32>
    %c2_337 = arith.constant 2 : index
    %c96_338 = arith.constant 96 : index
    %219 = vector.load %arg13[%c2_337, %c96_338] : memref<8x288xf32, #tpu.memory_space<vmem>>, vector<2x32xf32>
    tpu.vector_store %arg13[%c2_337, %c96_338], %218 {strides = array<i32>} : memref<8x288xf32, #tpu.memory_space<vmem>>, vector<2x32xf32>,
    %c30_339 = arith.constant 30 : index
    %c0_340 = arith.constant 0 : index
    %220 = tpu.strided_load %arg12[%c30_339, %c0_340] {strides = array<i32: 2, 1>} : memref<50x32xf32, #tpu.memory_space<vmem>>, vector<2x32xf32>
    %c4_341 = arith.constant 4 : index
    %c96_342 = arith.constant 96 : index
    %221 = vector.load %arg13[%c4_341, %c96_342] : memref<8x288xf32, #tpu.memory_space<vmem>>, vector<2x32xf32>
    tpu.vector_store %arg13[%c4_341, %c96_342], %220 {strides = array<i32>} : memref<8x288xf32, #tpu.memory_space<vmem>>, vector<2x32xf32>,
    %c40_343 = arith.constant 40 : index
    %c0_344 = arith.constant 0 : index
    %222 = tpu.strided_load %arg12[%c40_343, %c0_344] {strides = array<i32: 2, 1>} : memref<50x32xf32, #tpu.memory_space<vmem>>, vector<2x32xf32>
    %c6_345 = arith.constant 6 : index
    %c96_346 = arith.constant 96 : index
    %223 = vector.load %arg13[%c6_345, %c96_346] : memref<8x288xf32, #tpu.memory_space<vmem>>, vector<2x32xf32>
    tpu.vector_store %arg13[%c6_345, %c96_346], %222 {strides = array<i32>} : memref<8x288xf32, #tpu.memory_space<vmem>>, vector<2x32xf32>,
    %c6_347 = arith.constant 6 : index
    %c0_348 = arith.constant 0 : index
    %224 = tpu.strided_load %arg12[%c6_347, %c0_348] {strides = array<i32: 2, 1>} : memref<50x32xf32, #tpu.memory_space<vmem>>, vector<2x32xf32>
    %c0_349 = arith.constant 0 : index
    %c128_350 = arith.constant 128 : index
    %225 = vector.load %arg13[%c0_349, %c128_350] : memref<8x288xf32, #tpu.memory_space<vmem>>, vector<2x32xf32>
    tpu.vector_store %arg13[%c0_349, %c128_350], %224 {strides = array<i32>} : memref<8x288xf32, #tpu.memory_space<vmem>>, vector<2x32xf32>,
    %c16 = arith.constant 16 : index
    %c0_351 = arith.constant 0 : index
    %226 = tpu.strided_load %arg12[%c16, %c0_351] {strides = array<i32: 2, 1>} : memref<50x32xf32, #tpu.memory_space<vmem>>, vector<2x32xf32>
    %c2_352 = arith.constant 2 : index
    %c128_353 = arith.constant 128 : index
    %227 = vector.load %arg13[%c2_352, %c128_353] : memref<8x288xf32, #tpu.memory_space<vmem>>, vector<2x32xf32>
    tpu.vector_store %arg13[%c2_352, %c128_353], %226 {strides = array<i32>} : memref<8x288xf32, #tpu.memory_space<vmem>>, vector<2x32xf32>,
    %c31 = arith.constant 31 : index
    %c0_354 = arith.constant 0 : index
    %228 = tpu.strided_load %arg12[%c31, %c0_354] {strides = array<i32: 2, 1>} : memref<50x32xf32, #tpu.memory_space<vmem>>, vector<2x32xf32>
    %c4_355 = arith.constant 4 : index
    %c128_356 = arith.constant 128 : index
    %229 = vector.load %arg13[%c4_355, %c128_356] : memref<8x288xf32, #tpu.memory_space<vmem>>, vector<2x32xf32>
    tpu.vector_store %arg13[%c4_355, %c128_356], %228 {strides = array<i32>} : memref<8x288xf32, #tpu.memory_space<vmem>>, vector<2x32xf32>,
    %c41 = arith.constant 41 : index
    %c0_357 = arith.constant 0 : index
    %230 = tpu.strided_load %arg12[%c41, %c0_357] {strides = array<i32: 2, 1>} : memref<50x32xf32, #tpu.memory_space<vmem>>, vector<2x32xf32>
    %c6_358 = arith.constant 6 : index
    %c128_359 = arith.constant 128 : index
    %231 = vector.load %arg13[%c6_358, %c128_359] : memref<8x288xf32, #tpu.memory_space<vmem>>, vector<2x32xf32>
    tpu.vector_store %arg13[%c6_358, %c128_359], %230 {strides = array<i32>} : memref<8x288xf32, #tpu.memory_space<vmem>>, vector<2x32xf32>,
    %c7 = arith.constant 7 : index
    %c0_360 = arith.constant 0 : index
    %232 = tpu.strided_load %arg12[%c7, %c0_360] {strides = array<i32: 2, 1>} : memref<50x32xf32, #tpu.memory_space<vmem>>, vector<2x32xf32>
    %c0_361 = arith.constant 0 : index
    %c160_362 = arith.constant 160 : index
    %233 = vector.load %arg13[%c0_361, %c160_362] : memref<8x288xf32, #tpu.memory_space<vmem>>, vector<2x32xf32>
    tpu.vector_store %arg13[%c0_361, %c160_362], %232 {strides = array<i32>} : memref<8x288xf32, #tpu.memory_space<vmem>>, vector<2x32xf32>,
    %c17 = arith.constant 17 : index
    %c0_363 = arith.constant 0 : index
    %234 = tpu.strided_load %arg12[%c17, %c0_363] {strides = array<i32: 2, 1>} : memref<50x32xf32, #tpu.memory_space<vmem>>, vector<2x32xf32>
    %c2_364 = arith.constant 2 : index
    %c160_365 = arith.constant 160 : index
    %235 = vector.load %arg13[%c2_364, %c160_365] : memref<8x288xf32, #tpu.memory_space<vmem>>, vector<2x32xf32>
    tpu.vector_store %arg13[%c2_364, %c160_365], %234 {strides = array<i32>} : memref<8x288xf32, #tpu.memory_space<vmem>>, vector<2x32xf32>,
    %c32_366 = arith.constant 32 : index
    %c0_367 = arith.constant 0 : index
    %236 = tpu.strided_load %arg12[%c32_366, %c0_367] {strides = array<i32: 2, 1>} : memref<50x32xf32, #tpu.memory_space<vmem>>, vector<2x32xf32>
    %c4_368 = arith.constant 4 : index
    %c160_369 = arith.constant 160 : index
    %237 = vector.load %arg13[%c4_368, %c160_369] : memref<8x288xf32, #tpu.memory_space<vmem>>, vector<2x32xf32>
    tpu.vector_store %arg13[%c4_368, %c160_369], %236 {strides = array<i32>} : memref<8x288xf32, #tpu.memory_space<vmem>>, vector<2x32xf32>,
    %c42 = arith.constant 42 : index
    %c0_370 = arith.constant 0 : index
    %238 = tpu.strided_load %arg12[%c42, %c0_370] {strides = array<i32: 2, 1>} : memref<50x32xf32, #tpu.memory_space<vmem>>, vector<2x32xf32>
    %c6_371 = arith.constant 6 : index
    %c160_372 = arith.constant 160 : index
    %239 = vector.load %arg13[%c6_371, %c160_372] : memref<8x288xf32, #tpu.memory_space<vmem>>, vector<2x32xf32>
    tpu.vector_store %arg13[%c6_371, %c160_372], %238 {strides = array<i32>} : memref<8x288xf32, #tpu.memory_space<vmem>>, vector<2x32xf32>,
    %c10_373 = arith.constant 10 : index
    %c0_374 = arith.constant 0 : index
    %240 = tpu.strided_load %arg12[%c10_373, %c0_374] {strides = array<i32: 2, 1>} : memref<50x32xf32, #tpu.memory_space<vmem>>, vector<2x32xf32>
    %c0_375 = arith.constant 0 : index
    %c192_376 = arith.constant 192 : index
    %241 = vector.load %arg13[%c0_375, %c192_376] : memref<8x288xf32, #tpu.memory_space<vmem>>, vector<2x32xf32>
    tpu.vector_store %arg13[%c0_375, %c192_376], %240 {strides = array<i32>} : memref<8x288xf32, #tpu.memory_space<vmem>>, vector<2x32xf32>,
    %c20_377 = arith.constant 20 : index
    %c0_378 = arith.constant 0 : index
    %242 = tpu.strided_load %arg12[%c20_377, %c0_378] {strides = array<i32: 2, 1>} : memref<50x32xf32, #tpu.memory_space<vmem>>, vector<2x32xf32>
    %c2_379 = arith.constant 2 : index
    %c192_380 = arith.constant 192 : index
    %243 = vector.load %arg13[%c2_379, %c192_380] : memref<8x288xf32, #tpu.memory_space<vmem>>, vector<2x32xf32>
    tpu.vector_store %arg13[%c2_379, %c192_380], %242 {strides = array<i32>} : memref<8x288xf32, #tpu.memory_space<vmem>>, vector<2x32xf32>,
    %c35_381 = arith.constant 35 : index
    %c0_382 = arith.constant 0 : index
    %244 = tpu.strided_load %arg12[%c35_381, %c0_382] {strides = array<i32: 2, 1>} : memref<50x32xf32, #tpu.memory_space<vmem>>, vector<2x32xf32>
    %c4_383 = arith.constant 4 : index
    %c192_384 = arith.constant 192 : index
    %245 = vector.load %arg13[%c4_383, %c192_384] : memref<8x288xf32, #tpu.memory_space<vmem>>, vector<2x32xf32>
    tpu.vector_store %arg13[%c4_383, %c192_384], %244 {strides = array<i32>} : memref<8x288xf32, #tpu.memory_space<vmem>>, vector<2x32xf32>,
    %c45_385 = arith.constant 45 : index
    %c0_386 = arith.constant 0 : index
    %246 = tpu.strided_load %arg12[%c45_385, %c0_386] {strides = array<i32: 2, 1>} : memref<50x32xf32, #tpu.memory_space<vmem>>, vector<2x32xf32>
    %c6_387 = arith.constant 6 : index
    %c192_388 = arith.constant 192 : index
    %247 = vector.load %arg13[%c6_387, %c192_388] : memref<8x288xf32, #tpu.memory_space<vmem>>, vector<2x32xf32>
    tpu.vector_store %arg13[%c6_387, %c192_388], %246 {strides = array<i32>} : memref<8x288xf32, #tpu.memory_space<vmem>>, vector<2x32xf32>,
    %c11_389 = arith.constant 11 : index
    %c0_390 = arith.constant 0 : index
    %248 = tpu.strided_load %arg12[%c11_389, %c0_390] {strides = array<i32: 2, 1>} : memref<50x32xf32, #tpu.memory_space<vmem>>, vector<2x32xf32>
    %c0_391 = arith.constant 0 : index
    %c224_392 = arith.constant 224 : index
    %249 = vector.load %arg13[%c0_391, %c224_392] : memref<8x288xf32, #tpu.memory_space<vmem>>, vector<2x32xf32>
    tpu.vector_store %arg13[%c0_391, %c224_392], %248 {strides = array<i32>} : memref<8x288xf32, #tpu.memory_space<vmem>>, vector<2x32xf32>,
    %c21 = arith.constant 21 : index
    %c0_393 = arith.constant 0 : index
    %250 = tpu.strided_load %arg12[%c21, %c0_393] {strides = array<i32: 2, 1>} : memref<50x32xf32, #tpu.memory_space<vmem>>, vector<2x32xf32>
    %c2_394 = arith.constant 2 : index
    %c224_395 = arith.constant 224 : index
    %251 = vector.load %arg13[%c2_394, %c224_395] : memref<8x288xf32, #tpu.memory_space<vmem>>, vector<2x32xf32>
    tpu.vector_store %arg13[%c2_394, %c224_395], %250 {strides = array<i32>} : memref<8x288xf32, #tpu.memory_space<vmem>>, vector<2x32xf32>,
    %c36_396 = arith.constant 36 : index
    %c0_397 = arith.constant 0 : index
    %252 = tpu.strided_load %arg12[%c36_396, %c0_397] {strides = array<i32: 2, 1>} : memref<50x32xf32, #tpu.memory_space<vmem>>, vector<2x32xf32>
    %c4_398 = arith.constant 4 : index
    %c224_399 = arith.constant 224 : index
    %253 = vector.load %arg13[%c4_398, %c224_399] : memref<8x288xf32, #tpu.memory_space<vmem>>, vector<2x32xf32>
    tpu.vector_store %arg13[%c4_398, %c224_399], %252 {strides = array<i32>} : memref<8x288xf32, #tpu.memory_space<vmem>>, vector<2x32xf32>,
    %c46_400 = arith.constant 46 : index
    %c0_401 = arith.constant 0 : index
    %254 = tpu.strided_load %arg12[%c46_400, %c0_401] {strides = array<i32: 2, 1>} : memref<50x32xf32, #tpu.memory_space<vmem>>, vector<2x32xf32>
    %c6_402 = arith.constant 6 : index
    %c224_403 = arith.constant 224 : index
    %255 = vector.load %arg13[%c6_402, %c224_403] : memref<8x288xf32, #tpu.memory_space<vmem>>, vector<2x32xf32>
    tpu.vector_store %arg13[%c6_402, %c224_403], %254 {strides = array<i32>} : memref<8x288xf32, #tpu.memory_space<vmem>>, vector<2x32xf32>,
    %c12_404 = arith.constant 12 : index
    %c0_405 = arith.constant 0 : index
    %256 = tpu.strided_load %arg12[%c12_404, %c0_405] {strides = array<i32: 2, 1>} : memref<50x32xf32, #tpu.memory_space<vmem>>, vector<2x32xf32>
    %c0_406 = arith.constant 0 : index
    %c256_407 = arith.constant 256 : index
    %257 = vector.load %arg13[%c0_406, %c256_407] : memref<8x288xf32, #tpu.memory_space<vmem>>, vector<2x32xf32>
    tpu.vector_store %arg13[%c0_406, %c256_407], %256 {strides = array<i32>} : memref<8x288xf32, #tpu.memory_space<vmem>>, vector<2x32xf32>,
    %c22_408 = arith.constant 22 : index
    %c0_409 = arith.constant 0 : index
    %258 = tpu.strided_load %arg12[%c22_408, %c0_409] {strides = array<i32: 2, 1>} : memref<50x32xf32, #tpu.memory_space<vmem>>, vector<2x32xf32>
    %c2_410 = arith.constant 2 : index
    %c256_411 = arith.constant 256 : index
    %259 = vector.load %arg13[%c2_410, %c256_411] : memref<8x288xf32, #tpu.memory_space<vmem>>, vector<2x32xf32>
    tpu.vector_store %arg13[%c2_410, %c256_411], %258 {strides = array<i32>} : memref<8x288xf32, #tpu.memory_space<vmem>>, vector<2x32xf32>,
    %c37_412 = arith.constant 37 : index
    %c0_413 = arith.constant 0 : index
    %260 = tpu.strided_load %arg12[%c37_412, %c0_413] {strides = array<i32: 2, 1>} : memref<50x32xf32, #tpu.memory_space<vmem>>, vector<2x32xf32>
    %c4_414 = arith.constant 4 : index
    %c256_415 = arith.constant 256 : index
    %261 = vector.load %arg13[%c4_414, %c256_415] : memref<8x288xf32, #tpu.memory_space<vmem>>, vector<2x32xf32>
    tpu.vector_store %arg13[%c4_414, %c256_415], %260 {strides = array<i32>} : memref<8x288xf32, #tpu.memory_space<vmem>>, vector<2x32xf32>,
    %c47 = arith.constant 47 : index
    %c0_416 = arith.constant 0 : index
    %262 = tpu.strided_load %arg12[%c47, %c0_416] {strides = array<i32: 2, 1>} : memref<50x32xf32, #tpu.memory_space<vmem>>, vector<2x32xf32>
    %c6_417 = arith.constant 6 : index
    %c256_418 = arith.constant 256 : index
    %263 = vector.load %arg13[%c6_417, %c256_418] : memref<8x288xf32, #tpu.memory_space<vmem>>, vector<2x32xf32>
    tpu.vector_store %arg13[%c6_417, %c256_418], %262 {strides = array<i32>} : memref<8x288xf32, #tpu.memory_space<vmem>>, vector<2x32xf32>,
    %c0_419 = arith.constant 0 : index
    %c0_420 = arith.constant 0 : index
    %264 = vector.load %arg13[%c0_419, %c0_420] : memref<8x288xf32, #tpu.memory_space<vmem>>, vector<8x288xf32>
    %c0_421 = arith.constant 0 : index
    %c0_422 = arith.constant 0 : index
    %265 = vector.load %arg4[%c0_421, %c0_422] : memref<288x32xf32, #tpu.memory_space<vmem>>, vector<288x32xf32>
    %cst_423 = arith.constant dense<0.000000e+00> : vector<8x32xf32>
    %266 = tpu.matmul %264, %265, %cst_423 {dimension_numbers = #tpu.dot_dimension_numbers<[1], [0], [0], [1], [0, 0, 1, 1], [], []>} : vector<8x288xf32>, vector<288x32xf32>, vector<8x32xf32> -> vector<8x32xf32>
    %c0_424 = arith.constant 0 : index
    %c0_425 = arith.constant 0 : index
    %267 = vector.load %arg5[%c0_424, %c0_425] : memref<1x32xf32, #tpu.memory_space<vmem>>, vector<1x32xf32>
    %268 = vector.broadcast %267 : vector<1x32xf32> to vector<8x32xf32>
    %269 = arith.addf %266, %268 : vector<8x32xf32>
    %cst_426 = arith.constant 0.000000e+00 : f32
    %270 = vector.broadcast %cst_426 : f32 to vector<8x32xf32>
    %271 = arith.cmpf ogt, %269, %270 : vector<8x32xf32>
    %cst_427 = arith.constant 1.000000e-01 : f32
    %272 = vector.broadcast %cst_427 : f32 to vector<8x32xf32>
    %273 = arith.mulf %272, %269 : vector<8x32xf32>
    %274 = arith.select %271, %269, %273 : vector<8x32xi1>, vector<8x32xf32>
    %275 = vector.extract_strided_slice %274 {offsets = [0, 0], sizes = [4, 32], strides = [1, 1]} : vector<8x32xf32> to vector<4x32xf32>
    %cst_428 = arith.constant dense<0.000000e+00> : vector<32xf32>
    %276 = vector.multi_reduction <add>, %275, %cst_428 [0] : vector<4x32xf32> to vector<32xf32>
    %277 = vector.shape_cast %276 : vector<32xf32> to vector<1x32xf32>
    %cst_429 = arith.constant 4.000000e+00 : f32
    %278 = vector.broadcast %cst_429 : f32 to vector<1x32xf32>
    %279 = arith.divf %277, %278 : vector<1x32xf32>
    %c0_430 = arith.constant 0 : index
    %c0_431 = arith.constant 0 : index
    %280 = vector.load %arg8[%c0_430, %c0_431] : memref<2x32xf32, #tpu.memory_space<vmem>>, vector<1x32xf32>
    tpu.vector_store %arg8[%c0_430, %c0_431], %279 {strides = array<i32>} : memref<2x32xf32, #tpu.memory_space<vmem>>, vector<1x32xf32>,
    %281 = vector.extract_strided_slice %274 {offsets = [4, 0], sizes = [4, 32], strides = [1, 1]} : vector<8x32xf32> to vector<4x32xf32>
    %cst_432 = arith.constant dense<0.000000e+00> : vector<32xf32>
    %282 = vector.multi_reduction <add>, %281, %cst_432 [0] : vector<4x32xf32> to vector<32xf32>
    %283 = vector.shape_cast %282 : vector<32xf32> to vector<1x32xf32>
    %cst_433 = arith.constant 4.000000e+00 : f32
    %284 = vector.broadcast %cst_433 : f32 to vector<1x32xf32>
    %285 = arith.divf %283, %284 : vector<1x32xf32>
    %c1_434 = arith.constant 1 : index
    %c0_435 = arith.constant 0 : index
    %286 = vector.load %arg8[%c1_434, %c0_435] : memref<2x32xf32, #tpu.memory_space<vmem>>, vector<1x32xf32>
    tpu.vector_store %arg8[%c1_434, %c0_435], %285 {strides = array<i32>} : memref<2x32xf32, #tpu.memory_space<vmem>>, vector<1x32xf32>,
    %c0_436 = arith.constant 0 : index
    %c0_437 = arith.constant 0 : index
    %287 = vector.load %arg8[%c0_436, %c0_437] : memref<2x32xf32, #tpu.memory_space<vmem>>, vector<2x32xf32>
    %c0_438 = arith.constant 0 : index
    %c0_439 = arith.constant 0 : index
    %288 = vector.load %arg6[%c0_438, %c0_439] : memref<32x3xf32, #tpu.memory_space<vmem>>, vector<32x3xf32>
    %cst_440 = arith.constant dense<0.000000e+00> : vector<2x3xf32>
    %289 = tpu.matmul %287, %288, %cst_440 {dimension_numbers = #tpu.dot_dimension_numbers<[1], [0], [0], [1], [0, 0, 1, 1], [], []>} : vector<2x32xf32>, vector<32x3xf32>, vector<2x3xf32> -> vector<2x3xf32>
    %c0_441 = arith.constant 0 : index
    %c0_442 = arith.constant 0 : index
    %290 = vector.load %arg7[%c0_441, %c0_442] : memref<1x3xf32, #tpu.memory_space<vmem>>, vector<1x3xf32>
    %291 = vector.broadcast %290 : vector<1x3xf32> to vector<2x3xf32>
    %292 = arith.addf %289, %291 : vector<2x3xf32>
    %c0_443 = arith.constant 0 : index
    %c0_444 = arith.constant 0 : index
    %293 = vector.load %arg9[%c0_443, %c0_444] : memref<2x3xf32, #tpu.memory_space<vmem>>, vector<2x3xf32>
    tpu.vector_store %arg9[%c0_443, %c0_444], %292 {strides = array<i32>} : memref<2x3xf32, #tpu.memory_space<vmem>>, vector<2x3xf32>,
    %cst_445 = arith.constant dense<0xFF800000> : vector<2xf32>
    %294 = vector.multi_reduction <maximumf>, %292, %cst_445 [1] : vector<2x3xf32> to vector<2xf32>
    %295 = vector.shape_cast %294 : vector<2xf32> to vector<2x1xf32>
    %296 = tpu.iota {dimensions = array<i32: 1>} : vector<2x3xi32>
    %297 = vector.broadcast %295 : vector<2x1xf32> to vector<2x3xf32>
    %298 = arith.cmpf oge, %292, %297 : vector<2x3xf32>
    %c3_i32 = arith.constant 3 : i32
    %299 = vector.broadcast %c3_i32 : i32 to vector<2x3xi32>
    %300 = arith.select %298, %296, %299 : vector<2x3xi1>, vector<2x3xi32>
    %cst_446 = arith.constant dense<2147483647> : vector<2xi32>
    %301 = vector.multi_reduction <minsi>, %300, %cst_446 [1] : vector<2x3xi32> to vector<2xi32>
    %302 = vector.shape_cast %301 : vector<2xi32> to vector<2x1xi32>
    %c0_447 = arith.constant 0 : index
    %c0_448 = arith.constant 0 : index
    %303 = vector.load %arg10[%c0_447, %c0_448] : memref<2x1xi32, #tpu.memory_space<vmem>>, vector<2x1xi32>
    tpu.vector_store %arg10[%c0_447, %c0_448], %302 {strides = array<i32>} : memref<2x1xi32, #tpu.memory_space<vmem>>, vector<2x1xi32>,
    return
  }
  func.func @transform_0(%arg0: i32) -> (i32, i32) {
    %c0_i32 = arith.constant 0 : i32
    %c0_i32_0 = arith.constant 0 : i32
    %c0_i32_1 = arith.constant 0 : i32
    return %c0_i32, %c0_i32_0 : i32, i32
  }
  func.func @transform_1(%arg0: i32) -> (i32, i32) {
    %c0_i32 = arith.constant 0 : i32
    %c0_i32_0 = arith.constant 0 : i32
    %c0_i32_1 = arith.constant 0 : i32
    return %c0_i32, %c0_i32_0 : i32, i32
  }
  func.func @transform_2(%arg0: i32) -> (i32, i32) {
    %c0_i32 = arith.constant 0 : i32
    %c0_i32_0 = arith.constant 0 : i32
    %c0_i32_1 = arith.constant 0 : i32
    return %c0_i32, %c0_i32_0 : i32, i32
  }
  func.func @transform_3(%arg0: i32) -> (i32, i32) {
    %c0_i32 = arith.constant 0 : i32
    %c0_i32_0 = arith.constant 0 : i32
    %c0_i32_1 = arith.constant 0 : i32
    return %c0_i32, %c0_i32_0 : i32, i32
  }
  func.func @transform_4(%arg0: i32) -> (i32, i32) {
    %c0_i32 = arith.constant 0 : i32
    %c0_i32_0 = arith.constant 0 : i32
    %c0_i32_1 = arith.constant 0 : i32
    return %c0_i32, %c0_i32_0 : i32, i32
  }
  func.func @transform_5(%arg0: i32) -> (i32, i32) {
    %c0_i32 = arith.constant 0 : i32
    %c0_i32_0 = arith.constant 0 : i32
    %c0_i32_1 = arith.constant 0 : i32
    return %c0_i32, %c0_i32_0 : i32, i32
  }
  func.func @transform_6(%arg0: i32) -> (i32, i32) {
    %c0_i32 = arith.constant 0 : i32
    %c0_i32_0 = arith.constant 0 : i32
    %c0_i32_1 = arith.constant 0 : i32
    return %c0_i32, %c0_i32_0 : i32, i32
  }
  func.func @transform_7(%arg0: i32) -> (i32, i32) {
    %c0_i32 = arith.constant 0 : i32
    %c0_i32_0 = arith.constant 0 : i32
    %c0_i32_1 = arith.constant 0 : i32
    return %c0_i32, %c0_i32_0 : i32, i32
  }
  func.func @transform_8(%arg0: i32) -> (i32, i32) {
    %c0_i32 = arith.constant 0 : i32
    %c0_i32_0 = arith.constant 0 : i32
    %c0_i32_1 = arith.constant 0 : i32
    return %c0_i32, %c0_i32_0 : i32, i32
  }
  func.func @transform_9(%arg0: i32) -> (i32, i32) {
    %c0_i32 = arith.constant 0 : i32
    %c0_i32_0 = arith.constant 0 : i32
    %c0_i32_1 = arith.constant 0 : i32
    return %c0_i32, %c0_i32_0 : i32, i32
  }
}

</mosaic_0001>

<llo_original>
// kernel: my_model_forward.1
$region0: #{my_model_forward.1}
  #allocation0 [shape = 'u32[]', space=smem, size = 0x4, offset = 0x4, fixed_abs, tag = 'smem constant byte address 0x4 - core index']
  #allocation1 [shape = 'u32[144,128]{1,0:T(1,128)}', space=vmem, size = 0x12000, scoped, tag = 'internal scratch']
  #allocation2 [shape = 'f32[50,288]{1,0:T(8,128)}', space=vmem, size = 0x15000, scoped, tag = 'scratch operand']
  #allocation3 [shape = 'f32[50,32]{1,0:T(8,128)}', space=vmem, size = 0x7000, scoped, tag = 'scratch operand']
  #allocation4 [shape = 'f32[8,288]{1,0:T(8,128)}', space=vmem, size = 0x3000, scoped, tag = 'scratch operand']
  %s0 = inlined_call_operand.vmem [shape: f32[242,32], index: 0, kind: input, shape index: {}]
  %s1 = inlined_call_operand.vmem [shape: f32[288,32], index: 1, kind: input, shape index: {}]
  %s2 = inlined_call_operand.vmem [shape: f32[1,32], index: 2, kind: input, shape index: {}]
  %s3 = inlined_call_operand.vmem [shape: f32[288,32], index: 3, kind: input, shape index: {}]
  %s4 = inlined_call_operand.vmem [shape: f32[1,32], index: 4, kind: input, shape index: {}]
  %s5 = inlined_call_operand.vmem [shape: f32[32,3], index: 5, kind: input, shape index: {}]
  %s6 = inlined_call_operand.vmem [shape: f32[1,3], index: 6, kind: input, shape index: {}]
  %s7 = inlined_call_operand.hbm [shape: f32[2,32], index: 7, kind: output, shape index: {0}]
  %s8 = inlined_call_operand.hbm [shape: f32[2,3], index: 8, kind: output, shape index: {1}]
  %s9 = inlined_call_operand.vmem [shape: s32[2,1], index: 9, kind: output, shape index: {2}]
  %10 = xla_tuple %s7, %s8, %s9
  %s11 = sld [smem:[#allocation0]]
  $region54: #{my_model_forward.1} parent=0
    _
  %s13 = ssub.s32 1, %s11
  %s14 = scalar_select 0, %s13, %s11
  $region1: #{my_model_forward.1} parent=0
    #allocation5 [shape = 'u8[1024]{0}', space=vmem, size = 0x400, scoped, tag = 'output window, operand 0, single buffered']
    #allocation6 [shape = 's32[1]{0}', space=sflag, size = 0x4, scoped, tag = 'scoped memory for my_model_forward.1']
    #allocation7 [shape = 'u8[1024]{0}', space=vmem, size = 0x400, scoped, tag = 'output window, operand 1, single buffered']
    #allocation8 [shape = 's32[1]{0}', space=sflag, size = 0x4, scoped, tag = 'scoped memory for my_model_forward.1']
    %15 = vsyncpa [#allocation6], 0
    %16 = vsyncpa [#allocation8], 0
    // Predicated region
    $region2: #{my_model_forward.1} parent=1 // pred_check
      _
    $region3: #{my_model_forward.1} parent=1 // pred_check_branch
      %18 = sbr.rel (0) target = $region5
    $region4: #{my_model_forward.1} parent=1 // pred_region
      _
    $region5: #{my_model_forward.1} parent=1 // pred_fallthru
      _
    // Predicated region
    $region6: #{my_model_forward.1} parent=1 // pred_check
      _
    $region7: #{my_model_forward.1} parent=1 // pred_check_branch
      %20 = sbr.rel (0) target = $region9
    $region8: #{my_model_forward.1} parent=1 // pred_region
      _
    $region9: #{my_model_forward.1} parent=1 // pred_fallthru
      _
    // Predicated region
    $region10: #{my_model_forward.1} parent=1 // pred_check
      _
    $region11: #{my_model_forward.1} parent=1 // pred_check_branch
      %22 = sbr.rel (0) target = $region13
    $region12: #{my_model_forward.1} parent=1 // pred_region
      _
    $region13: #{my_model_forward.1} parent=1 // pred_fallthru
      _
    // Predicated region
    $region14: #{my_model_forward.1} parent=1 // pred_check
      _
    $region15: #{my_model_forward.1} parent=1 // pred_check_branch
      %24 = sbr.rel (0) target = $region17
    $region16: #{my_model_forward.1} parent=1 // pred_region
      _
    $region17: #{my_model_forward.1} parent=1 // pred_fallthru
      _
    // Predicated region
    $region18: #{my_model_forward.1} parent=1 // pred_check
      _
    $region19: #{my_model_forward.1} parent=1 // pred_check_branch
      %26 = sbr.rel (0) target = $region21
    $region20: #{my_model_forward.1} parent=1 // pred_region
      _
    $region21: #{my_model_forward.1} parent=1 // pred_fallthru
      _
    // Predicated region
    $region22: #{my_model_forward.1} parent=1 // pred_check
      _
    $region23: #{my_model_forward.1} parent=1 // pred_check_branch
      %28 = sbr.rel (0) target = $region25
    $region24: #{my_model_forward.1} parent=1 // pred_region
      _
    $region25: #{my_model_forward.1} parent=1 // pred_fallthru
      _
    // Predicated region
    $region26: #{my_model_forward.1} parent=1 // pred_check
      _
    $region27: #{my_model_forward.1} parent=1 // pred_check_branch
      %30 = sbr.rel (0) target = $region29
    $region28: #{my_model_forward.1} parent=1 // pred_region
      _
    $region29: #{my_model_forward.1} parent=1 // pred_fallthru
      _
    %v31 = vld [vmem:[%s0] ss:$2 sm:$0x1f]
    %vm32 = vcmask 258048
    %33 = vst.msk [vmem:[#allocation2] sm:$0x1f] %vm32, %v31
    %s34 = scalar_lea.vmem %s0, 22
    %v35 = vld [vmem:[%s34] ss:$2 sm:$0x1f]
    %v37 = vrot.slane %v35, 3
    %vm39 = vcmask 261125
    %40 = vst.msk [vmem:[#allocation2] sm:$0xe0] %vm39, %v37
    %vm41 = vcmask 254976
    %42 = vst.msk [vmem:[#allocation2 + $0x18] sm:$0x3] %vm41, %v37
    %s43 = scalar_lea.vmem %s0, 44
    %v44 = vld [vmem:[%s43] ss:$2 sm:$0x1f]
    %v46 = vrot.slane %v44, 6
    %vm48 = vcmask 260098
    %49 = vst.msk [vmem:[#allocation2 + $0x18] sm:$0x7c] %vm48, %v46
    %s50 = scalar_lea.vmem %s0, 66
    %v51 = vld [vmem:[%s50] ss:$2 sm:$0x1f]
    %v53 = vrot.slane %v51, 1
    %vm55 = vcmask 261127
    %56 = vst.msk [vmem:[#allocation2 + $0x18] sm:$0x80] %vm55, %v53
    %vm57 = vcmask 257024
    %58 = vst.msk [vmem:[#allocation2 + $0x30] sm:$0xf] %vm57, %v53
    %s59 = scalar_lea.vmem %s0, 88
    %v60 = vld [vmem:[%s59] ss:$2 sm:$0x1f]
    %v62 = vrot.slane %v60, 4
    %vm64 = vcmask 261124
    %65 = vst.msk [vmem:[#allocation2 + $0x30] sm:$0xf0] %vm64, %v62
    %vm66 = vcmask 253952
    %67 = vst.msk [vmem:[#allocation2 + $0x48] sm:$0x1] %vm66, %v62
    %s68 = scalar_lea.vmem %s0, 121
    %v69 = vld [vmem:[%s68] ss:$2 sm:$0x1f]
    %v71 = vrot.slane %v69, 7
    %vm73 = vcmask 259073
    %74 = vst.msk [vmem:[#allocation2 + $0x48] sm:$0x3e] %vm73, %v71
    %s75 = scalar_lea.vmem %s0, 143
    %v76 = vld [vmem:[%s75] ss:$2 sm:$0x1f]
    %v78 = vrot.slane %v76, 2
    %vm80 = vcmask 261126
    %81 = vst.msk [vmem:[#allocation2 + $0x48] sm:$0xc0] %vm80, %v78
    %vm82 = vcmask 256000
    %83 = vst.msk [vmem:[#allocation2 + $0x60] sm:$0x7] %vm82, %v78
    %s84 = scalar_lea.vmem %s0, 165
    %v85 = vld [vmem:[%s84] ss:$2 sm:$0x1f]
    %v87 = vrot.slane %v85, 5
    %vm89 = vcmask 261123
    %90 = vst.msk [vmem:[#allocation2 + $0x60] sm:$0xf8] %vm89, %v87
    %s91 = scalar_lea.vmem %s0, 187
    %v92 = vld [vmem:[%s91] ss:$2 sm:$0x1f]
    %93 = vst.msk [vmem:[#allocation2 + $0x78] sm:$0x1f] %vm32, %v92
    %s94 = scalar_lea.vmem %s0, 209
    %v95 = vld [vmem:[%s94] ss:$2 sm:$0x1f]
    %v97 = vrot.slane %v95, 3
    %99 = vst.msk [vmem:[#allocation2 + $0x78] sm:$0xe0] %vm39, %v97
    %100 = vst.msk [vmem:[#allocation2 + $0x90] sm:$0x3] %vm41, %v97
    %s101 = scalar_lea.vmem %s0, 1
    %v102 = vld [vmem:[%s101] ss:$2 sm:$0x1f]
    %104 = vrot.lane.b32.xlu0 %v102, 32
    %v105 = vpop.permute.xlu0 %104
    %vm107 = vcmask 520448
    %108 = vst.msk [vmem:[#allocation2] sm:$0x1f] %vm107, %v105
    %s109 = scalar_lea.vmem %s0, 23
    %v110 = vld [vmem:[%s109] ss:$2 sm:$0x1f]
    %v112 = vrot.slane %v110, 3
    %113 = vrot.lane.b32.xlu0 %v112, 32
    %v114 = vpop.permute.xlu0 %113
    %vm116 = vcmask 523525
    %117 = vst.msk [vmem:[#allocation2] sm:$0xe0] %vm116, %v114
    %vm118 = vcmask 517376
    %119 = vst.msk [vmem:[#allocation2 + $0x18] sm:$0x3] %vm118, %v114
    %s120 = scalar_lea.vmem %s0, 45
    %v121 = vld [vmem:[%s120] ss:$2 sm:$0x1f]
    %v123 = vrot.slane %v121, 6
    %124 = vrot.lane.b32.xlu0 %v123, 32
    %v125 = vpop.permute.xlu0 %124
    %vm127 = vcmask 522498
    %128 = vst.msk [vmem:[#allocation2 + $0x18] sm:$0x7c] %vm127, %v125
    %s129 = scalar_lea.vmem %s0, 67
    %v130 = vld [vmem:[%s129] ss:$2 sm:$0x1f]
    %v132 = vrot.slane %v130, 1
    %133 = vrot.lane.b32.xlu0 %v132, 32
    %v134 = vpop.permute.xlu0 %133
    %vm136 = vcmask 523527
    %137 = vst.msk [vmem:[#allocation2 + $0x18] sm:$0x80] %vm136, %v134
    %vm138 = vcmask 519424
    %139 = vst.msk [vmem:[#allocation2 + $0x30] sm:$0xf] %vm138, %v134
    %s140 = scalar_lea.vmem %s0, 89
    %v141 = vld [vmem:[%s140] ss:$2 sm:$0x1f]
    %v143 = vrot.slane %v141, 4
    %144 = vrot.lane.b32.xlu0 %v143, 32
    %v145 = vpop.permute.xlu0 %144
    %vm147 = vcmask 523524
    %148 = vst.msk [vmem:[#allocation2 + $0x30] sm:$0xf0] %vm147, %v145
    %vm149 = vcmask 516352
    %150 = vst.msk [vmem:[#allocation2 + $0x48] sm:$0x1] %vm149, %v145
    %s151 = scalar_lea.vmem %s0, 122
    %v152 = vld [vmem:[%s151] ss:$2 sm:$0x1f]
    %v154 = vrot.slane %v152, 7
    %155 = vrot.lane.b32.xlu0 %v154, 32
    %v156 = vpop.permute.xlu0 %155
    %vm158 = vcmask 521473
    %159 = vst.msk [vmem:[#allocation2 + $0x48] sm:$0x3e] %vm158, %v156
    %s160 = scalar_lea.vmem %s0, 144
    %v161 = vld [vmem:[%s160] ss:$2 sm:$0x1f]
    %v163 = vrot.slane %v161, 2
    %164 = vrot.lane.b32.xlu0 %v163, 32
    %v165 = vpop.permute.xlu0 %164
    %vm167 = vcmask 523526
    %168 = vst.msk [vmem:[#allocation2 + $0x48] sm:$0xc0] %vm167, %v165
    %vm169 = vcmask 518400
    %170 = vst.msk [vmem:[#allocation2 + $0x60] sm:$0x7] %vm169, %v165
    %s171 = scalar_lea.vmem %s0, 166
    %v172 = vld [vmem:[%s171] ss:$2 sm:$0x1f]
    %v174 = vrot.slane %v172, 5
    %175 = vrot.lane.b32.xlu0 %v174, 32
    %v176 = vpop.permute.xlu0 %175
    %vm178 = vcmask 523523
    %179 = vst.msk [vmem:[#allocation2 + $0x60] sm:$0xf8] %vm178, %v176
    %s180 = scalar_lea.vmem %s0, 188
    %v181 = vld [vmem:[%s180] ss:$2 sm:$0x1f]
    %183 = vrot.lane.b32.xlu0 %v181, 32
    %v184 = vpop.permute.xlu0 %183
    %186 = vst.msk [vmem:[#allocation2 + $0x78] sm:$0x1f] %vm107, %v184
    %s187 = scalar_lea.vmem %s0, 210
    %v188 = vld [vmem:[%s187] ss:$2 sm:$0x1f]
    %v190 = vrot.slane %v188, 3
    %191 = vrot.lane.b32.xlu0 %v190, 32
    %v192 = vpop.permute.xlu0 %191
    %194 = vst.msk [vmem:[#allocation2 + $0x78] sm:$0xe0] %vm116, %v192
    %195 = vst.msk [vmem:[#allocation2 + $0x90] sm:$0x3] %vm118, %v192
    %s196 = scalar_lea.vmem %s0, 2
    %v197 = vld [vmem:[%s196] ss:$2 sm:$0x1f]
    %199 = vrot.lane.b32.xlu0 %v197, 64
    %v200 = vpop.permute.xlu0 %199
    %vm202 = vcmask 782848
    %203 = vst.msk [vmem:[#allocation2] sm:$0x1f] %vm202, %v200
    %s204 = scalar_lea.vmem %s0, 24
    %v205 = vld [vmem:[%s204] ss:$2 sm:$0x1f]
    %v207 = vrot.slane %v205, 3
    %208 = vrot.lane.b32.xlu0 %v207, 64
    %v209 = vpop.permute.xlu0 %208
    %vm211 = vcmask 785925
    %212 = vst.msk [vmem:[#allocation2] sm:$0xe0] %vm211, %v209
    %vm213 = vcmask 779776
    %214 = vst.msk [vmem:[#allocation2 + $0x18] sm:$0x3] %vm213, %v209
    %s215 = scalar_lea.vmem %s0, 46
    %v216 = vld [vmem:[%s215] ss:$2 sm:$0x1f]
    %v218 = vrot.slane %v216, 6
    %219 = vrot.lane.b32.xlu0 %v218, 64
    %v220 = vpop.permute.xlu0 %219
    %vm222 = vcmask 784898
    %223 = vst.msk [vmem:[#allocation2 + $0x18] sm:$0x7c] %vm222, %v220
    %s224 = scalar_lea.vmem %s0, 68
    %v225 = vld [vmem:[%s224] ss:$2 sm:$0x1f]
    %v227 = vrot.slane %v225, 1
    %228 = vrot.lane.b32.xlu0 %v227, 64
    %v229 = vpop.permute.xlu0 %228
    %vm231 = vcmask 785927
    %232 = vst.msk [vmem:[#allocation2 + $0x18] sm:$0x80] %vm231, %v229
    %vm233 = vcmask 781824
    %234 = vst.msk [vmem:[#allocation2 + $0x30] sm:$0xf] %vm233, %v229
    %s235 = scalar_lea.vmem %s0, 90
    %v236 = vld [vmem:[%s235] ss:$2 sm:$0x1f]
    %v238 = vrot.slane %v236, 4
    %239 = vrot.lane.b32.xlu0 %v238, 64
    %v240 = vpop.permute.xlu0 %239
    %vm242 = vcmask 785924
    %243 = vst.msk [vmem:[#allocation2 + $0x30] sm:$0xf0] %vm242, %v240
    %vm244 = vcmask 778752
    %245 = vst.msk [vmem:[#allocation2 + $0x48] sm:$0x1] %vm244, %v240
    %s246 = scalar_lea.vmem %s0, 123
    %v247 = vld [vmem:[%s246] ss:$2 sm:$0x1f]
    %v249 = vrot.slane %v247, 7
    %250 = vrot.lane.b32.xlu0 %v249, 64
    %v251 = vpop.permute.xlu0 %250
    %vm253 = vcmask 783873
    %254 = vst.msk [vmem:[#allocation2 + $0x48] sm:$0x3e] %vm253, %v251
    %s255 = scalar_lea.vmem %s0, 145
    %v256 = vld [vmem:[%s255] ss:$2 sm:$0x1f]
    %v258 = vrot.slane %v256, 2
    %259 = vrot.lane.b32.xlu0 %v258, 64
    %v260 = vpop.permute.xlu0 %259
    %vm262 = vcmask 785926
    %263 = vst.msk [vmem:[#allocation2 + $0x48] sm:$0xc0] %vm262, %v260
    %vm264 = vcmask 780800
    %265 = vst.msk [vmem:[#allocation2 + $0x60] sm:$0x7] %vm264, %v260
    %s266 = scalar_lea.vmem %s0, 167
    %v267 = vld [vmem:[%s266] ss:$2 sm:$0x1f]
    %v269 = vrot.slane %v267, 5
    %270 = vrot.lane.b32.xlu0 %v269, 64
    %v271 = vpop.permute.xlu0 %270
    %vm273 = vcmask 785923
    %274 = vst.msk [vmem:[#allocation2 + $0x60] sm:$0xf8] %vm273, %v271
    %s275 = scalar_lea.vmem %s0, 189
    %v276 = vld [vmem:[%s275] ss:$2 sm:$0x1f]
    %278 = vrot.lane.b32.xlu0 %v276, 64
    %v279 = vpop.permute.xlu0 %278
    %281 = vst.msk [vmem:[#allocation2 + $0x78] sm:$0x1f] %vm202, %v279
    %s282 = scalar_lea.vmem %s0, 211
    %v283 = vld [vmem:[%s282] ss:$2 sm:$0x1f]
    %v285 = vrot.slane %v283, 3
    %286 = vrot.lane.b32.xlu0 %v285, 64
    %v287 = vpop.permute.xlu0 %286
    %289 = vst.msk [vmem:[#allocation2 + $0x78] sm:$0xe0] %vm211, %v287
    %290 = vst.msk [vmem:[#allocation2 + $0x90] sm:$0x3] %vm213, %v287
    %s291 = scalar_lea.vmem %s0, 11
    %v292 = vld [vmem:[%s291] ss:$2 sm:$0x1f]
    %294 = vrot.lane.b32.xlu0 %v292, 96
    %v295 = vpop.permute.xlu0 %294
    %vm297 = vcmask 1045248
    %298 = vst.msk [vmem:[#allocation2] sm:$0x1f] %vm297, %v295
    %s299 = scalar_lea.vmem %s0, 33
    %v300 = vld [vmem:[%s299] ss:$2 sm:$0x1f]
    %v302 = vrot.slane %v300, 3
    %303 = vrot.lane.b32.xlu0 %v302, 96
    %v304 = vpop.permute.xlu0 %303
    %vm306 = vcmask 1048325
    %307 = vst.msk [vmem:[#allocation2] sm:$0xe0] %vm306, %v304
    %vm308 = vcmask 1042176
    %309 = vst.msk [vmem:[#allocation2 + $0x18] sm:$0x3] %vm308, %v304
    %s310 = scalar_lea.vmem %s0, 55
    %v311 = vld [vmem:[%s310] ss:$2 sm:$0x1f]
    %v313 = vrot.slane %v311, 6
    %314 = vrot.lane.b32.xlu0 %v313, 96
    %v315 = vpop.permute.xlu0 %314
    %vm317 = vcmask 1047298
    %318 = vst.msk [vmem:[#allocation2 + $0x18] sm:$0x7c] %vm317, %v315
    %s319 = scalar_lea.vmem %s0, 77
    %v320 = vld [vmem:[%s319] ss:$2 sm:$0x1f]
    %v322 = vrot.slane %v320, 1
    %323 = vrot.lane.b32.xlu0 %v322, 96
    %v324 = vpop.permute.xlu0 %323
    %vm326 = vcmask 1048327
    %327 = vst.msk [vmem:[#allocation2 + $0x18] sm:$0x80] %vm326, %v324
    %vm328 = vcmask 1044224
    %329 = vst.msk [vmem:[#allocation2 + $0x30] sm:$0xf] %vm328, %v324
    %s330 = scalar_lea.vmem %s0, 99
    %v331 = vld [vmem:[%s330] ss:$2 sm:$0x1f]
    %v333 = vrot.slane %v331, 4
    %334 = vrot.lane.b32.xlu0 %v333, 96
    %v335 = vpop.permute.xlu0 %334
    %vm337 = vcmask 1048324
    %338 = vst.msk [vmem:[#allocation2 + $0x30] sm:$0xf0] %vm337, %v335
    %vm339 = vcmask 1041152
    %340 = vst.msk [vmem:[#allocation2 + $0x48] sm:$0x1] %vm339, %v335
    %s341 = scalar_lea.vmem %s0, 132
    %v342 = vld [vmem:[%s341] ss:$2 sm:$0x1f]
    %v344 = vrot.slane %v342, 7
    %345 = vrot.lane.b32.xlu0 %v344, 96
    %v346 = vpop.permute.xlu0 %345
    %vm348 = vcmask 1046273
    %349 = vst.msk [vmem:[#allocation2 + $0x48] sm:$0x3e] %vm348, %v346
    %s350 = scalar_lea.vmem %s0, 154
    %v351 = vld [vmem:[%s350] ss:$2 sm:$0x1f]
    %v353 = vrot.slane %v351, 2
    %354 = vrot.lane.b32.xlu0 %v353, 96
    %v355 = vpop.permute.xlu0 %354
    %vm357 = vcmask 1048326
    %358 = vst.msk [vmem:[#allocation2 + $0x48] sm:$0xc0] %vm357, %v355
    %vm359 = vcmask 1043200
    %360 = vst.msk [vmem:[#allocation2 + $0x60] sm:$0x7] %vm359, %v355
    %s361 = scalar_lea.vmem %s0, 176
    %v362 = vld [vmem:[%s361] ss:$2 sm:$0x1f]
    %v364 = vrot.slane %v362, 5
    %365 = vrot.lane.b32.xlu0 %v364, 96
    %v366 = vpop.permute.xlu0 %365
    %vm368 = vcmask 1048323
    %369 = vst.msk [vmem:[#allocation2 + $0x60] sm:$0xf8] %vm368, %v366
    %s370 = scalar_lea.vmem %s0, 198
    %v371 = vld [vmem:[%s370] ss:$2 sm:$0x1f]
    %373 = vrot.lane.b32.xlu0 %v371, 96
    %v374 = vpop.permute.xlu0 %373
    %376 = vst.msk [vmem:[#allocation2 + $0x78] sm:$0x1f] %vm297, %v374
    %s377 = scalar_lea.vmem %s0, 220
    %v378 = vld [vmem:[%s377] ss:$2 sm:$0x1f]
    %v380 = vrot.slane %v378, 3
    %381 = vrot.lane.b32.xlu0 %v380, 96
    %v382 = vpop.permute.xlu0 %381
    %384 = vst.msk [vmem:[#allocation2 + $0x78] sm:$0xe0] %vm306, %v382
    %385 = vst.msk [vmem:[#allocation2 + $0x90] sm:$0x3] %vm308, %v382
    %s386 = scalar_lea.vmem %s0, 12
    %v387 = vld [vmem:[%s386] ss:$2 sm:$0x1f]
    %388 = vst.msk [vmem:[#allocation2 + $0x8] sm:$0x1f] %vm32, %v387
    %s389 = scalar_lea.vmem %s0, 34
    %v390 = vld [vmem:[%s389] ss:$2 sm:$0x1f]
    %v392 = vrot.slane %v390, 3
    %394 = vst.msk [vmem:[#allocation2 + $0x8] sm:$0xe0] %vm39, %v392
    %395 = vst.msk [vmem:[#allocation2 + $0x20] sm:$0x3] %vm41, %v392
    %s396 = scalar_lea.vmem %s0, 56
    %v397 = vld [vmem:[%s396] ss:$2 sm:$0x1f]
    %v399 = vrot.slane %v397, 6
    %401 = vst.msk [vmem:[#allocation2 + $0x20] sm:$0x7c] %vm48, %v399
    %s402 = scalar_lea.vmem %s0, 78
    %v403 = vld [vmem:[%s402] ss:$2 sm:$0x1f]
    %v405 = vrot.slane %v403, 1
    %407 = vst.msk [vmem:[#allocation2 + $0x20] sm:$0x80] %vm55, %v405
    %408 = vst.msk [vmem:[#allocation2 + $0x38] sm:$0xf] %vm57, %v405
    %s409 = scalar_lea.vmem %s0, 100
    %v410 = vld [vmem:[%s409] ss:$2 sm:$0x1f]
    %v412 = vrot.slane %v410, 4
    %414 = vst.msk [vmem:[#allocation2 + $0x38] sm:$0xf0] %vm64, %v412
    %415 = vst.msk [vmem:[#allocation2 + $0x50] sm:$0x1] %vm66, %v412
    %s416 = scalar_lea.vmem %s0, 133
    %v417 = vld [vmem:[%s416] ss:$2 sm:$0x1f]
    %v419 = vrot.slane %v417, 7
    %421 = vst.msk [vmem:[#allocation2 + $0x50] sm:$0x3e] %vm73, %v419
    %s422 = scalar_lea.vmem %s0, 155
    %v423 = vld [vmem:[%s422] ss:$2 sm:$0x1f]
    %v425 = vrot.slane %v423, 2
    %427 = vst.msk [vmem:[#allocation2 + $0x50] sm:$0xc0] %vm80, %v425
    %428 = vst.msk [vmem:[#allocation2 + $0x68] sm:$0x7] %vm82, %v425
    %s429 = scalar_lea.vmem %s0, 177
    %v430 = vld [vmem:[%s429] ss:$2 sm:$0x1f]
    %v432 = vrot.slane %v430, 5
    %434 = vst.msk [vmem:[#allocation2 + $0x68] sm:$0xf8] %vm89, %v432
    %s435 = scalar_lea.vmem %s0, 199
    %v436 = vld [vmem:[%s435] ss:$2 sm:$0x1f]
    %437 = vst.msk [vmem:[#allocation2 + $0x80] sm:$0x1f] %vm32, %v436
    %s438 = scalar_lea.vmem %s0, 221
    %v439 = vld [vmem:[%s438] ss:$2 sm:$0x1f]
    %v441 = vrot.slane %v439, 3
    %443 = vst.msk [vmem:[#allocation2 + $0x80] sm:$0xe0] %vm39, %v441
    %444 = vst.msk [vmem:[#allocation2 + $0x98] sm:$0x3] %vm41, %v441
    %s445 = scalar_lea.vmem %s0, 13
    %v446 = vld [vmem:[%s445] ss:$2 sm:$0x1f]
    %448 = vrot.lane.b32.xlu0 %v446, 32
    %v449 = vpop.permute.xlu0 %448
    %451 = vst.msk [vmem:[#allocation2 + $0x8] sm:$0x1f] %vm107, %v449
    %s452 = scalar_lea.vmem %s0, 35
    %v453 = vld [vmem:[%s452] ss:$2 sm:$0x1f]
    %v455 = vrot.slane %v453, 3
    %456 = vrot.lane.b32.xlu0 %v455, 32
    %v457 = vpop.permute.xlu0 %456
    %459 = vst.msk [vmem:[#allocation2 + $0x8] sm:$0xe0] %vm116, %v457
    %460 = vst.msk [vmem:[#allocation2 + $0x20] sm:$0x3] %vm118, %v457
    %s461 = scalar_lea.vmem %s0, 57
    %v462 = vld [vmem:[%s461] ss:$2 sm:$0x1f]
    %v464 = vrot.slane %v462, 6
    %465 = vrot.lane.b32.xlu0 %v464, 32
    %v466 = vpop.permute.xlu0 %465
    %468 = vst.msk [vmem:[#allocation2 + $0x20] sm:$0x7c] %vm127, %v466
    %s469 = scalar_lea.vmem %s0, 79
    %v470 = vld [vmem:[%s469] ss:$2 sm:$0x1f]
    %v472 = vrot.slane %v470, 1
    %473 = vrot.lane.b32.xlu0 %v472, 32
    %v474 = vpop.permute.xlu0 %473
    %476 = vst.msk [vmem:[#allocation2 + $0x20] sm:$0x80] %vm136, %v474
    %477 = vst.msk [vmem:[#allocation2 + $0x38] sm:$0xf] %vm138, %v474
    %s478 = scalar_lea.vmem %s0, 101
    %v479 = vld [vmem:[%s478] ss:$2 sm:$0x1f]
    %v481 = vrot.slane %v479, 4
    %482 = vrot.lane.b32.xlu0 %v481, 32
    %v483 = vpop.permute.xlu0 %482
    %485 = vst.msk [vmem:[#allocation2 + $0x38] sm:$0xf0] %vm147, %v483
    %486 = vst.msk [vmem:[#allocation2 + $0x50] sm:$0x1] %vm149, %v483
    %s487 = scalar_lea.vmem %s0, 134
    %v488 = vld [vmem:[%s487] ss:$2 sm:$0x1f]
    %v490 = vrot.slane %v488, 7
    %491 = vrot.lane.b32.xlu0 %v490, 32
    %v492 = vpop.permute.xlu0 %491
    %494 = vst.msk [vmem:[#allocation2 + $0x50] sm:$0x3e] %vm158, %v492
    %s495 = scalar_lea.vmem %s0, 156
    %v496 = vld [vmem:[%s495] ss:$2 sm:$0x1f]
    %v498 = vrot.slane %v496, 2
    %499 = vrot.lane.b32.xlu0 %v498, 32
    %v500 = vpop.permute.xlu0 %499
    %502 = vst.msk [vmem:[#allocation2 + $0x50] sm:$0xc0] %vm167, %v500
    %503 = vst.msk [vmem:[#allocation2 + $0x68] sm:$0x7] %vm169, %v500
    %s504 = scalar_lea.vmem %s0, 178
    %v505 = vld [vmem:[%s504] ss:$2 sm:$0x1f]
    %v507 = vrot.slane %v505, 5
    %508 = vrot.lane.b32.xlu0 %v507, 32
    %v509 = vpop.permute.xlu0 %508
    %511 = vst.msk [vmem:[#allocation2 + $0x68] sm:$0xf8] %vm178, %v509
    %s512 = scalar_lea.vmem %s0, 200
    %v513 = vld [vmem:[%s512] ss:$2 sm:$0x1f]
    %515 = vrot.lane.b32.xlu0 %v513, 32
    %v516 = vpop.permute.xlu0 %515
    %518 = vst.msk [vmem:[#allocation2 + $0x80] sm:$0x1f] %vm107, %v516
    %s519 = scalar_lea.vmem %s0, 222
    %v520 = vld [vmem:[%s519] ss:$2 sm:$0x1f]
    %v522 = vrot.slane %v520, 3
    %523 = vrot.lane.b32.xlu0 %v522, 32
    %v524 = vpop.permute.xlu0 %523
    %526 = vst.msk [vmem:[#allocation2 + $0x80] sm:$0xe0] %vm116, %v524
    %527 = vst.msk [vmem:[#allocation2 + $0x98] sm:$0x3] %vm118, %v524
    %v528 = vld [vmem:[%s34] ss:$2 sm:$0x1f]
    %530 = vrot.lane.b32.xlu0 %v528, 64
    %v531 = vpop.permute.xlu0 %530
    %533 = vst.msk [vmem:[#allocation2 + $0x8] sm:$0x1f] %vm202, %v531
    %v534 = vld [vmem:[%s43] ss:$2 sm:$0x1f]
    %v536 = vrot.slane %v534, 3
    %537 = vrot.lane.b32.xlu0 %v536, 64
    %v538 = vpop.permute.xlu0 %537
    %540 = vst.msk [vmem:[#allocation2 + $0x8] sm:$0xe0] %vm211, %v538
    %541 = vst.msk [vmem:[#allocation2 + $0x20] sm:$0x3] %vm213, %v538
    %v542 = vld [vmem:[%s50] ss:$2 sm:$0x1f]
    %v544 = vrot.slane %v542, 6
    %545 = vrot.lane.b32.xlu0 %v544, 64
    %v546 = vpop.permute.xlu0 %545
    %548 = vst.msk [vmem:[#allocation2 + $0x20] sm:$0x7c] %vm222, %v546
    %v549 = vld [vmem:[%s59] ss:$2 sm:$0x1f]
    %v551 = vrot.slane %v549, 1
    %552 = vrot.lane.b32.xlu0 %v551, 64
    %v553 = vpop.permute.xlu0 %552
    %555 = vst.msk [vmem:[#allocation2 + $0x20] sm:$0x80] %vm231, %v553
    %556 = vst.msk [vmem:[#allocation2 + $0x38] sm:$0xf] %vm233, %v553
    %s557 = scalar_lea.vmem %s0, 110
    %v558 = vld [vmem:[%s557] ss:$2 sm:$0x1f]
    %v560 = vrot.slane %v558, 4
    %561 = vrot.lane.b32.xlu0 %v560, 64
    %v562 = vpop.permute.xlu0 %561
    %564 = vst.msk [vmem:[#allocation2 + $0x38] sm:$0xf0] %vm242, %v562
    %565 = vst.msk [vmem:[#allocation2 + $0x50] sm:$0x1] %vm244, %v562
    %v566 = vld [vmem:[%s75] ss:$2 sm:$0x1f]
    %v568 = vrot.slane %v566, 7
    %569 = vrot.lane.b32.xlu0 %v568, 64
    %v570 = vpop.permute.xlu0 %569
    %572 = vst.msk [vmem:[#allocation2 + $0x50] sm:$0x3e] %vm253, %v570
    %v573 = vld [vmem:[%s84] ss:$2 sm:$0x1f]
    %v575 = vrot.slane %v573, 2
    %576 = vrot.lane.b32.xlu0 %v575, 64
    %v577 = vpop.permute.xlu0 %576
    %579 = vst.msk [vmem:[#allocation2 + $0x50] sm:$0xc0] %vm262, %v577
    %580 = vst.msk [vmem:[#allocation2 + $0x68] sm:$0x7] %vm264, %v577
    %v581 = vld [vmem:[%s91] ss:$2 sm:$0x1f]
    %v583 = vrot.slane %v581, 5
    %584 = vrot.lane.b32.xlu0 %v583, 64
    %v585 = vpop.permute.xlu0 %584
    %587 = vst.msk [vmem:[#allocation2 + $0x68] sm:$0xf8] %vm273, %v585
    %v588 = vld [vmem:[%s94] ss:$2 sm:$0x1f]
    %590 = vrot.lane.b32.xlu0 %v588, 64
    %v591 = vpop.permute.xlu0 %590
    %593 = vst.msk [vmem:[#allocation2 + $0x80] sm:$0x1f] %vm202, %v591
    %s594 = scalar_lea.vmem %s0, 231
    %v595 = vld [vmem:[%s594] ss:$2 sm:$0x1f]
    %v597 = vrot.slane %v595, 3
    %598 = vrot.lane.b32.xlu0 %v597, 64
    %v599 = vpop.permute.xlu0 %598
    %601 = vst.msk [vmem:[#allocation2 + $0x80] sm:$0xe0] %vm211, %v599
    %602 = vst.msk [vmem:[#allocation2 + $0x98] sm:$0x3] %vm213, %v599
    %v603 = vld [vmem:[%s109] ss:$2 sm:$0x1f]
    %605 = vrot.lane.b32.xlu0 %v603, 96
    %v606 = vpop.permute.xlu0 %605
    %608 = vst.msk [vmem:[#allocation2 + $0x8] sm:$0x1f] %vm297, %v606
    %v609 = vld [vmem:[%s120] ss:$2 sm:$0x1f]
    %v611 = vrot.slane %v609, 3
    %612 = vrot.lane.b32.xlu0 %v611, 96
    %v613 = vpop.permute.xlu0 %612
    %615 = vst.msk [vmem:[#allocation2 + $0x8] sm:$0xe0] %vm306, %v613
    %616 = vst.msk [vmem:[#allocation2 + $0x20] sm:$0x3] %vm308, %v613
    %v617 = vld [vmem:[%s129] ss:$2 sm:$0x1f]
    %v619 = vrot.slane %v617, 6
    %620 = vrot.lane.b32.xlu0 %v619, 96
    %v621 = vpop.permute.xlu0 %620
    %623 = vst.msk [vmem:[#allocation2 + $0x20] sm:$0x7c] %vm317, %v621
    %v624 = vld [vmem:[%s140] ss:$2 sm:$0x1f]
    %v626 = vrot.slane %v624, 1
    %627 = vrot.lane.b32.xlu0 %v626, 96
    %v628 = vpop.permute.xlu0 %627
    %630 = vst.msk [vmem:[#allocation2 + $0x20] sm:$0x80] %vm326, %v628
    %631 = vst.msk [vmem:[#allocation2 + $0x38] sm:$0xf] %vm328, %v628
    %s632 = scalar_lea.vmem %s0, 111
    %v633 = vld [vmem:[%s632] ss:$2 sm:$0x1f]
    %v635 = vrot.slane %v633, 4
    %636 = vrot.lane.b32.xlu0 %v635, 96
    %v637 = vpop.permute.xlu0 %636
    %639 = vst.msk [vmem:[#allocation2 + $0x38] sm:$0xf0] %vm337, %v637
    %640 = vst.msk [vmem:[#allocation2 + $0x50] sm:$0x1] %vm339, %v637
    %v641 = vld [vmem:[%s160] ss:$2 sm:$0x1f]
    %v643 = vrot.slane %v641, 7
    %644 = vrot.lane.b32.xlu0 %v643, 96
    %v645 = vpop.permute.xlu0 %644
    %647 = vst.msk [vmem:[#allocation2 + $0x50] sm:$0x3e] %vm348, %v645
    %v648 = vld [vmem:[%s171] ss:$2 sm:$0x1f]
    %v650 = vrot.slane %v648, 2
    %651 = vrot.lane.b32.xlu0 %v650, 96
    %v652 = vpop.permute.xlu0 %651
    %654 = vst.msk [vmem:[#allocation2 + $0x50] sm:$0xc0] %vm357, %v652
    %655 = vst.msk [vmem:[#allocation2 + $0x68] sm:$0x7] %vm359, %v652
    %v656 = vld [vmem:[%s180] ss:$2 sm:$0x1f]
    %v658 = vrot.slane %v656, 5
    %659 = vrot.lane.b32.xlu0 %v658, 96
    %v660 = vpop.permute.xlu0 %659
    %662 = vst.msk [vmem:[#allocation2 + $0x68] sm:$0xf8] %vm368, %v660
    %v663 = vld [vmem:[%s187] ss:$2 sm:$0x1f]
    %665 = vrot.lane.b32.xlu0 %v663, 96
    %v666 = vpop.permute.xlu0 %665
    %668 = vst.msk [vmem:[#allocation2 + $0x80] sm:$0x1f] %vm297, %v666
    %s669 = scalar_lea.vmem %s0, 232
    %v670 = vld [vmem:[%s669] ss:$2 sm:$0x1f]
    %v672 = vrot.slane %v670, 3
    %673 = vrot.lane.b32.xlu0 %v672, 96
    %v674 = vpop.permute.xlu0 %673
    %676 = vst.msk [vmem:[#allocation2 + $0x80] sm:$0xe0] %vm306, %v674
    %677 = vst.msk [vmem:[#allocation2 + $0x98] sm:$0x3] %vm308, %v674
    %v678 = vld [vmem:[%s204] ss:$2 sm:$0x1f]
    %679 = vst.msk [vmem:[#allocation2 + $0x10] sm:$0x1f] %vm32, %v678
    %v680 = vld [vmem:[%s215] ss:$2 sm:$0x1f]
    %v682 = vrot.slane %v680, 3
    %684 = vst.msk [vmem:[#allocation2 + $0x10] sm:$0xe0] %vm39, %v682
    %685 = vst.msk [vmem:[#allocation2 + $0x28] sm:$0x3] %vm41, %v682
    %v686 = vld [vmem:[%s224] ss:$2 sm:$0x1f]
    %v688 = vrot.slane %v686, 6
    %690 = vst.msk [vmem:[#allocation2 + $0x28] sm:$0x7c] %vm48, %v688
    %v691 = vld [vmem:[%s235] ss:$2 sm:$0x1f]
    %v693 = vrot.slane %v691, 1
    %695 = vst.msk [vmem:[#allocation2 + $0x28] sm:$0x80] %vm55, %v693
    %696 = vst.msk [vmem:[#allocation2 + $0x40] sm:$0xf] %vm57, %v693
    %s697 = scalar_lea.vmem %s0, 112
    %v698 = vld [vmem:[%s697] ss:$2 sm:$0x1f]
    %v700 = vrot.slane %v698, 4
    %702 = vst.msk [vmem:[#allocation2 + $0x40] sm:$0xf0] %vm64, %v700
    %703 = vst.msk [vmem:[#allocation2 + $0x58] sm:$0x1] %vm66, %v700
    %v704 = vld [vmem:[%s255] ss:$2 sm:$0x1f]
    %v706 = vrot.slane %v704, 7
    %708 = vst.msk [vmem:[#allocation2 + $0x58] sm:$0x3e] %vm73, %v706
    %v709 = vld [vmem:[%s266] ss:$2 sm:$0x1f]
    %v711 = vrot.slane %v709, 2
    %713 = vst.msk [vmem:[#allocation2 + $0x58] sm:$0xc0] %vm80, %v711
    %714 = vst.msk [vmem:[#allocation2 + $0x70] sm:$0x7] %vm82, %v711
    %v715 = vld [vmem:[%s275] ss:$2 sm:$0x1f]
    %v717 = vrot.slane %v715, 5
    %719 = vst.msk [vmem:[#allocation2 + $0x70] sm:$0xf8] %vm89, %v717
    %v720 = vld [vmem:[%s282] ss:$2 sm:$0x1f]
    %721 = vst.msk [vmem:[#allocation2 + $0x88] sm:$0x1f] %vm32, %v720
    %s722 = scalar_lea.vmem %s0, 233
    %v723 = vld [vmem:[%s722] ss:$2 sm:$0x1f]
    %v725 = vrot.slane %v723, 3
    %727 = vst.msk [vmem:[#allocation2 + $0x88] sm:$0xe0] %vm39, %v725
    %728 = vst.msk [vmem:[#allocation2 + $0xa0] sm:$0x3] %vm41, %v725
    %v729 = vld [vmem:[#allocation2] sm:$0xff]
    %v730 = vld [vmem:[#allocation2 + $0x8] sm:$0xff]
    %v731 = vld [vmem:[#allocation2 + $0x10] sm:$0xff]
    %v732 = vld [vmem:[#allocation2 + $0x18] sm:$0xff]
    %v733 = vld [vmem:[#allocation2 + $0x20] sm:$0xff]
    %v734 = vld [vmem:[#allocation2 + $0x28] sm:$0xff]
    %v735 = vld [vmem:[#allocation2 + $0x30] sm:$0xff]
    %v736 = vld [vmem:[#allocation2 + $0x38] sm:$0xff]
    %v737 = vld [vmem:[#allocation2 + $0x40] sm:$0xff]
    %v738 = vld [vmem:[#allocation2 + $0x48] sm:$0xff]
    %v739 = vld [vmem:[#allocation2 + $0x50] sm:$0xff]
    %v740 = vld [vmem:[#allocation2 + $0x58] sm:$0xff]
    %v741 = vld [vmem:[#allocation2 + $0x60] sm:$0xff]
    %v742 = vld [vmem:[#allocation2 + $0x68] sm:$0xff]
    %v743 = vld [vmem:[#allocation2 + $0x70] sm:$0xff]
    %v744 = vld [vmem:[#allocation2 + $0x78] sm:$0xff]
    %v745 = vld [vmem:[#allocation2 + $0x80] sm:$0xff]
    %v746 = vld [vmem:[#allocation2 + $0x88] sm:$0xff]
    %v747 = vld [vmem:[#allocation2 + $0x90] sm:$0x3]
    %v748 = vld [vmem:[#allocation2 + $0x98] sm:$0x3]
    %v749 = vld [vmem:[#allocation2 + $0xa0] sm:$0x3]
    %v750 = vld [vmem:[%s1] sm:$0xff]
    %v751 = vld [vmem:[%s1 + $0x8] sm:$0xff]
    %v752 = vld [vmem:[%s1 + $0x10] sm:$0xff]
    %v753 = vld [vmem:[%s1 + $0x18] sm:$0xff]
    %v754 = vld [vmem:[%s1 + $0x20] sm:$0xff]
    %v755 = vld [vmem:[%s1 + $0x28] sm:$0xff]
    %v756 = vld [vmem:[%s1 + $0x30] sm:$0xff]
    %v757 = vld [vmem:[%s1 + $0x38] sm:$0xff]
    %v758 = vld [vmem:[%s1 + $0x40] sm:$0xff]
    %v759 = vld [vmem:[%s1 + $0x48] sm:$0xff]
    %v760 = vld [vmem:[%s1 + $0x50] sm:$0xff]
    %v761 = vld [vmem:[%s1 + $0x58] sm:$0xff]
    %v762 = vld [vmem:[%s1 + $0x60] sm:$0xff]
    %v763 = vld [vmem:[%s1 + $0x68] sm:$0xff]
    %v764 = vld [vmem:[%s1 + $0x70] sm:$0xff]
    %v765 = vld [vmem:[%s1 + $0x78] sm:$0xff]
    %v766 = vld [vmem:[%s1 + $0x80] sm:$0xff]
    %v767 = vld [vmem:[%s1 + $0x88] sm:$0xff]
    %v768 = vld [vmem:[%s1 + $0x90] sm:$0xff]
    %v769 = vld [vmem:[%s1 + $0x98] sm:$0xff]
    %v770 = vld [vmem:[%s1 + $0xa0] sm:$0xff]
    %v771 = vld [vmem:[%s1 + $0xa8] sm:$0xff]
    %v772 = vld [vmem:[%s1 + $0xb0] sm:$0xff]
    %v773 = vld [vmem:[%s1 + $0xb8] sm:$0xff]
    %v774 = vld [vmem:[%s1 + $0xc0] sm:$0xff]
    %v775 = vld [vmem:[%s1 + $0xc8] sm:$0xff]
    %v776 = vld [vmem:[%s1 + $0xd0] sm:$0xff]
    %v777 = vld [vmem:[%s1 + $0xd8] sm:$0xff]
    %v778 = vld [vmem:[%s1 + $0xe0] sm:$0xff]
    %v779 = vld [vmem:[%s1 + $0xe8] sm:$0xff]
    %v780 = vld [vmem:[%s1 + $0xf0] sm:$0xff]
    %v781 = vld [vmem:[%s1 + $0xf8] sm:$0xff]
    %v782 = vld [vmem:[%s1 + $0x100] sm:$0xff]
    %v783 = vld [vmem:[%s1 + $0x108] sm:$0xff]
    %v784 = vld [vmem:[%s1 + $0x110] sm:$0xff]
    %v785 = vld [vmem:[%s1 + $0x118] sm:$0xff]
    %v786 = vld [vmem:[%s2] sm:$0x1]
    %v788 = vlaneseq
    %v789 = vshrl.u32 %v788, 7
    %v790 = vsub.s32 0, %v789
    %v791 = vrot.slane %v786, %v790
    %vm793 = vcmask 261120
    %v795 = vsel %vm793, %v731, 0
    %v798 = vsel %vm793, %v734, 0
    %v801 = vsel %vm793, %v737, 0
    %v804 = vsel %vm793, %v740, 0
    %v807 = vsel %vm793, %v743, 0
    %v810 = vsel %vm793, %v746, 0
    %v813 = vsel %vm793, %v749, 0
    %815 = vmatprep.subr.mxu0 0.0
    %816 = vmatpush1.msra.mxu0 %v750
    %817 = vmatprep.subr.mxu0 0.0
    %818 = vmatpush1.msra.mxu0 %v751
    %819 = vmatprep.subr.mxu0 0.0
    %820 = vmatpush1.msra.mxu0 %v752
    %821 = vmatprep.subr.mxu0 0.0
    %822 = vmatpush1.msra.mxu0 %v753
    %823 = vmatprep.subr.mxu0 0.0
    %824 = vmatpush1.msra.mxu0 %v754
    %825 = vmatprep.subr.mxu0 0.0
    %826 = vmatpush1.msra.mxu0 %v755
    %827 = vmatprep.subr.mxu0 0.0
    %828 = vmatpush1.msra.mxu0 %v756
    %829 = vmatprep.subr.mxu0 0.0
    %830 = vmatpush1.msra.mxu0 %v757
    %831 = vmatprep.subr.mxu0 0.0
    %832 = vmatpush1.msra.mxu0 %v758
    %833 = vmatprep.subr.mxu0 0.0
    %834 = vmatpush1.msra.mxu0 %v759
    %835 = vmatprep.subr.mxu0 0.0
    %836 = vmatpush1.msra.mxu0 %v760
    %837 = vmatprep.subr.mxu0 0.0
    %838 = vmatpush1.msra.mxu0 %v761
    %839 = vmatprep.subr.mxu0 0.0
    %840 = vmatpush1.msra.mxu0 %v762
    %841 = vmatprep.subr.mxu0 0.0
    %842 = vmatpush1.msra.mxu0 %v763
    %843 = vmatprep.subr.mxu0 0.0
    %844 = vmatpush1.msra.mxu0 %v764
    %845 = vmatprep.subr.mxu0 0.0
    %846 = vmatpush1.msra.mxu0 %v765
    %847 = vmatprep.subr.mxu0 0.0
    %848 = vmatpush1.msra.mxu0 %v766
    %849 = vmatprep.subr.mxu0 0.0
    %850 = vmatpush1.msra.mxu0 %v767
    %851 = vmatprep.subr.mxu0 0.0
    %852 = vmatpush1.msra.mxu0 %v768
    %853 = vmatprep.subr.mxu0 0.0
    %854 = vmatpush1.msra.mxu0 %v769
    %855 = vmatprep.subr.mxu0 0.0
    %856 = vmatpush1.msra.mxu0 %v770
    %857 = vmatprep.subr.mxu0 0.0
    %858 = vmatpush1.msra.mxu0 %v771
    %859 = vmatprep.subr.mxu0 0.0
    %860 = vmatpush1.msra.mxu0 %v772
    %861 = vmatprep.subr.mxu0 0.0
    %862 = vmatpush1.msra.mxu0 %v773
    %863 = vmatprep.subr.mxu0 0.0
    %864 = vmatpush1.msra.mxu0 %v774
    %865 = vmatprep.subr.mxu0 0.0
    %866 = vmatpush1.msra.mxu0 %v775
    %867 = vmatprep.subr.mxu0 0.0
    %868 = vmatpush1.msra.mxu0 %v776
    %869 = vmatprep.subr.mxu0 0.0
    %870 = vmatpush1.msra.mxu0 %v777
    %871 = vmatprep.subr.mxu0 0.0
    %872 = vmatpush1.msra.mxu0 %v778
    %873 = vmatprep.subr.mxu0 0.0
    %874 = vmatpush1.msra.mxu0 %v779
    %875 = vmatprep.subr.mxu0 0.0
    %876 = vmatpush1.msra.mxu0 %v780
    %877 = vmatprep.subr.mxu0 0.0
    %878 = vmatpush1.msra.mxu0 %v781
    %879 = vmatprep.mubr.f32.mxu0 %v730
    %880 = vmatmul.mubr.f32.gmra.mrb[0].mxu0 %v729
    %v881 = vpop.f32.mrb[0].mxu0
    %v882 = vadd.f32 %v791, %v881
    %v883 = vpop.f32.mrb[0].mxu0
    %884 = vmatprep.mubr.f32.mxu0 %v733
    %885 = vmatmul.mubr.f32.gmra.mrb[0].mxu0 %v732
    %v886 = vpop.f32.mrb[0].mxu0
    %v887 = vadd.f32 %v791, %v886
    %v888 = vpop.f32.mrb[0].mxu0
    %889 = vmatprep.mubr.f32.mxu0 %v736
    %890 = vmatmul.mubr.f32.gmra.mrb[0].mxu0 %v735
    %v891 = vpop.f32.mrb[0].mxu0
    %v892 = vadd.f32 %v791, %v891
    %v893 = vpop.f32.mrb[0].mxu0
    %894 = vmatprep.mubr.f32.mxu0 %v739
    %895 = vmatmul.mubr.f32.gmra.mrb[0].mxu0 %v738
    %v896 = vpop.f32.mrb[0].mxu0
    %v897 = vadd.f32 %v791, %v896
    %v898 = vpop.f32.mrb[0].mxu0
    %899 = vmatprep.mubr.f32.mxu0 %v742
    %900 = vmatmul.mubr.f32.gmra.mrb[0].mxu0 %v741
    %v901 = vpop.f32.mrb[0].mxu0
    %v902 = vadd.f32 %v791, %v901
    %v903 = vpop.f32.mrb[0].mxu0
    %904 = vmatprep.mubr.f32.mxu0 %v745
    %905 = vmatmul.mubr.f32.gmra.mrb[0].mxu0 %v744
    %v906 = vpop.f32.mrb[0].mxu0
    %v907 = vadd.f32 %v791, %v906
    %v908 = vpop.f32.mrb[0].mxu0
    %909 = vmatprep.mubr.f32.mxu0 %v748
    %910 = vmatmul.mubr.f32.gmra.mrb[0].mxu0 %v747
    %v911 = vpop.f32.mrb[0].mxu0
    %v912 = vadd.f32 %v791, %v911
    %v913 = vpop.f32.mrb[0].mxu0
    %914 = vdwg.mxu0
    %915 = vmatprep.subr.mxu0 0.0
    %916 = vmatpush1.msra.mxu0 %v782
    %917 = vmatprep.subr.mxu0 0.0
    %918 = vmatpush1.msra.mxu0 %v783
    %919 = vmatprep.subr.mxu0 0.0
    %920 = vmatpush1.msra.mxu0 %v784
    %921 = vmatprep.subr.mxu0 0.0
    %922 = vmatpush1.msra.mxu0 %v785
    %923 = vmatprep.subr.mxu0 0.0
    %924 = vmatpush1.msra.mxu0 0.0
    %925 = vmatprep.subr.mxu0 0.0
    %926 = vmatpush1.msra.mxu0 0.0
    %927 = vmatprep.subr.mxu0 0.0
    %928 = vmatpush1.msra.mxu0 0.0
    %929 = vmatprep.subr.mxu0 0.0
    %930 = vmatpush1.msra.mxu0 0.0
    %931 = vmatprep.subr.mxu0 0.0
    %932 = vmatpush1.msra.mxu0 0.0
    %933 = vmatprep.subr.mxu0 0.0
    %934 = vmatpush1.msra.mxu0 0.0
    %935 = vmatprep.subr.mxu0 0.0
    %936 = vmatpush1.msra.mxu0 0.0
    %937 = vmatprep.subr.mxu0 0.0
    %938 = vmatpush1.msra.mxu0 0.0
    %939 = vmatprep.subr.mxu0 0.0
    %940 = vmatpush1.msra.mxu0 0.0
    %941 = vmatprep.subr.mxu0 0.0
    %942 = vmatpush1.msra.mxu0 0.0
    %943 = vmatprep.subr.mxu0 0.0
    %944 = vmatpush1.msra.mxu0 0.0
    %945 = vmatprep.subr.mxu0 0.0
    %946 = vmatpush1.msra.mxu0 0.0
    %947 = vmatprep.subr.mxu0 0.0
    %948 = vmatpush1.msra.mxu0 0.0
    %949 = vmatprep.subr.mxu0 0.0
    %950 = vmatpush1.msra.mxu0 0.0
    %951 = vmatprep.subr.mxu0 0.0
    %952 = vmatpush1.msra.mxu0 0.0
    %953 = vmatprep.subr.mxu0 0.0
    %954 = vmatpush1.msra.mxu0 0.0
    %955 = vmatprep.subr.mxu0 0.0
    %956 = vmatpush1.msra.mxu0 0.0
    %957 = vmatprep.subr.mxu0 0.0
    %958 = vmatpush1.msra.mxu0 0.0
    %959 = vmatprep.subr.mxu0 0.0
    %960 = vmatpush1.msra.mxu0 0.0
    %961 = vmatprep.subr.mxu0 0.0
    %962 = vmatpush1.msra.mxu0 0.0
    %963 = vmatprep.subr.mxu0 0.0
    %964 = vmatpush1.msra.mxu0 0.0
    %965 = vmatprep.subr.mxu0 0.0
    %966 = vmatpush1.msra.mxu0 0.0
    %967 = vmatprep.subr.mxu0 0.0
    %968 = vmatpush1.msra.mxu0 0.0
    %969 = vmatprep.subr.mxu0 0.0
    %970 = vmatpush1.msra.mxu0 0.0
    %971 = vmatprep.subr.mxu0 0.0
    %972 = vmatpush1.msra.mxu0 0.0
    %973 = vmatprep.subr.mxu0 0.0
    %974 = vmatpush1.msra.mxu0 0.0
    %975 = vmatprep.subr.mxu0 0.0
    %976 = vmatpush1.msra.mxu0 0.0
    %977 = vmatprep.subr.mxu0 0.0
    %978 = vmatpush1.msra.mxu0 0.0
    %979 = vmatprep.mubr.f32.mxu0 0.0
    %980 = vmatmul.mubr.f32.gmra.mrb[0].mxu0 %v795
    %v981 = vpop.f32.mrb[0].mxu0
    %v982 = vadd.f32 %v882, %v981
    %v983 = vpop.f32.mrb[0].mxu0
    %984 = vmatprep.mubr.f32.mxu0 0.0
    %985 = vmatmul.mubr.f32.gmra.mrb[0].mxu0 %v798
    %v986 = vpop.f32.mrb[0].mxu0
    %v987 = vadd.f32 %v887, %v986
    %v988 = vpop.f32.mrb[0].mxu0
    %989 = vmatprep.mubr.f32.mxu0 0.0
    %990 = vmatmul.mubr.f32.gmra.mrb[0].mxu0 %v801
    %v991 = vpop.f32.mrb[0].mxu0
    %v992 = vadd.f32 %v892, %v991
    %v993 = vpop.f32.mrb[0].mxu0
    %994 = vmatprep.mubr.f32.mxu0 0.0
    %995 = vmatmul.mubr.f32.gmra.mrb[0].mxu0 %v804
    %v996 = vpop.f32.mrb[0].mxu0
    %v997 = vadd.f32 %v897, %v996
    %v998 = vpop.f32.mrb[0].mxu0
    %999 = vmatprep.mubr.f32.mxu0 0.0
    %1000 = vmatmul.mubr.f32.gmra.mrb[0].mxu0 %v807
    %v1001 = vpop.f32.mrb[0].mxu0
    %v1002 = vadd.f32 %v902, %v1001
    %v1003 = vpop.f32.mrb[0].mxu0
    %1004 = vmatprep.mubr.f32.mxu0 0.0
    %1005 = vmatmul.mubr.f32.gmra.mrb[0].mxu0 %v810
    %v1006 = vpop.f32.mrb[0].mxu0
    %v1007 = vadd.f32 %v907, %v1006
    %v1008 = vpop.f32.mrb[0].mxu0
    %1009 = vmatprep.mubr.f32.mxu0 0.0
    %1010 = vmatmul.mubr.f32.gmra.mrb[0].mxu0 %v813
    %v1011 = vpop.f32.mrb[0].mxu0
    %v1012 = vadd.f32 %v912, %v1011
    %v1013 = vpop.f32.mrb[0].mxu0
    %1014 = vdwg.mxu0
    %vm1015 = vcmp.gt.f32.partialorder %v982, 0.0
    %vm1016 = vcmp.gt.f32.partialorder %v987, 0.0
    %vm1017 = vcmp.gt.f32.partialorder %v992, 0.0
    %vm1018 = vcmp.gt.f32.partialorder %v997, 0.0
    %vm1019 = vcmp.gt.f32.partialorder %v1002, 0.0
    %vm1020 = vcmp.gt.f32.partialorder %v1007, 0.0
    %vm1021 = vcmp.gt.f32.partialorder %v1012, 0.0
    %v1022 = vmul.f32 %v982, 0.1
    %v1023 = vmul.f32 %v987, 0.1
    %v1024 = vmul.f32 %v992, 0.1
    %v1025 = vmul.f32 %v997, 0.1
    %v1026 = vmul.f32 %v1002, 0.1
    %v1027 = vmul.f32 %v1007, 0.1
    %v1028 = vmul.f32 %v1012, 0.1
    %v1029 = vsel %vm1015, %v982, %v1022
    %v1030 = vsel %vm1016, %v987, %v1023
    %v1031 = vsel %vm1017, %v992, %v1024
    %v1032 = vsel %vm1018, %v997, %v1025
    %v1033 = vsel %vm1019, %v1002, %v1026
    %v1034 = vsel %vm1020, %v1007, %v1027
    %v1035 = vsel %vm1021, %v1012, %v1028
    %1036 = vst.msk [vmem:[#allocation3] sm:$0xff] %vm793, %v1029
    %1037 = vst.msk [vmem:[#allocation3 + $0x8] sm:$0xff] %vm793, %v1030
    %1038 = vst.msk [vmem:[#allocation3 + $0x10] sm:$0xff] %vm793, %v1031
    %1039 = vst.msk [vmem:[#allocation3 + $0x18] sm:$0xff] %vm793, %v1032
    %1040 = vst.msk [vmem:[#allocation3 + $0x20] sm:$0xff] %vm793, %v1033
    %1041 = vst.msk [vmem:[#allocation3 + $0x28] sm:$0xff] %vm793, %v1034
    %1042 = vst.msk [vmem:[#allocation3 + $0x30] sm:$0x3] %vm41, %v1035
    %v1043 = vld [vmem:[#allocation3] ss:$2 sm:$0x3]
    %1044 = vst.msk [vmem:[#allocation4] sm:$0x3] %vm41, %v1043
    %s1045 = scalar_lea.vmem [#allocation3], 10
    %v1046 = vld [vmem:[%s1045] ss:$2 sm:$0x3]
    %v1048 = vrot.slane %v1046, 6
    %vm1050 = vcmask 257026
    %1051 = vst.msk [vmem:[#allocation4] sm:$0xc] %vm1050, %v1048
    %s1052 = scalar_lea.vmem [#allocation3], 25
    %v1053 = vld [vmem:[%s1052] ss:$2 sm:$0x3]
    %v1055 = vrot.slane %v1053, 4
    %vm1057 = vcmask 259076
    %1058 = vst.msk [vmem:[#allocation4] sm:$0x30] %vm1057, %v1055
    %s1059 = scalar_lea.vmem [#allocation3], 35
    %v1060 = vld [vmem:[%s1059] ss:$2 sm:$0x3]
    %v1062 = vrot.slane %v1060, 2
    %1064 = vst.msk [vmem:[#allocation4] sm:$0xc0] %vm80, %v1062
    %s1065 = scalar_lea.vmem [#allocation3], 1
    %v1066 = vld [vmem:[%s1065] ss:$2 sm:$0x3]
    %1068 = vrot.lane.b32.xlu0 %v1066, 32
    %v1069 = vpop.permute.xlu0 %1068
    %1071 = vst.msk [vmem:[#allocation4] sm:$0x3] %vm118, %v1069
    %s1072 = scalar_lea.vmem [#allocation3], 11
    %v1073 = vld [vmem:[%s1072] ss:$2 sm:$0x3]
    %v1075 = vrot.slane %v1073, 6
    %1076 = vrot.lane.b32.xlu0 %v1075, 32
    %v1077 = vpop.permute.xlu0 %1076
    %vm1079 = vcmask 519426
    %1080 = vst.msk [vmem:[#allocation4] sm:$0xc] %vm1079, %v1077
    %s1081 = scalar_lea.vmem [#allocation3], 26
    %v1082 = vld [vmem:[%s1081] ss:$2 sm:$0x3]
    %v1084 = vrot.slane %v1082, 4
    %1085 = vrot.lane.b32.xlu0 %v1084, 32
    %v1086 = vpop.permute.xlu0 %1085
    %vm1088 = vcmask 521476
    %1089 = vst.msk [vmem:[#allocation4] sm:$0x30] %vm1088, %v1086
    %s1090 = scalar_lea.vmem [#allocation3], 36
    %v1091 = vld [vmem:[%s1090] ss:$2 sm:$0x3]
    %v1093 = vrot.slane %v1091, 2
    %1094 = vrot.lane.b32.xlu0 %v1093, 32
    %v1095 = vpop.permute.xlu0 %1094
    %1097 = vst.msk [vmem:[#allocation4] sm:$0xc0] %vm167, %v1095
    %s1098 = scalar_lea.vmem [#allocation3], 2
    %v1099 = vld [vmem:[%s1098] ss:$2 sm:$0x3]
    %1101 = vrot.lane.b32.xlu0 %v1099, 64
    %v1102 = vpop.permute.xlu0 %1101
    %1104 = vst.msk [vmem:[#allocation4] sm:$0x3] %vm213, %v1102
    %s1105 = scalar_lea.vmem [#allocation3], 12
    %v1106 = vld [vmem:[%s1105] ss:$2 sm:$0x3]
    %v1108 = vrot.slane %v1106, 6
    %1109 = vrot.lane.b32.xlu0 %v1108, 64
    %v1110 = vpop.permute.xlu0 %1109
    %vm1112 = vcmask 781826
    %1113 = vst.msk [vmem:[#allocation4] sm:$0xc] %vm1112, %v1110
    %s1114 = scalar_lea.vmem [#allocation3], 27
    %v1115 = vld [vmem:[%s1114] ss:$2 sm:$0x3]
    %v1117 = vrot.slane %v1115, 4
    %1118 = vrot.lane.b32.xlu0 %v1117, 64
    %v1119 = vpop.permute.xlu0 %1118
    %vm1121 = vcmask 783876
    %1122 = vst.msk [vmem:[#allocation4] sm:$0x30] %vm1121, %v1119
    %s1123 = scalar_lea.vmem [#allocation3], 37
    %v1124 = vld [vmem:[%s1123] ss:$2 sm:$0x3]
    %v1126 = vrot.slane %v1124, 2
    %1127 = vrot.lane.b32.xlu0 %v1126, 64
    %v1128 = vpop.permute.xlu0 %1127
    %1130 = vst.msk [vmem:[#allocation4] sm:$0xc0] %vm262, %v1128
    %s1131 = scalar_lea.vmem [#allocation3], 5
    %v1132 = vld [vmem:[%s1131] ss:$2 sm:$0x3]
    %1134 = vrot.lane.b32.xlu0 %v1132, 96
    %v1135 = vpop.permute.xlu0 %1134
    %1137 = vst.msk [vmem:[#allocation4] sm:$0x3] %vm308, %v1135
    %s1138 = scalar_lea.vmem [#allocation3], 15
    %v1139 = vld [vmem:[%s1138] ss:$2 sm:$0x3]
    %v1141 = vrot.slane %v1139, 6
    %1142 = vrot.lane.b32.xlu0 %v1141, 96
    %v1143 = vpop.permute.xlu0 %1142
    %vm1145 = vcmask 1044226
    %1146 = vst.msk [vmem:[#allocation4] sm:$0xc] %vm1145, %v1143
    %s1147 = scalar_lea.vmem [#allocation3], 30
    %v1148 = vld [vmem:[%s1147] ss:$2 sm:$0x3]
    %v1150 = vrot.slane %v1148, 4
    %1151 = vrot.lane.b32.xlu0 %v1150, 96
    %v1152 = vpop.permute.xlu0 %1151
    %vm1154 = vcmask 1046276
    %1155 = vst.msk [vmem:[#allocation4] sm:$0x30] %vm1154, %v1152
    %s1156 = scalar_lea.vmem [#allocation3], 40
    %v1157 = vld [vmem:[%s1156] ss:$2 sm:$0x3]
    %v1159 = vrot.slane %v1157, 2
    %1160 = vrot.lane.b32.xlu0 %v1159, 96
    %v1161 = vpop.permute.xlu0 %1160
    %1163 = vst.msk [vmem:[#allocation4] sm:$0xc0] %vm357, %v1161
    %s1164 = scalar_lea.vmem [#allocation3], 6
    %v1165 = vld [vmem:[%s1164] ss:$2 sm:$0x3]
    %1166 = vst.msk [vmem:[#allocation4 + $0x8] sm:$0x3] %vm41, %v1165
    %s1167 = scalar_lea.vmem [#allocation3], 16
    %v1168 = vld [vmem:[%s1167] ss:$2 sm:$0x3]
    %v1170 = vrot.slane %v1168, 6
    %1172 = vst.msk [vmem:[#allocation4 + $0x8] sm:$0xc] %vm1050, %v1170
    %s1173 = scalar_lea.vmem [#allocation3], 31
    %v1174 = vld [vmem:[%s1173] ss:$2 sm:$0x3]
    %v1176 = vrot.slane %v1174, 4
    %1178 = vst.msk [vmem:[#allocation4 + $0x8] sm:$0x30] %vm1057, %v1176
    %s1179 = scalar_lea.vmem [#allocation3], 41
    %v1180 = vld [vmem:[%s1179] ss:$2 sm:$0x3]
    %v1182 = vrot.slane %v1180, 2
    %1184 = vst.msk [vmem:[#allocation4 + $0x8] sm:$0xc0] %vm80, %v1182
    %s1185 = scalar_lea.vmem [#allocation3], 7
    %v1186 = vld [vmem:[%s1185] ss:$2 sm:$0x3]
    %1188 = vrot.lane.b32.xlu0 %v1186, 32
    %v1189 = vpop.permute.xlu0 %1188
    %1191 = vst.msk [vmem:[#allocation4 + $0x8] sm:$0x3] %vm118, %v1189
    %s1192 = scalar_lea.vmem [#allocation3], 17
    %v1193 = vld [vmem:[%s1192] ss:$2 sm:$0x3]
    %v1195 = vrot.slane %v1193, 6
    %1196 = vrot.lane.b32.xlu0 %v1195, 32
    %v1197 = vpop.permute.xlu0 %1196
    %1199 = vst.msk [vmem:[#allocation4 + $0x8] sm:$0xc] %vm1079, %v1197
    %s1200 = scalar_lea.vmem [#allocation3], 32
    %v1201 = vld [vmem:[%s1200] ss:$2 sm:$0x3]
    %v1203 = vrot.slane %v1201, 4
    %1204 = vrot.lane.b32.xlu0 %v1203, 32
    %v1205 = vpop.permute.xlu0 %1204
    %1207 = vst.msk [vmem:[#allocation4 + $0x8] sm:$0x30] %vm1088, %v1205
    %s1208 = scalar_lea.vmem [#allocation3], 42
    %v1209 = vld [vmem:[%s1208] ss:$2 sm:$0x3]
    %v1211 = vrot.slane %v1209, 2
    %1212 = vrot.lane.b32.xlu0 %v1211, 32
    %v1213 = vpop.permute.xlu0 %1212
    %1215 = vst.msk [vmem:[#allocation4 + $0x8] sm:$0xc0] %vm167, %v1213
    %v1216 = vld [vmem:[%s1045] ss:$2 sm:$0x3]
    %1218 = vrot.lane.b32.xlu0 %v1216, 64
    %v1219 = vpop.permute.xlu0 %1218
    %1221 = vst.msk [vmem:[#allocation4 + $0x8] sm:$0x3] %vm213, %v1219
    %s1222 = scalar_lea.vmem [#allocation3], 20
    %v1223 = vld [vmem:[%s1222] ss:$2 sm:$0x3]
    %v1225 = vrot.slane %v1223, 6
    %1226 = vrot.lane.b32.xlu0 %v1225, 64
    %v1227 = vpop.permute.xlu0 %1226
    %1229 = vst.msk [vmem:[#allocation4 + $0x8] sm:$0xc] %vm1112, %v1227
    %v1230 = vld [vmem:[%s1059] ss:$2 sm:$0x3]
    %v1232 = vrot.slane %v1230, 4
    %1233 = vrot.lane.b32.xlu0 %v1232, 64
    %v1234 = vpop.permute.xlu0 %1233
    %1236 = vst.msk [vmem:[#allocation4 + $0x8] sm:$0x30] %vm1121, %v1234
    %s1237 = scalar_lea.vmem [#allocation3], 45
    %v1238 = vld [vmem:[%s1237] ss:$2 sm:$0x3]
    %v1240 = vrot.slane %v1238, 2
    %1241 = vrot.lane.b32.xlu0 %v1240, 64
    %v1242 = vpop.permute.xlu0 %1241
    %1244 = vst.msk [vmem:[#allocation4 + $0x8] sm:$0xc0] %vm262, %v1242
    %v1245 = vld [vmem:[%s1072] ss:$2 sm:$0x3]
    %1247 = vrot.lane.b32.xlu0 %v1245, 96
    %v1248 = vpop.permute.xlu0 %1247
    %1250 = vst.msk [vmem:[#allocation4 + $0x8] sm:$0x3] %vm308, %v1248
    %s1251 = scalar_lea.vmem [#allocation3], 21
    %v1252 = vld [vmem:[%s1251] ss:$2 sm:$0x3]
    %v1254 = vrot.slane %v1252, 6
    %1255 = vrot.lane.b32.xlu0 %v1254, 96
    %v1256 = vpop.permute.xlu0 %1255
    %1258 = vst.msk [vmem:[#allocation4 + $0x8] sm:$0xc] %vm1145, %v1256
    %v1259 = vld [vmem:[%s1090] ss:$2 sm:$0x3]
    %v1261 = vrot.slane %v1259, 4
    %1262 = vrot.lane.b32.xlu0 %v1261, 96
    %v1263 = vpop.permute.xlu0 %1262
    %1265 = vst.msk [vmem:[#allocation4 + $0x8] sm:$0x30] %vm1154, %v1263
    %s1266 = scalar_lea.vmem [#allocation3], 46
    %v1267 = vld [vmem:[%s1266] ss:$2 sm:$0x3]
    %v1269 = vrot.slane %v1267, 2
    %1270 = vrot.lane.b32.xlu0 %v1269, 96
    %v1271 = vpop.permute.xlu0 %1270
    %1273 = vst.msk [vmem:[#allocation4 + $0x8] sm:$0xc0] %vm357, %v1271
    %v1274 = vld [vmem:[%s1105] ss:$2 sm:$0x3]
    %1275 = vst.msk [vmem:[#allocation4 + $0x10] sm:$0x3] %vm41, %v1274
    %s1276 = scalar_lea.vmem [#allocation3], 22
    %v1277 = vld [vmem:[%s1276] ss:$2 sm:$0x3]
    %v1279 = vrot.slane %v1277, 6
    %1281 = vst.msk [vmem:[#allocation4 + $0x10] sm:$0xc] %vm1050, %v1279
    %v1282 = vld [vmem:[%s1123] ss:$2 sm:$0x3]
    %v1284 = vrot.slane %v1282, 4
    %1286 = vst.msk [vmem:[#allocation4 + $0x10] sm:$0x30] %vm1057, %v1284
    %s1287 = scalar_lea.vmem [#allocation3], 47
    %v1288 = vld [vmem:[%s1287] ss:$2 sm:$0x3]
    %v1290 = vrot.slane %v1288, 2
    %1292 = vst.msk [vmem:[#allocation4 + $0x10] sm:$0xc0] %vm80, %v1290
    %v1293 = vld [vmem:[#allocation4] sm:$0xff]
    %v1294 = vld [vmem:[#allocation4 + $0x8] sm:$0xff]
    %v1295 = vld [vmem:[#allocation4 + $0x10] sm:$0xff]
    %v1296 = vld [vmem:[%s3] sm:$0xff]
    %v1297 = vld [vmem:[%s3 + $0x8] sm:$0xff]
    %v1298 = vld [vmem:[%s3 + $0x10] sm:$0xff]
    %v1299 = vld [vmem:[%s3 + $0x18] sm:$0xff]
    %v1300 = vld [vmem:[%s3 + $0x20] sm:$0xff]
    %v1301 = vld [vmem:[%s3 + $0x28] sm:$0xff]
    %v1302 = vld [vmem:[%s3 + $0x30] sm:$0xff]
    %v1303 = vld [vmem:[%s3 + $0x38] sm:$0xff]
    %v1304 = vld [vmem:[%s3 + $0x40] sm:$0xff]
    %v1305 = vld [vmem:[%s3 + $0x48] sm:$0xff]
    %v1306 = vld [vmem:[%s3 + $0x50] sm:$0xff]
    %v1307 = vld [vmem:[%s3 + $0x58] sm:$0xff]
    %v1308 = vld [vmem:[%s3 + $0x60] sm:$0xff]
    %v1309 = vld [vmem:[%s3 + $0x68] sm:$0xff]
    %v1310 = vld [vmem:[%s3 + $0x70] sm:$0xff]
    %v1311 = vld [vmem:[%s3 + $0x78] sm:$0xff]
    %v1312 = vld [vmem:[%s3 + $0x80] sm:$0xff]
    %v1313 = vld [vmem:[%s3 + $0x88] sm:$0xff]
    %v1314 = vld [vmem:[%s3 + $0x90] sm:$0xff]
    %v1315 = vld [vmem:[%s3 + $0x98] sm:$0xff]
    %v1316 = vld [vmem:[%s3 + $0xa0] sm:$0xff]
    %v1317 = vld [vmem:[%s3 + $0xa8] sm:$0xff]
    %v1318 = vld [vmem:[%s3 + $0xb0] sm:$0xff]
    %v1319 = vld [vmem:[%s3 + $0xb8] sm:$0xff]
    %v1320 = vld [vmem:[%s3 + $0xc0] sm:$0xff]
    %v1321 = vld [vmem:[%s3 + $0xc8] sm:$0xff]
    %v1322 = vld [vmem:[%s3 + $0xd0] sm:$0xff]
    %v1323 = vld [vmem:[%s3 + $0xd8] sm:$0xff]
    %v1324 = vld [vmem:[%s3 + $0xe0] sm:$0xff]
    %v1325 = vld [vmem:[%s3 + $0xe8] sm:$0xff]
    %v1326 = vld [vmem:[%s3 + $0xf0] sm:$0xff]
    %v1327 = vld [vmem:[%s3 + $0xf8] sm:$0xff]
    %v1328 = vld [vmem:[%s3 + $0x100] sm:$0xff]
    %v1329 = vld [vmem:[%s3 + $0x108] sm:$0xff]
    %v1330 = vld [vmem:[%s3 + $0x110] sm:$0xff]
    %v1331 = vld [vmem:[%s3 + $0x118] sm:$0xff]
    %v1332 = vld [vmem:[%s4] sm:$0x1]
    %v1334 = vlaneseq
    %v1335 = vshrl.u32 %v1334, 7
    %v1336 = vsub.s32 0, %v1335
    %v1337 = vrot.slane %v1332, %v1336
    %v1340 = vsel %vm793, %v1295, 0
    %1342 = vmatprep.subr.mxu0 0.0
    %1343 = vmatpush1.msra.mxu0 %v1296
    %1344 = vmatprep.subr.mxu0 0.0
    %1345 = vmatpush1.msra.mxu0 %v1297
    %1346 = vmatprep.subr.mxu0 0.0
    %1347 = vmatpush1.msra.mxu0 %v1298
    %1348 = vmatprep.subr.mxu0 0.0
    %1349 = vmatpush1.msra.mxu0 %v1299
    %1350 = vmatprep.subr.mxu0 0.0
    %1351 = vmatpush1.msra.mxu0 %v1300
    %1352 = vmatprep.subr.mxu0 0.0
    %1353 = vmatpush1.msra.mxu0 %v1301
    %1354 = vmatprep.subr.mxu0 0.0
    %1355 = vmatpush1.msra.mxu0 %v1302
    %1356 = vmatprep.subr.mxu0 0.0
    %1357 = vmatpush1.msra.mxu0 %v1303
    %1358 = vmatprep.subr.mxu0 0.0
    %1359 = vmatpush1.msra.mxu0 %v1304
    %1360 = vmatprep.subr.mxu0 0.0
    %1361 = vmatpush1.msra.mxu0 %v1305
    %1362 = vmatprep.subr.mxu0 0.0
    %1363 = vmatpush1.msra.mxu0 %v1306
    %1364 = vmatprep.subr.mxu0 0.0
    %1365 = vmatpush1.msra.mxu0 %v1307
    %1366 = vmatprep.subr.mxu0 0.0
    %1367 = vmatpush1.msra.mxu0 %v1308
    %1368 = vmatprep.subr.mxu0 0.0
    %1369 = vmatpush1.msra.mxu0 %v1309
    %1370 = vmatprep.subr.mxu0 0.0
    %1371 = vmatpush1.msra.mxu0 %v1310
    %1372 = vmatprep.subr.mxu0 0.0
    %1373 = vmatpush1.msra.mxu0 %v1311
    %1374 = vmatprep.subr.mxu0 0.0
    %1375 = vmatpush1.msra.mxu0 %v1312
    %1376 = vmatprep.subr.mxu0 0.0
    %1377 = vmatpush1.msra.mxu0 %v1313
    %1378 = vmatprep.subr.mxu0 0.0
    %1379 = vmatpush1.msra.mxu0 %v1314
    %1380 = vmatprep.subr.mxu0 0.0
    %1381 = vmatpush1.msra.mxu0 %v1315
    %1382 = vmatprep.subr.mxu0 0.0
    %1383 = vmatpush1.msra.mxu0 %v1316
    %1384 = vmatprep.subr.mxu0 0.0
    %1385 = vmatpush1.msra.mxu0 %v1317
    %1386 = vmatprep.subr.mxu0 0.0
    %1387 = vmatpush1.msra.mxu0 %v1318
    %1388 = vmatprep.subr.mxu0 0.0
    %1389 = vmatpush1.msra.mxu0 %v1319
    %1390 = vmatprep.subr.mxu0 0.0
    %1391 = vmatpush1.msra.mxu0 %v1320
    %1392 = vmatprep.subr.mxu0 0.0
    %1393 = vmatpush1.msra.mxu0 %v1321
    %1394 = vmatprep.subr.mxu0 0.0
    %1395 = vmatpush1.msra.mxu0 %v1322
    %1396 = vmatprep.subr.mxu0 0.0
    %1397 = vmatpush1.msra.mxu0 %v1323
    %1398 = vmatprep.subr.mxu0 0.0
    %1399 = vmatpush1.msra.mxu0 %v1324
    %1400 = vmatprep.subr.mxu0 0.0
    %1401 = vmatpush1.msra.mxu0 %v1325
    %1402 = vmatprep.subr.mxu0 0.0
    %1403 = vmatpush1.msra.mxu0 %v1326
    %1404 = vmatprep.subr.mxu0 0.0
    %1405 = vmatpush1.msra.mxu0 %v1327
    %1406 = vmatprep.mubr.f32.mxu0 %v1294
    %1407 = vmatmul.mubr.f32.gmra.mrb[0].mxu0 %v1293
    %v1408 = vpop.f32.mrb[0].mxu0
    %v1409 = vadd.f32 %v1337, %v1408
    %v1410 = vpop.f32.mrb[0].mxu0
    %1411 = vdwg.mxu0
    %1412 = vmatprep.subr.mxu0 0.0
    %1413 = vmatpush1.msra.mxu0 %v1328
    %1414 = vmatprep.subr.mxu0 0.0
    %1415 = vmatpush1.msra.mxu0 %v1329
    %1416 = vmatprep.subr.mxu0 0.0
    %1417 = vmatpush1.msra.mxu0 %v1330
    %1418 = vmatprep.subr.mxu0 0.0
    %1419 = vmatpush1.msra.mxu0 %v1331
    %1420 = vmatprep.subr.mxu0 0.0
    %1421 = vmatpush1.msra.mxu0 0.0
    %1422 = vmatprep.subr.mxu0 0.0
    %1423 = vmatpush1.msra.mxu0 0.0
    %1424 = vmatprep.subr.mxu0 0.0
    %1425 = vmatpush1.msra.mxu0 0.0
    %1426 = vmatprep.subr.mxu0 0.0
    %1427 = vmatpush1.msra.mxu0 0.0
    %1428 = vmatprep.subr.mxu0 0.0
    %1429 = vmatpush1.msra.mxu0 0.0
    %1430 = vmatprep.subr.mxu0 0.0
    %1431 = vmatpush1.msra.mxu0 0.0
    %1432 = vmatprep.subr.mxu0 0.0
    %1433 = vmatpush1.msra.mxu0 0.0
    %1434 = vmatprep.subr.mxu0 0.0
    %1435 = vmatpush1.msra.mxu0 0.0
    %1436 = vmatprep.subr.mxu0 0.0
    %1437 = vmatpush1.msra.mxu0 0.0
    %1438 = vmatprep.subr.mxu0 0.0
    %1439 = vmatpush1.msra.mxu0 0.0
    %1440 = vmatprep.subr.mxu0 0.0
    %1441 = vmatpush1.msra.mxu0 0.0
    %1442 = vmatprep.subr.mxu0 0.0
    %1443 = vmatpush1.msra.mxu0 0.0
    %1444 = vmatprep.subr.mxu0 0.0
    %1445 = vmatpush1.msra.mxu0 0.0
    %1446 = vmatprep.subr.mxu0 0.0
    %1447 = vmatpush1.msra.mxu0 0.0
    %1448 = vmatprep.subr.mxu0 0.0
    %1449 = vmatpush1.msra.mxu0 0.0
    %1450 = vmatprep.subr.mxu0 0.0
    %1451 = vmatpush1.msra.mxu0 0.0
    %1452 = vmatprep.subr.mxu0 0.0
    %1453 = vmatpush1.msra.mxu0 0.0
    %1454 = vmatprep.subr.mxu0 0.0
    %1455 = vmatpush1.msra.mxu0 0.0
    %1456 = vmatprep.subr.mxu0 0.0
    %1457 = vmatpush1.msra.mxu0 0.0
    %1458 = vmatprep.subr.mxu0 0.0
    %1459 = vmatpush1.msra.mxu0 0.0
    %1460 = vmatprep.subr.mxu0 0.0
    %1461 = vmatpush1.msra.mxu0 0.0
    %1462 = vmatprep.subr.mxu0 0.0
    %1463 = vmatpush1.msra.mxu0 0.0
    %1464 = vmatprep.subr.mxu0 0.0
    %1465 = vmatpush1.msra.mxu0 0.0
    %1466 = vmatprep.subr.mxu0 0.0
    %1467 = vmatpush1.msra.mxu0 0.0
    %1468 = vmatprep.subr.mxu0 0.0
    %1469 = vmatpush1.msra.mxu0 0.0
    %1470 = vmatprep.subr.mxu0 0.0
    %1471 = vmatpush1.msra.mxu0 0.0
    %1472 = vmatprep.subr.mxu0 0.0
    %1473 = vmatpush1.msra.mxu0 0.0
    %1474 = vmatprep.subr.mxu0 0.0
    %1475 = vmatpush1.msra.mxu0 0.0
    %1476 = vmatprep.mubr.f32.mxu0 0.0
    %1477 = vmatmul.mubr.f32.gmra.mrb[0].mxu0 %v1340
    %v1478 = vpop.f32.mrb[0].mxu0
    %v1479 = vadd.f32 %v1409, %v1478
    %v1480 = vpop.f32.mrb[0].mxu0
    %1481 = vdwg.mxu0
    %vm1482 = vcmp.gt.f32.partialorder %v1479, 0.0
    %v1483 = vmul.f32 %v1479, 0.1
    %v1484 = vsel %vm1482, %v1479, %v1483
    %v1485 = vsel %vm57, %v1484, 0.0
    %v1486 = vrot.slane %v1485, 4
    %v1487 = vadd.f32 %v1485, %v1486
    %v1488 = vrot.slane %v1487, 2
    %v1489 = vadd.f32 %v1487, %v1488
    %v1490 = vrot.slane %v1489, 1
    %v1491 = vadd.f32 %v1489, %v1490
    %v1492 = vrcp.pop 4.0
    %v1493 = vmul.f32 %v1491, %v1492
    %1494 = vst.msk [vmem:[#allocation5] sm:$0x1] %vm66, %v1493
    %v1496 = vrot.slane %v1484, 4
    %v1498 = vsel %vm57, %v1496, 0.0
    %v1499 = vrot.slane %v1498, 4
    %v1500 = vadd.f32 %v1498, %v1499
    %v1501 = vrot.slane %v1500, 2
    %v1502 = vadd.f32 %v1500, %v1501
    %v1503 = vrot.slane %v1502, 1
    %v1504 = vadd.f32 %v1502, %v1503
    %v1505 = vmul.f32 %v1504, %v1492
    %1506 = vst.msk [vmem:[#allocation5 + $0x1] sm:$0x1] %vm66, %v1505
    %v1507 = vld [vmem:[#allocation5] sm:$0x3]
    %v1508 = vld [vmem:[%s5] sm:$0xff]
    %v1509 = vld [vmem:[%s5 + $0x8] sm:$0xff]
    %v1510 = vld [vmem:[%s5 + $0x10] sm:$0xff]
    %v1511 = vld [vmem:[%s5 + $0x18] sm:$0xff]
    %v1512 = vld [vmem:[%s6] sm:$0x1]
    %v1514 = vlaneseq
    %v1515 = vshrl.u32 %v1514, 7
    %v1516 = vsub.s32 0, %v1515
    %v1517 = vrot.slane %v1512, %v1516
    %v1520 = vsel %vm793, %v1507, 0
    %1522 = vmatprep.subr.mxu0 0.0
    %1523 = vmatpush1.msra.mxu0 %v1508
    %1524 = vmatprep.subr.mxu0 0.0
    %1525 = vmatpush1.msra.mxu0 %v1509
    %1526 = vmatprep.subr.mxu0 0.0
    %1527 = vmatpush1.msra.mxu0 %v1510
    %1528 = vmatprep.subr.mxu0 0.0
    %1529 = vmatpush1.msra.mxu0 %v1511
    %1530 = vmatprep.subr.mxu0 0.0
    %1531 = vmatpush1.msra.mxu0 0.0
    %1532 = vmatprep.subr.mxu0 0.0
    %1533 = vmatpush1.msra.mxu0 0.0
    %1534 = vmatprep.subr.mxu0 0.0
    %1535 = vmatpush1.msra.mxu0 0.0
    %1536 = vmatprep.subr.mxu0 0.0
    %1537 = vmatpush1.msra.mxu0 0.0
    %1538 = vmatprep.subr.mxu0 0.0
    %1539 = vmatpush1.msra.mxu0 0.0
    %1540 = vmatprep.subr.mxu0 0.0
    %1541 = vmatpush1.msra.mxu0 0.0
    %1542 = vmatprep.subr.mxu0 0.0
    %1543 = vmatpush1.msra.mxu0 0.0
    %1544 = vmatprep.subr.mxu0 0.0
    %1545 = vmatpush1.msra.mxu0 0.0
    %1546 = vmatprep.subr.mxu0 0.0
    %1547 = vmatpush1.msra.mxu0 0.0
    %1548 = vmatprep.subr.mxu0 0.0
    %1549 = vmatpush1.msra.mxu0 0.0
    %1550 = vmatprep.subr.mxu0 0.0
    %1551 = vmatpush1.msra.mxu0 0.0
    %1552 = vmatprep.subr.mxu0 0.0
    %1553 = vmatpush1.msra.mxu0 0.0
    %1554 = vmatprep.subr.mxu0 0.0
    %1555 = vmatpush1.msra.mxu0 0.0
    %1556 = vmatprep.subr.mxu0 0.0
    %1557 = vmatpush1.msra.mxu0 0.0
    %1558 = vmatprep.subr.mxu0 0.0
    %1559 = vmatpush1.msra.mxu0 0.0
    %1560 = vmatprep.subr.mxu0 0.0
    %1561 = vmatpush1.msra.mxu0 0.0
    %1562 = vmatprep.subr.mxu0 0.0
    %1563 = vmatpush1.msra.mxu0 0.0
    %1564 = vmatprep.subr.mxu0 0.0
    %1565 = vmatpush1.msra.mxu0 0.0
    %1566 = vmatprep.subr.mxu0 0.0
    %1567 = vmatpush1.msra.mxu0 0.0
    %1568 = vmatprep.subr.mxu0 0.0
    %1569 = vmatpush1.msra.mxu0 0.0
    %1570 = vmatprep.subr.mxu0 0.0
    %1571 = vmatpush1.msra.mxu0 0.0
    %1572 = vmatprep.subr.mxu0 0.0
    %1573 = vmatpush1.msra.mxu0 0.0
    %1574 = vmatprep.subr.mxu0 0.0
    %1575 = vmatpush1.msra.mxu0 0.0
    %1576 = vmatprep.subr.mxu0 0.0
    %1577 = vmatpush1.msra.mxu0 0.0
    %1578 = vmatprep.subr.mxu0 0.0
    %1579 = vmatpush1.msra.mxu0 0.0
    %1580 = vmatprep.subr.mxu0 0.0
    %1581 = vmatpush1.msra.mxu0 0.0
    %1582 = vmatprep.subr.mxu0 0.0
    %1583 = vmatpush1.msra.mxu0 0.0
    %1584 = vmatprep.subr.mxu0 0.0
    %1585 = vmatpush1.msra.mxu0 0.0
    %1586 = vmatprep.mubr.f32.mxu0 0.0
    %1587 = vmatmul.mubr.f32.gmra.mrb[0].mxu0 %v1520
    %v1588 = vpop.f32.mrb[0].mxu0
    %v1589 = vadd.f32 %v1517, %v1588
    %v1590 = vpop.f32.mrb[0].mxu0
    %1591 = vdwg.mxu0
    %vm1592 = vcmask 17408
    %1593 = vst.msk [vmem:[#allocation7] sm:$0x3] %vm1592, %v1589
    %v1594 = vsel %vm1592, %v1589, -inf
    %1595 = vmax.xlane.f32.xlu0 %v1594
    %v1596 = vpop.xlane.xlu0 %1595
    %v1597 = vlaneseq
    %v1598 = vand.u32 %v1597, 127
    %vm1599 = vcmp.ge.f32.partialorder %v1589, %v1596
    %v1600 = vsel %vm1599, %v1598, 3
    %v1601 = vsel %vm1592, %v1600, 2147483647
    %v1602 = vand.u32 %v1601, 65535
    %v1603 = vshra.s32 %v1601, 16
    %v1604 = vcvt.s32.f32 %v1602
    %v1605 = vcvt.s32.f32 %v1603
    %1606 = vmin.xlane.f32.xlu0 %v1605
    %v1607 = vpop.xlane.xlu0 %1606
    %vm1608 = vcmp.eq.f32.partialorder %v1605, %v1607
    %v1609 = vsel %vm1608, %v1604, inf
    %1610 = vmin.xlane.f32.xlu0 %v1609
    %v1611 = vpop.xlane.xlu0 %1610
    %v1612 = vcvt.f32.s32 %v1611
    %v1613 = vcvt.f32.s32 %v1607
    %v1614 = vshll.u32 %v1613, 16
    %v1615 = vadd.s32 %v1614, %v1612
    %vm1616 = vcmask 1024
    %1617 = vst.msk [vmem:[%s9] sm:$0x3] %vm1616, %v1615
    // Predicated region
    $region30: #{my_model_forward.1} parent=1 // pred_check
      _
    $region31: #{my_model_forward.1} parent=1 // pred_check_branch
      %1619 = sbr.rel (0) target = $region33
    $region32: #{my_model_forward.1} parent=1 // pred_region
      %s1621 = ssub.s32 32, 32
      %1622 = vsyncadd [#allocation6], %s1621
      %s1624 = sshll.u32 [#allocation5], 4
      %s1625 = int_to_ptr.vmem [resolvable:$true] %s1624
      %1627 = dma.vmem_to_hbm [thread:$0]  %s1625, 32, %s7, [#allocation6]
    $region33: #{my_model_forward.1} parent=1 // pred_fallthru
      _
    // Predicated region
    $region34: #{my_model_forward.1} parent=1 // pred_check
      _
    $region35: #{my_model_forward.1} parent=1 // pred_check_branch
      %1629 = sbr.rel (0) target = $region37
    $region36: #{my_model_forward.1} parent=1 // pred_region
      %s1631 = ssub.s32 32, 32
      %1632 = vsyncadd [#allocation8], %s1631
      %s1634 = sshll.u32 [#allocation7], 4
      %s1635 = int_to_ptr.vmem [resolvable:$true] %s1634
      %1637 = dma.vmem_to_hbm [thread:$0]  %s1635, 32, %s8, [#allocation8]
    $region37: #{my_model_forward.1} parent=1 // pred_fallthru
      _
    // Predicated region
    $region38: #{my_model_forward.1} parent=1 // pred_check
      _
    $region39: #{my_model_forward.1} parent=1 // pred_check_branch
      %1639 = sbr.rel (0) target = $region41
    $region40: #{my_model_forward.1} parent=1 // pred_region
      _
    $region41: #{my_model_forward.1} parent=1 // pred_fallthru
      _
    // Predicated region
    $region42: #{my_model_forward.1} parent=1 // pred_check
      _
    $region43: #{my_model_forward.1} parent=1 // pred_check_branch
      %1641 = sbr.rel (0) target = $region45
    $region44: #{my_model_forward.1} parent=1 // pred_region
      %1642 = dma.done [#allocation6], 32
    $region45: #{my_model_forward.1} parent=1 // pred_fallthru
      _
    // Predicated region
    $region46: #{my_model_forward.1} parent=1 // pred_check
      _
    $region47: #{my_model_forward.1} parent=1 // pred_check_branch
      %1644 = sbr.rel (0) target = $region49
    $region48: #{my_model_forward.1} parent=1 // pred_region
      %1645 = dma.done [#allocation8], 32
    $region49: #{my_model_forward.1} parent=1 // pred_fallthru
      _
    // Predicated region
    $region50: #{my_model_forward.1} parent=1 // pred_check
      _
    $region51: #{my_model_forward.1} parent=1 // pred_check_branch
      %1647 = sbr.rel (0) target = $region53
    $region52: #{my_model_forward.1} parent=1 // pred_region
      _
    $region53: #{my_model_forward.1} parent=1 // pred_fallthru
      _
    %1648 = vsyncpa [#allocation6], 1
    %1649 = vsyncpa [#allocation8], 1

</llo_original>
